<compile_context>
chip_gen: v5e
topology: v5e:2x2
jax: 0.10.0
libtpu: 0.0.40
codegen_flags: <defaults>
</compile_context>

<pallas_src>
import numpy as np
import jax
import jax.numpy as jnp
from jax.experimental import pallas as pl
from jax.experimental.pallas import tpu as pltpu

IN_SIZES_TAIL = [256, 512, 256, 128]
OUT_SIZES = [256, 512, 256, 128, 64]
NEG_SLOPE = 0.1
BN_EPS = 1e-5
POOL_OUT = 7
HEAD_D1, HEAD_D2 = 1024, 128
FLAT_DIM = OUT_SIZES[-1] * POOL_OUT * POOL_OUT   # 3136
FLAT_PAD = 3200                                  # 25 * 128 -> lane-aligned K tiles
HEAD_K_TILE = 640                                # 5 K-tiles of w1


# ----------------------------- Pallas kernels -----------------------------

def fused_conv_pool_kernel(x_ref,
                           w0_ref, s0_ref, w1_ref, s1_ref, w2_ref, s2_ref,
                           w3_ref, s3_ref, w4_ref, s4_ref, pmat_ref, o_ref):
    # x: (1, 1, Cpad, HW) one image of one feature map, channel-major (NCHW).
    # wK: (1, CoutK, CinK) bf16 conv weights with eval-BN scale folded in.
    # sK: (1, CoutK, 1)    f32 folded conv-bias + BN shift.
    # pmat: (HW, 49)       fixed adaptive-avg-pool matrix (transposed).
    h = x_ref[0, 0]                                        # (Cpad, HW) f32
    for w_ref, s_ref in ((w0_ref, s0_ref), (w1_ref, s1_ref), (w2_ref, s2_ref),
                         (w3_ref, s3_ref), (w4_ref, s4_ref)):
        z = jnp.dot(w_ref[0], h.astype(jnp.bfloat16),
                    preferred_element_type=jnp.float32) + s_ref[0]
        h = jnp.where(z > 0.0, z, NEG_SLOPE * z)           # f32 VPU (v5e-safe)
    # AdaptiveAvgPool2d(7,7): (64, HW) @ (HW, 49) -> (64, 49); flattening this
    # row-major is exactly torch's NCHW flatten order (c*49 + p).
    o_ref[0, 0] = jnp.dot(h, pmat_ref[...],
                          preferred_element_type=jnp.float32).astype(o_ref.dtype)


def mlp_head_kernel(x_ref, w1_ref, b1_ref, w2_ref, b2_ref, w3_ref, b3_ref,
                    o_ref, acc_ref):
    # grid = (feature_map, k_tile).  w1 is K-tiled; acc_ref is the (N,1024) f32
    # partial-sum carried across k; the whole epilogue runs on the last k step.
    k = pl.program_id(1)

    @pl.when(k == 0)
    def _():
        acc_ref[...] = jnp.zeros_like(acc_ref)

    xk = x_ref[0].astype(jnp.bfloat16)                     # (N, K_TILE)
    acc_ref[...] += jnp.dot(xk, w1_ref[0], preferred_element_type=jnp.float32)

    @pl.when(k == pl.num_programs(1) - 1)
    def _():
        h = acc_ref[...] + b1_ref[0]
        h = jnp.where(h > 0.0, h, NEG_SLOPE * h)
        h = jnp.dot(h.astype(jnp.bfloat16), w2_ref[0],
                    preferred_element_type=jnp.float32) + b2_ref[0]
        h = jnp.where(h > 0.0, h, NEG_SLOPE * h)
        # Final 128->1 projection as a VPU/XLU reduction (no 1-lane MXU dot).
        z = jnp.sum(h * w3_ref[0], axis=-1, keepdims=True) + b3_ref[0]
        z = jnp.clip(z, -30.0, 30.0)                       # stable sigmoid
        o_ref[0] = pl.reciprocal(1.0 + jnp.exp(-z), approx=True).astype(o_ref.dtype)


# ----------------------------- helpers --------------------------------------

def _round_up(x, m):
    return -(-x // m) * m


def build_pool_matrix(h, w, oh, ow):
    # Matches torch AdaptiveAvgPool2d: start=floor(i*H/oh), end=ceil((i+1)*H/oh).
    def axis_mat(size, out):
        m = np.zeros((out, size), dtype=np.float32)
        for i in range(out):
            s = (i * size) // out
            e = -(-((i + 1) * size) // out)
            m[i, s:e] = 1.0 / (e - s)
        return m
    p = np.einsum('ia,jb->ijab', axis_mat(h, oh), axis_mat(w, ow)).reshape(oh * ow, h * w)
    return jnp.asarray(p.T)                                # (H*W, 49)


# ----------------------------- wrappers --------------------------------------

def conv_pool_group(x_all, grp):
    """One (F,N)-grid call: 5x(conv1x1+BN+LeakyReLU) + AdaptiveAvgPool for all
    feature maps in the group (weights resident per-f, pipelined over F*N)."""
    fg, n, cpad, hw = x_all.shape
    c_out = OUT_SIZES[-1]
    p_out = POOL_OUT * POOL_OUT

    args = [x_all]
    in_specs = [pl.BlockSpec((1, 1, cpad, hw), lambda f, b: (f, b, 0, 0))]
    for wt, sh in zip(grp["w_stk"], grp["s_stk"]):
        args += [wt, sh]
        in_specs += [pl.BlockSpec((1,) + wt.shape[1:], lambda f, b: (f, 0, 0)),
                     pl.BlockSpec((1,) + sh.shape[1:], lambda f, b: (f, 0, 0))]
    args.append(grp["pmat"])
    in_specs.append(pl.BlockSpec(grp["pmat"].shape, lambda f, b: (0, 0)))

    return pl.pallas_call(
        fused_conv_pool_kernel,
        out_shape=jax.ShapeDtypeStruct((fg, n, c_out, p_out), jnp.float32),
        grid=(fg, n),
        in_specs=in_specs,
        out_specs=pl.BlockSpec((1, 1, c_out, p_out), lambda f, b: (f, b, 0, 0)),
        compiler_params=pltpu.CompilerParams(
            dimension_semantics=("parallel", "parallel"),
            vmem_limit_bytes=32 * 1024 * 1024),
    )(*args)


def mlp_heads(flat_all, head):
    """All discriminator MLP heads in ONE pallas_call, grid=(F, K_tiles)."""
    f, n, din = flat_all.shape
    if din < FLAT_PAD:                                     # lane-align the K tiles
        flat_all = jnp.pad(flat_all, ((0, 0), (0, 0), (0, FLAT_PAD - din)))
    kt = FLAT_PAD // HEAD_K_TILE

    return pl.pallas_call(
        mlp_head_kernel,
        out_shape=jax.ShapeDtypeStruct((f, n, 1), jnp.float32),
        grid=(f, kt),
        in_specs=[
            pl.BlockSpec((1, n, HEAD_K_TILE), lambda i, k: (i, 0, k)),
            pl.BlockSpec((1, HEAD_K_TILE, HEAD_D1), lambda i, k: (i, k, 0)),
            pl.BlockSpec((1, 1, HEAD_D1), lambda i, k: (i, 0, 0)),
            pl.BlockSpec((1, HEAD_D1, HEAD_D2), lambda i, k: (i, 0, 0)),
            pl.BlockSpec((1, 1, HEAD_D2), lambda i, k: (i, 0, 0)),
            pl.BlockSpec((1, 1, HEAD_D2), lambda i, k: (i, 0, 0)),
            pl.BlockSpec((1, 1, 1), lambda i, k: (i, 0, 0)),
        ],
        out_specs=pl.BlockSpec((1, n, 1), lambda i, k: (i, 0, 0)),
        scratch_shapes=[pltpu.VMEM((n, HEAD_D1), jnp.float32)],
        compiler_params=pltpu.CompilerParams(
            dimension_semantics=("parallel", "arbitrary"),
            vmem_limit_bytes=16 * 1024 * 1024),
    )(flat_all, head["w1"], head["b1"], head["w2"], head["b2"],
      head["w3"], head["b3"])


# ----------------------------- parameters ------------------------------------

def init_discriminator_params(key, in_chnl):
    """Per-feature-map parameters (conv weights in (Cout,Cin) with eval-BN folded,
    stored bf16; head weights w1/w2 bf16, biases f32)."""
    in_sizes = [in_chnl] + IN_SIZES_TAIL
    conv = []
    for ci, co in zip(in_sizes, OUT_SIZES):
        key, k1, k2, k3, k4, k5, k6 = jax.random.split(key, 7)
        w = jax.random.normal(k1, (co, ci), jnp.float32) / jnp.sqrt(float(ci))
        b = 0.01 * jax.random.normal(k2, (co,), jnp.float32)
        gamma = 1.0 + 0.1 * jax.random.normal(k3, (co,), jnp.float32)
        beta = 0.1 * jax.random.normal(k4, (co,), jnp.float32)
        rmean = 0.1 * jax.random.normal(k5, (co,), jnp.float32)
        rvar = jnp.abs(1.0 + 0.1 * jax.random.normal(k6, (co,), jnp.float32))
        scale = gamma / jnp.sqrt(rvar + BN_EPS)            # eval-mode BN fold
        w_folded = (w * scale[:, None]).astype(jnp.bfloat16)
        shift = (scale * (b - rmean) + beta).reshape(co, 1).astype(jnp.float32)
        conv.append((w_folded, shift))

    key, k1, k2 = jax.random.split(key, 3)
    w1 = (jax.random.normal(k1, (FLAT_DIM, HEAD_D1), jnp.float32)
          / np.sqrt(FLAT_DIM)).astype(jnp.bfloat16)        # rows in c*49+p order
    b1 = (0.01 * jax.random.normal(k2, (HEAD_D1,), jnp.float32)).reshape(1, HEAD_D1)
    key, k1, k2 = jax.random.split(key, 3)
    w2 = (jax.random.normal(k1, (HEAD_D1, HEAD_D2), jnp.float32)
          / np.sqrt(HEAD_D1)).astype(jnp.bfloat16)
    b2 = (0.01 * jax.random.normal(k2, (HEAD_D2,), jnp.float32)).reshape(1, HEAD_D2)
    key, k1, k2 = jax.random.split(key, 3)
    w3 = jax.random.normal(k1, (1, HEAD_D2), jnp.float32) / np.sqrt(HEAD_D2)
    b3 = (0.01 * jax.random.normal(k2, (1,), jnp.float32)).reshape(1, 1)

    return {"conv": conv, "head": (w1, b1, w2, b2, w3, b3)}


def prepare_discriminator(params_list, ft_shapes):
    """One-time pre-stacking: group feature maps by (N,H,W) for the fused conv
    call, stack per-group conv weights, and pre-stack the head parameters."""
    group_order, groups = [], {}
    for i, shp in enumerate(ft_shapes):
        k = (shp[0], shp[2], shp[3])
        if k not in groups:
            groups[k] = []
            group_order.append(k)
        groups[k].append(i)

    prepared_groups = []
    for (n, h, w) in group_order:
        idxs = groups[(n, h, w)]
        cpad = _round_up(max(ft_shapes[i][1] for i in idxs), 8)
        w_stk, s_stk = [], []
        for layer in range(len(OUT_SIZES)):
            ws, ss = [], []
            for i in idxs:
                wt, sh = params_list[i]["conv"][layer]
                if layer == 0 and wt.shape[1] < cpad:
                    wt = jnp.pad(wt, ((0, 0), (0, cpad - wt.shape[1])))
                ws.append(wt)
                ss.append(sh)
            w_stk.append(jnp.stack(ws))                    # (Fg, Cout, Cin) bf16
            s_stk.append(jnp.stack(ss))                    # (Fg, Cout, 1)   f32
        prepared_groups.append(dict(
            idxs=idxs, n=n, cpad=cpad,
            w_stk=w_stk, s_stk=s_stk,
            pmat=build_pool_matrix(h, w, POOL_OUT, POOL_OUT)))

    def stk(j):
        return jnp.stack([p["head"][j] for p in params_list])
    w1 = stk(0)                                            # (F, 3136, 1024) bf16
    w1 = jnp.pad(w1, ((0, 0), (0, FLAT_PAD - FLAT_DIM), (0, 0)))
    head = dict(w1=w1, b1=stk(1), w2=stk(2), b2=stk(3), w3=stk(4), b3=stk(5))
    return dict(groups=prepared_groups, head=head, num_maps=len(params_list))


# ----------------------------- forward ----------------------------------------

def discriminator_forward(fts, prep):
    # Mirrors Discriminator.forward: list of feature maps in -> list of (N,1) out.
    num_maps = prep["num_maps"]
    flats = [None] * num_maps
    for grp in prep["groups"]:
        xs = []
        for i in grp["idxs"]:
            x = fts[i]                                     # (N, C, H, W)
            n, c, h, w = x.shape
            x = x.reshape(n, c, h * w)                     # free: NCHW is (C,HW)-major
            if c < grp["cpad"]:
                x = jnp.pad(x, ((0, 0), (0, grp["cpad"] - c), (0, 0)))
            xs.append(x)
        x_all = jnp.stack(xs)                              # (Fg, N, Cpad, HW)
        pooled = conv_pool_group(x_all, grp)               # (Fg, N, 64, 49)
        flat = pooled.reshape(len(grp["idxs"]), grp["n"], FLAT_DIM)
        for j, i in enumerate(grp["idxs"]):
            flats[i] = flat[j]
    flat_all = jnp.stack(flats)                            # (F, N, 3136) tiny
    out = mlp_heads(flat_all, prep["head"])                # (F, N, 1)
    return [out[i] for i in range(num_maps)]


# ----------------------------- reference (validation) --------------------------

def reference_forward(fts, params_list):
    outs = []
    for x, p in zip(fts, params_list):
        n, c, h, w = x.shape
        a = x.reshape(n, c, h * w)
        for wt, sh in p["conv"]:
            ab = a.astype(jnp.bfloat16).astype(jnp.float32)
            z = jnp.einsum('oc,ncs->nos', wt.astype(jnp.float32), ab) + sh[None]
            a = jnp.where(z > 0.0, z, NEG_SLOPE * z)
        pmat = build_pool_matrix(h, w, POOL_OUT, POOL_OUT)          # (HW, 49)
        flat = jnp.einsum('ncs,sp->ncp', a, pmat).reshape(n, FLAT_DIM)
        w1, b1, w2, b2, w3, b3 = p["head"]
        h1 = jnp.dot(flat.astype(jnp.bfloat16).astype(jnp.float32),
                     w1.astype(jnp.float32)) + b1
        h1 = jnp.where(h1 > 0.0, h1, NEG_SLOPE * h1)
        h2 = jnp.dot(h1.astype(jnp.bfloat16).astype(jnp.float32),
                     w2.astype(jnp.float32)) + b2
        h2 = jnp.where(h2 > 0.0, h2, NEG_SLOPE * h2)
        z = jnp.sum(h2 * w3, axis=-1, keepdims=True) + b3
        outs.append(jax.nn.sigmoid(jnp.clip(z, -30.0, 30.0)))
    return outs


# ----------------------------- main --------------------------------------------

if __name__ == "__main__":
    key = jax.random.PRNGKey(0)
    # Two synthetic feature maps (NCHW), small channel counts / spatial 14x14.
    ft_shapes = [(2, 8, 14, 14), (2, 16, 14, 14)]
    keys = jax.random.split(key, len(ft_shapes) + 1)
    fts = [jax.random.normal(keys[i + 1], s, jnp.float32)
           for i, s in enumerate(ft_shapes)]

    pk = keys[0]
    params_list = []
    for s in ft_shapes:
        pk, sub = jax.random.split(pk)
        params_list.append(init_discriminator_params(sub, s[1]))

    prep = prepare_discriminator(params_list, ft_shapes)   # one-time pre-stacking

    outs = discriminator_forward(fts, prep)
    outs = [jax.block_until_ready(o) for o in outs]
    refs = reference_forward(fts, params_list)

    for o, r in zip(outs, refs):
        assert o.shape == (2, 1), o.shape
        assert o.dtype == jnp.float32
        assert bool(jnp.all(jnp.isfinite(o)))
        assert bool(jnp.all((o >= 0.0) & (o <= 1.0)))      # sigmoid range
        assert float(jnp.max(jnp.abs(o - r))) < 2e-2       # matches bf16 reference
    print("KERNEL_OK")
</pallas_src>

<mosaic_0001>
module attributes {stable_mosaic.version = 11 : i64} {
  func.func @fused_conv_pool_kernel(%arg0: i32, %arg1: i32, %arg2: memref<1x1x16x196xf32, #tpu.memory_space<vmem>>, %arg3: memref<1x256x16xbf16, #tpu.memory_space<vmem>>, %arg4: memref<1x256x1xf32, #tpu.memory_space<vmem>>, %arg5: memref<1x512x256xbf16, #tpu.memory_space<vmem>>, %arg6: memref<1x512x1xf32, #tpu.memory_space<vmem>>, %arg7: memref<1x256x512xbf16, #tpu.memory_space<vmem>>, %arg8: memref<1x256x1xf32, #tpu.memory_space<vmem>>, %arg9: memref<1x128x256xbf16, #tpu.memory_space<vmem>>, %arg10: memref<1x128x1xf32, #tpu.memory_space<vmem>>, %arg11: memref<1x64x128xbf16, #tpu.memory_space<vmem>>, %arg12: memref<1x64x1xf32, #tpu.memory_space<vmem>>, %arg13: memref<196x49xf32, #tpu.memory_space<vmem>>, %arg14: memref<1x1x64x49xf32, #tpu.memory_space<vmem>>) attributes {dimension_semantics = [#tpu.dimension_semantics<parallel>, #tpu.dimension_semantics<parallel>], iteration_bounds = array<i64: 2, 2>, scalar_prefetch = 0 : i64, scratch_operands = 0 : i64, tpu.core_type = #tpu.core_type<tc>, window_params = [{transform_indices = @transform_0, window_bounds = array<i64: 1, 1, 16, 196>}, {transform_indices = @transform_1, window_bounds = array<i64: 1, 256, 16>}, {transform_indices = @transform_2, window_bounds = array<i64: 1, 256, 1>}, {transform_indices = @transform_3, window_bounds = array<i64: 1, 512, 256>}, {transform_indices = @transform_4, window_bounds = array<i64: 1, 512, 1>}, {transform_indices = @transform_5, window_bounds = array<i64: 1, 256, 512>}, {transform_indices = @transform_6, window_bounds = array<i64: 1, 256, 1>}, {transform_indices = @transform_7, window_bounds = array<i64: 1, 128, 256>}, {transform_indices = @transform_8, window_bounds = array<i64: 1, 128, 1>}, {transform_indices = @transform_9, window_bounds = array<i64: 1, 64, 128>}, {transform_indices = @transform_10, window_bounds = array<i64: 1, 64, 1>}, {pipeline_mode = #tpu.pipeline_mode<synchronous>, transform_indices = @transform_11, window_bounds = array<i64: 196, 49>}, {transform_indices = @transform_12, window_bounds = array<i64: 1, 1, 64, 49>}]} {
    %c0 = arith.constant 0 : index
    %c0_0 = arith.constant 0 : index
    %c0_1 = arith.constant 0 : index
    %c0_2 = arith.constant 0 : index
    %0 = vector.load %arg2[%c0, %c0_0, %c0_1, %c0_2] : memref<1x1x16x196xf32, #tpu.memory_space<vmem>>, vector<1x1x16x196xf32>
    %1 = vector.shape_cast %0 : vector<1x1x16x196xf32> to vector<16x196xf32>
    %c0_3 = arith.constant 0 : index
    %c0_4 = arith.constant 0 : index
    %c0_5 = arith.constant 0 : index
    %2 = vector.load %arg3[%c0_3, %c0_4, %c0_5] : memref<1x256x16xbf16, #tpu.memory_space<vmem>>, vector<1x256x16xbf16>
    %3 = vector.shape_cast %2 : vector<1x256x16xbf16> to vector<256x16xbf16>
    %4 = arith.truncf %1 : vector<16x196xf32> to vector<16x196xbf16>
    %cst = arith.constant dense<0.000000e+00> : vector<256x196xf32>
    %5 = tpu.matmul %3, %4, %cst {dimension_numbers = #tpu.dot_dimension_numbers<[1], [0], [0], [1], [0, 0, 1, 1], [], []>} : vector<256x16xbf16>, vector<16x196xbf16>, vector<256x196xf32> -> vector<256x196xf32>
    %c0_6 = arith.constant 0 : index
    %c0_7 = arith.constant 0 : index
    %c0_8 = arith.constant 0 : index
    %6 = vector.load %arg4[%c0_6, %c0_7, %c0_8] : memref<1x256x1xf32, #tpu.memory_space<vmem>>, vector<1x256x1xf32>
    %7 = vector.shape_cast %6 : vector<1x256x1xf32> to vector<256x1xf32>
    %8 = vector.broadcast %7 : vector<256x1xf32> to vector<256x196xf32>
    %9 = arith.addf %5, %8 : vector<256x196xf32>
    %cst_9 = arith.constant 0.000000e+00 : f32
    %10 = vector.broadcast %cst_9 : f32 to vector<256x196xf32>
    %11 = arith.cmpf ogt, %9, %10 : vector<256x196xf32>
    %cst_10 = arith.constant 1.000000e-01 : f32
    %12 = vector.broadcast %cst_10 : f32 to vector<256x196xf32>
    %13 = arith.mulf %12, %9 : vector<256x196xf32>
    %14 = arith.select %11, %9, %13 : vector<256x196xi1>, vector<256x196xf32>
    %c0_11 = arith.constant 0 : index
    %c0_12 = arith.constant 0 : index
    %c0_13 = arith.constant 0 : index
    %15 = vector.load %arg5[%c0_11, %c0_12, %c0_13] : memref<1x512x256xbf16, #tpu.memory_space<vmem>>, vector<1x512x256xbf16>
    %16 = vector.shape_cast %15 : vector<1x512x256xbf16> to vector<512x256xbf16>
    %17 = arith.truncf %14 : vector<256x196xf32> to vector<256x196xbf16>
    %cst_14 = arith.constant dense<0.000000e+00> : vector<512x196xf32>
    %18 = tpu.matmul %16, %17, %cst_14 {dimension_numbers = #tpu.dot_dimension_numbers<[1], [0], [0], [1], [0, 0, 1, 1], [], []>} : vector<512x256xbf16>, vector<256x196xbf16>, vector<512x196xf32> -> vector<512x196xf32>
    %c0_15 = arith.constant 0 : index
    %c0_16 = arith.constant 0 : index
    %c0_17 = arith.constant 0 : index
    %19 = vector.load %arg6[%c0_15, %c0_16, %c0_17] : memref<1x512x1xf32, #tpu.memory_space<vmem>>, vector<1x512x1xf32>
    %20 = vector.shape_cast %19 : vector<1x512x1xf32> to vector<512x1xf32>
    %21 = vector.broadcast %20 : vector<512x1xf32> to vector<512x196xf32>
    %22 = arith.addf %18, %21 : vector<512x196xf32>
    %cst_18 = arith.constant 0.000000e+00 : f32
    %23 = vector.broadcast %cst_18 : f32 to vector<512x196xf32>
    %24 = arith.cmpf ogt, %22, %23 : vector<512x196xf32>
    %cst_19 = arith.constant 1.000000e-01 : f32
    %25 = vector.broadcast %cst_19 : f32 to vector<512x196xf32>
    %26 = arith.mulf %25, %22 : vector<512x196xf32>
    %27 = arith.select %24, %22, %26 : vector<512x196xi1>, vector<512x196xf32>
    %c0_20 = arith.constant 0 : index
    %c0_21 = arith.constant 0 : index
    %c0_22 = arith.constant 0 : index
    %28 = vector.load %arg7[%c0_20, %c0_21, %c0_22] : memref<1x256x512xbf16, #tpu.memory_space<vmem>>, vector<1x256x512xbf16>
    %29 = vector.shape_cast %28 : vector<1x256x512xbf16> to vector<256x512xbf16>
    %30 = arith.truncf %27 : vector<512x196xf32> to vector<512x196xbf16>
    %cst_23 = arith.constant dense<0.000000e+00> : vector<256x196xf32>
    %31 = tpu.matmul %29, %30, %cst_23 {dimension_numbers = #tpu.dot_dimension_numbers<[1], [0], [0], [1], [0, 0, 1, 1], [], []>} : vector<256x512xbf16>, vector<512x196xbf16>, vector<256x196xf32> -> vector<256x196xf32>
    %c0_24 = arith.constant 0 : index
    %c0_25 = arith.constant 0 : index
    %c0_26 = arith.constant 0 : index
    %32 = vector.load %arg8[%c0_24, %c0_25, %c0_26] : memref<1x256x1xf32, #tpu.memory_space<vmem>>, vector<1x256x1xf32>
    %33 = vector.shape_cast %32 : vector<1x256x1xf32> to vector<256x1xf32>
    %34 = vector.broadcast %33 : vector<256x1xf32> to vector<256x196xf32>
    %35 = arith.addf %31, %34 : vector<256x196xf32>
    %cst_27 = arith.constant 0.000000e+00 : f32
    %36 = vector.broadcast %cst_27 : f32 to vector<256x196xf32>
    %37 = arith.cmpf ogt, %35, %36 : vector<256x196xf32>
    %cst_28 = arith.constant 1.000000e-01 : f32
    %38 = vector.broadcast %cst_28 : f32 to vector<256x196xf32>
    %39 = arith.mulf %38, %35 : vector<256x196xf32>
    %40 = arith.select %37, %35, %39 : vector<256x196xi1>, vector<256x196xf32>
    %c0_29 = arith.constant 0 : index
    %c0_30 = arith.constant 0 : index
    %c0_31 = arith.constant 0 : index
    %41 = vector.load %arg9[%c0_29, %c0_30, %c0_31] : memref<1x128x256xbf16, #tpu.memory_space<vmem>>, vector<1x128x256xbf16>
    %42 = vector.shape_cast %41 : vector<1x128x256xbf16> to vector<128x256xbf16>
    %43 = arith.truncf %40 : vector<256x196xf32> to vector<256x196xbf16>
    %cst_32 = arith.constant dense<0.000000e+00> : vector<128x196xf32>
    %44 = tpu.matmul %42, %43, %cst_32 {dimension_numbers = #tpu.dot_dimension_numbers<[1], [0], [0], [1], [0, 0, 1, 1], [], []>} : vector<128x256xbf16>, vector<256x196xbf16>, vector<128x196xf32> -> vector<128x196xf32>
    %c0_33 = arith.constant 0 : index
    %c0_34 = arith.constant 0 : index
    %c0_35 = arith.constant 0 : index
    %45 = vector.load %arg10[%c0_33, %c0_34, %c0_35] : memref<1x128x1xf32, #tpu.memory_space<vmem>>, vector<1x128x1xf32>
    %46 = vector.shape_cast %45 : vector<1x128x1xf32> to vector<128x1xf32>
    %47 = vector.broadcast %46 : vector<128x1xf32> to vector<128x196xf32>
    %48 = arith.addf %44, %47 : vector<128x196xf32>
    %cst_36 = arith.constant 0.000000e+00 : f32
    %49 = vector.broadcast %cst_36 : f32 to vector<128x196xf32>
    %50 = arith.cmpf ogt, %48, %49 : vector<128x196xf32>
    %cst_37 = arith.constant 1.000000e-01 : f32
    %51 = vector.broadcast %cst_37 : f32 to vector<128x196xf32>
    %52 = arith.mulf %51, %48 : vector<128x196xf32>
    %53 = arith.select %50, %48, %52 : vector<128x196xi1>, vector<128x196xf32>
    %c0_38 = arith.constant 0 : index
    %c0_39 = arith.constant 0 : index
    %c0_40 = arith.constant 0 : index
    %54 = vector.load %arg11[%c0_38, %c0_39, %c0_40] : memref<1x64x128xbf16, #tpu.memory_space<vmem>>, vector<1x64x128xbf16>
    %55 = vector.shape_cast %54 : vector<1x64x128xbf16> to vector<64x128xbf16>
    %56 = arith.truncf %53 : vector<128x196xf32> to vector<128x196xbf16>
    %cst_41 = arith.constant dense<0.000000e+00> : vector<64x196xf32>
    %57 = tpu.matmul %55, %56, %cst_41 {dimension_numbers = #tpu.dot_dimension_numbers<[1], [0], [0], [1], [0, 0, 1, 1], [], []>} : vector<64x128xbf16>, vector<128x196xbf16>, vector<64x196xf32> -> vector<64x196xf32>
    %c0_42 = arith.constant 0 : index
    %c0_43 = arith.constant 0 : index
    %c0_44 = arith.constant 0 : index
    %58 = vector.load %arg12[%c0_42, %c0_43, %c0_44] : memref<1x64x1xf32, #tpu.memory_space<vmem>>, vector<1x64x1xf32>
    %59 = vector.shape_cast %58 : vector<1x64x1xf32> to vector<64x1xf32>
    %60 = vector.broadcast %59 : vector<64x1xf32> to vector<64x196xf32>
    %61 = arith.addf %57, %60 : vector<64x196xf32>
    %cst_45 = arith.constant 0.000000e+00 : f32
    %62 = vector.broadcast %cst_45 : f32 to vector<64x196xf32>
    %63 = arith.cmpf ogt, %61, %62 : vector<64x196xf32>
    %cst_46 = arith.constant 1.000000e-01 : f32
    %64 = vector.broadcast %cst_46 : f32 to vector<64x196xf32>
    %65 = arith.mulf %64, %61 : vector<64x196xf32>
    %66 = arith.select %63, %61, %65 : vector<64x196xi1>, vector<64x196xf32>
    %c0_47 = arith.constant 0 : index
    %c0_48 = arith.constant 0 : index
    %67 = vector.load %arg13[%c0_47, %c0_48] : memref<196x49xf32, #tpu.memory_space<vmem>>, vector<196x49xf32>
    %cst_49 = arith.constant dense<0.000000e+00> : vector<64x49xf32>
    %68 = tpu.matmul %66, %67, %cst_49 {dimension_numbers = #tpu.dot_dimension_numbers<[1], [0], [0], [1], [0, 0, 1, 1], [], []>} : vector<64x196xf32>, vector<196x49xf32>, vector<64x49xf32> -> vector<64x49xf32>
    %c0_50 = arith.constant 0 : index
    %c0_51 = arith.constant 0 : index
    %c0_52 = arith.constant 0 : index
    %c0_53 = arith.constant 0 : index
    %69 = vector.load %arg14[%c0_50, %c0_51, %c0_52, %c0_53] : memref<1x1x64x49xf32, #tpu.memory_space<vmem>>, vector<1x1x64x49xf32>
    %70 = vector.shape_cast %69 : vector<1x1x64x49xf32> to vector<64x49xf32>
    %71 = vector.shape_cast %68 : vector<64x49xf32> to vector<1x1x64x49xf32>
    tpu.vector_store %arg14[%c0_50, %c0_51, %c0_52, %c0_53], %71 {strides = array<i32>} : memref<1x1x64x49xf32, #tpu.memory_space<vmem>>, vector<1x1x64x49xf32>,
    return
  }
  func.func @transform_0(%arg0: i32, %arg1: i32) -> (i32, i32, i32, i32) {
    %c0_i32 = arith.constant 0 : i32
    %c0_i32_0 = arith.constant 0 : i32
    %c0_i32_1 = arith.constant 0 : i32
    return %arg0, %arg1, %c0_i32, %c0_i32_0 : i32, i32, i32, i32
  }
  func.func @transform_1(%arg0: i32, %arg1: i32) -> (i32, i32, i32) {
    %c0_i32 = arith.constant 0 : i32
    %c0_i32_0 = arith.constant 0 : i32
    %c0_i32_1 = arith.constant 0 : i32
    return %arg0, %c0_i32, %c0_i32_0 : i32, i32, i32
  }
  func.func @transform_2(%arg0: i32, %arg1: i32) -> (i32, i32, i32) {
    %c0_i32 = arith.constant 0 : i32
    %c0_i32_0 = arith.constant 0 : i32
    %c0_i32_1 = arith.constant 0 : i32
    return %arg0, %c0_i32, %c0_i32_0 : i32, i32, i32
  }
  func.func @transform_3(%arg0: i32, %arg1: i32) -> (i32, i32, i32) {
    %c0_i32 = arith.constant 0 : i32
    %c0_i32_0 = arith.constant 0 : i32
    %c0_i32_1 = arith.constant 0 : i32
    return %arg0, %c0_i32, %c0_i32_0 : i32, i32, i32
  }
  func.func @transform_4(%arg0: i32, %arg1: i32) -> (i32, i32, i32) {
    %c0_i32 = arith.constant 0 : i32
    %c0_i32_0 = arith.constant 0 : i32
    %c0_i32_1 = arith.constant 0 : i32
    return %arg0, %c0_i32, %c0_i32_0 : i32, i32, i32
  }
  func.func @transform_5(%arg0: i32, %arg1: i32) -> (i32, i32, i32) {
    %c0_i32 = arith.constant 0 : i32
    %c0_i32_0 = arith.constant 0 : i32
    %c0_i32_1 = arith.constant 0 : i32
    return %arg0, %c0_i32, %c0_i32_0 : i32, i32, i32
  }
  func.func @transform_6(%arg0: i32, %arg1: i32) -> (i32, i32, i32) {
    %c0_i32 = arith.constant 0 : i32
    %c0_i32_0 = arith.constant 0 : i32
    %c0_i32_1 = arith.constant 0 : i32
    return %arg0, %c0_i32, %c0_i32_0 : i32, i32, i32
  }
  func.func @transform_7(%arg0: i32, %arg1: i32) -> (i32, i32, i32) {
    %c0_i32 = arith.constant 0 : i32
    %c0_i32_0 = arith.constant 0 : i32
    %c0_i32_1 = arith.constant 0 : i32
    return %arg0, %c0_i32, %c0_i32_0 : i32, i32, i32
  }
  func.func @transform_8(%arg0: i32, %arg1: i32) -> (i32, i32, i32) {
    %c0_i32 = arith.constant 0 : i32
    %c0_i32_0 = arith.constant 0 : i32
    %c0_i32_1 = arith.constant 0 : i32
    return %arg0, %c0_i32, %c0_i32_0 : i32, i32, i32
  }
  func.func @transform_9(%arg0: i32, %arg1: i32) -> (i32, i32, i32) {
    %c0_i32 = arith.constant 0 : i32
    %c0_i32_0 = arith.constant 0 : i32
    %c0_i32_1 = arith.constant 0 : i32
    return %arg0, %c0_i32, %c0_i32_0 : i32, i32, i32
  }
  func.func @transform_10(%arg0: i32, %arg1: i32) -> (i32, i32, i32) {
    %c0_i32 = arith.constant 0 : i32
    %c0_i32_0 = arith.constant 0 : i32
    %c0_i32_1 = arith.constant 0 : i32
    return %arg0, %c0_i32, %c0_i32_0 : i32, i32, i32
  }
  func.func @transform_11(%arg0: i32, %arg1: i32) -> (i32, i32) {
    %c0_i32 = arith.constant 0 : i32
    %c0_i32_0 = arith.constant 0 : i32
    %c0_i32_1 = arith.constant 0 : i32
    return %c0_i32, %c0_i32_0 : i32, i32
  }
  func.func @transform_12(%arg0: i32, %arg1: i32) -> (i32, i32, i32, i32) {
    %c0_i32 = arith.constant 0 : i32
    %c0_i32_0 = arith.constant 0 : i32
    %c0_i32_1 = arith.constant 0 : i32
    return %arg0, %arg1, %c0_i32, %c0_i32_0 : i32, i32, i32, i32
  }
}

</mosaic_0001>

<llo_original>
// kernel: tpu_custom_call.1
$region0: #{tpu_custom_call.1}
  #allocation0 [shape = 'u32[]', space=smem, size = 0x4, offset = 0x4, fixed_abs, tag = 'smem constant byte address 0x4 - core index']
  #allocation1 [shape = 'u32[72,128]{1,0:T(1,128)}', space=vmem, size = 0x9000, scoped, tag = 'internal scratch']
  %s0 = inlined_call_operand.vmem [shape: f32[2,2,16,196], index: 0, kind: input, shape index: {}]
  %s1 = inlined_call_operand.vmem [shape: bf16[2,256,16], index: 1, kind: input, shape index: {}]
  %s2 = inlined_call_operand.vmem [shape: f32[2,256,1], index: 2, kind: input, shape index: {}]
  %s3 = inlined_call_operand.vmem [shape: bf16[2,512,256], index: 3, kind: input, shape index: {}]
  %s4 = inlined_call_operand.vmem [shape: f32[2,512,1], index: 4, kind: input, shape index: {}]
  %s5 = inlined_call_operand.hbm [shape: bf16[2,256,512], index: 5, kind: input, shape index: {}]
  %s6 = inlined_call_operand.vmem [shape: f32[2,256,1], index: 6, kind: input, shape index: {}]
  %s7 = inlined_call_operand.vmem [shape: bf16[2,128,256], index: 7, kind: input, shape index: {}]
  %s8 = inlined_call_operand.vmem [shape: f32[2,128,1], index: 8, kind: input, shape index: {}]
  %s9 = inlined_call_operand.vmem [shape: bf16[2,64,128], index: 9, kind: input, shape index: {}]
  %s10 = inlined_call_operand.vmem [shape: f32[2,64,1], index: 10, kind: input, shape index: {}]
  %s11 = inlined_call_operand.vmem [shape: f32[196,49], index: 11, kind: input, shape index: {}]
  %s12 = inlined_call_operand.vmem [shape: f32[2,2,64,49], index: 12, kind: output, shape index: {}]
  %s13 = sld [smem:[#allocation0]]
  $region85: #{tpu_custom_call.1} parent=0
    _
  %s15 = ssub.s32 1, %s13
  %s16 = scalar_select 0, %s15, %s13
  $region1: #{tpu_custom_call.1} parent=0
    #allocation2 [shape = 'u8[524288]{0}', space=vmem, size = 0x80000, scoped, tag = 'input window, operand 5']
    #allocation3 [shape = 's32[2]{0}', space=sflag, size = 0x8, scoped, tag = 'scoped memory for tpu_custom_call.1']
    %17 = vsyncpa [#allocation3], 0
    %s18 = scalar_lea.sflag [#allocation3], 1
    %19 = vsyncpa %s18, 0
    loop: start=0, step=1, limit=6
    $region2: #{tpu_custom_call.1} parent=1 // loop_pre_header
      _
    $region3: #{tpu_custom_call.1} parent=1 // loop_header
      %s21 = sphi 0, %s25
      %p22 = scmp.ge.s32.totalorder %s21, 6
      %s28 = sphi 0, %s40
      %s29 = sphi 0, %s36
      %s30 = sphi 0, %s28
      %s31 = sphi 0, %s29
      %s32 = sphi 0, %s30
      %s33 = sphi 0, %s31
      %s45 = sphi 0, %s47
      %s48 = sphi 0, %s45
      %s49 = sphi 0, %s48
      %s65 = sphi 0, %s49
      %s71 = sphi 0, %s73
      %s74 = sphi 0, %s71
      %s75 = sphi 0, %s74
      %s91 = sphi 0, %s75
      %s97 = sphi 0, %s99
      %s100 = sphi 0, %s97
      %s101 = sphi 0, %s100
      %s117 = sphi 0, %s101
      %s123 = sphi 0, %s125
      %s126 = sphi 0, %s123
      %s127 = sphi 0, %s126
      %s143 = sphi 0, %s127
      %s149 = sphi 0, %s151
      %s152 = sphi 0, %s149
      %s153 = sphi 0, %s152
      %s169 = sphi 0, %s153
      %s175 = sphi 0, %s177
      %s178 = sphi 0, %s175
      %s179 = sphi 0, %s178
      %s195 = sphi 0, %s179
      %s201 = sphi 0, %s203
      %s204 = sphi 0, %s201
      %s205 = sphi 0, %s204
      %s221 = sphi 0, %s205
      %s227 = sphi 0, %s229
      %s230 = sphi 0, %s227
      %s231 = sphi 0, %s230
      %s247 = sphi 0, %s231
      %s253 = sphi 0, %s255
      %s256 = sphi 0, %s253
      %s257 = sphi 0, %s256
      %s273 = sphi 0, %s257
      %s279 = sphi 0, %s281
      %s282 = sphi 0, %s279
      %s283 = sphi 0, %s282
      %s299 = sphi 0, %s283
      %s305 = sphi 0, %s307
      %s308 = sphi 0, %s305
      %s309 = sphi 0, %s308
      %s325 = sphi 0, %s309
      %s329 = sphi 0, %s329
      %s331 = sphi 0, %s329
      %s332 = sphi 0, %s331
      %s346 = sphi 0, %s332
      %s354 = sphi 0, %s356
      %s357 = sphi 0, %s354
      %s358 = sphi 0, %s357
      %s374 = sphi 0, %s358
    $region4: #{tpu_custom_call.1} parent=1 // loop_header_branch
      %24 = sbr.rel (%p22) target = $region8
    $region5: #{tpu_custom_call.1} parent=1 // loop_body
      %s26 = ssub.s32 %s21, 1
      %s27 = ssub.s32 %s21, 2
      %s34 = sadd.s32 1, %s29
      %p35 = scmp.ge.s32.totalorder %s34, 2
      %s36 = scalar_select %p35, 0, %s34
      %s37 = sadd.s32 1, %s28
      %s38 = scalar_select %p35, %s37, %s28
      %p39 = scmp.ge.s32.totalorder %s38, 2
      %s40 = scalar_select %p39, 0, %s38
      %s41 = ssub.s32 %s28, %s40
      %s42 = ssub.s32 %s29, %s36
      %s43 = sor.u32 %s41, %s42
      %p44 = scmp.eq.s32.totalorder %s43, 0
      %s46 = sadd.s32 %s45, 1
      %s47 = scalar_select %p44, %s45, %s46
      %p50 = pneg %p44
      %p51 = scmp.eq.s32.totalorder %s21, 3
      %p52 = por %p50, %p51
      %p53 = scmp.ne.s32.totalorder %s45, %s48
      %p54 = scmp.eq.s32.totalorder %s21, 0
      %p55 = por %p53, %p54
      %p56 = scmp.ne.s32.totalorder %s45, %s48
      %p57 = scmp.eq.s32.totalorder %s26, 3
      %p58 = por %p56, %p57
      %p59 = scmp.ne.s32.totalorder %s48, %s49
      %p60 = scmp.eq.s32.totalorder %s26, 0
      %p61 = por %p59, %p60
      %p62 = scmp.ne.s32.totalorder %s48, %s49
      %p63 = scmp.eq.s32.totalorder %s27, 3
      %p64 = por %p62, %p63
      %p66 = scmp.ne.s32.totalorder %s49, %s65
      %p67 = scmp.eq.s32.totalorder %s27, 0
      %p68 = por %p66, %p67
      %s69 = ssub.s32 %s28, %s40
      %p70 = scmp.eq.s32.totalorder %s69, 0
      %s72 = sadd.s32 %s71, 1
      %s73 = scalar_select %p70, %s71, %s72
      %p76 = pneg %p70
      %p77 = scmp.eq.s32.totalorder %s21, 3
      %p78 = por %p76, %p77
      %p79 = scmp.ne.s32.totalorder %s71, %s74
      %p80 = scmp.eq.s32.totalorder %s21, 0
      %p81 = por %p79, %p80
      %p82 = scmp.ne.s32.totalorder %s71, %s74
      %p83 = scmp.eq.s32.totalorder %s26, 3
      %p84 = por %p82, %p83
      %p85 = scmp.ne.s32.totalorder %s74, %s75
      %p86 = scmp.eq.s32.totalorder %s26, 0
      %p87 = por %p85, %p86
      %p88 = scmp.ne.s32.totalorder %s74, %s75
      %p89 = scmp.eq.s32.totalorder %s27, 3
      %p90 = por %p88, %p89
      %p92 = scmp.ne.s32.totalorder %s75, %s91
      %p93 = scmp.eq.s32.totalorder %s27, 0
      %p94 = por %p92, %p93
      %s95 = ssub.s32 %s28, %s40
      %p96 = scmp.eq.s32.totalorder %s95, 0
      %s98 = sadd.s32 %s97, 1
      %s99 = scalar_select %p96, %s97, %s98
      %p102 = pneg %p96
      %p103 = scmp.eq.s32.totalorder %s21, 3
      %p104 = por %p102, %p103
      %p105 = scmp.ne.s32.totalorder %s97, %s100
      %p106 = scmp.eq.s32.totalorder %s21, 0
      %p107 = por %p105, %p106
      %p108 = scmp.ne.s32.totalorder %s97, %s100
      %p109 = scmp.eq.s32.totalorder %s26, 3
      %p110 = por %p108, %p109
      %p111 = scmp.ne.s32.totalorder %s100, %s101
      %p112 = scmp.eq.s32.totalorder %s26, 0
      %p113 = por %p111, %p112
      %p114 = scmp.ne.s32.totalorder %s100, %s101
      %p115 = scmp.eq.s32.totalorder %s27, 3
      %p116 = por %p114, %p115
      %p118 = scmp.ne.s32.totalorder %s101, %s117
      %p119 = scmp.eq.s32.totalorder %s27, 0
      %p120 = por %p118, %p119
      %s121 = ssub.s32 %s28, %s40
      %p122 = scmp.eq.s32.totalorder %s121, 0
      %s124 = sadd.s32 %s123, 1
      %s125 = scalar_select %p122, %s123, %s124
      %p128 = pneg %p122
      %p129 = scmp.eq.s32.totalorder %s21, 3
      %p130 = por %p128, %p129
      %p131 = scmp.ne.s32.totalorder %s123, %s126
      %p132 = scmp.eq.s32.totalorder %s21, 0
      %p133 = por %p131, %p132
      %p134 = scmp.ne.s32.totalorder %s123, %s126
      %p135 = scmp.eq.s32.totalorder %s26, 3
      %p136 = por %p134, %p135
      %p137 = scmp.ne.s32.totalorder %s126, %s127
      %p138 = scmp.eq.s32.totalorder %s26, 0
      %p139 = por %p137, %p138
      %p140 = scmp.ne.s32.totalorder %s126, %s127
      %p141 = scmp.eq.s32.totalorder %s27, 3
      %p142 = por %p140, %p141
      %p144 = scmp.ne.s32.totalorder %s127, %s143
      %p145 = scmp.eq.s32.totalorder %s27, 0
      %p146 = por %p144, %p145
      %s147 = ssub.s32 %s28, %s40
      %p148 = scmp.eq.s32.totalorder %s147, 0
      %s150 = sadd.s32 %s149, 1
      %s151 = scalar_select %p148, %s149, %s150
      %p154 = pneg %p148
      %p155 = scmp.eq.s32.totalorder %s21, 3
      %p156 = por %p154, %p155
      %p157 = scmp.ne.s32.totalorder %s149, %s152
      %p158 = scmp.eq.s32.totalorder %s21, 0
      %p159 = por %p157, %p158
      %p160 = scmp.ne.s32.totalorder %s149, %s152
      %p161 = scmp.eq.s32.totalorder %s26, 3
      %p162 = por %p160, %p161
      %p163 = scmp.ne.s32.totalorder %s152, %s153
      %p164 = scmp.eq.s32.totalorder %s26, 0
      %p165 = por %p163, %p164
      %p166 = scmp.ne.s32.totalorder %s152, %s153
      %p167 = scmp.eq.s32.totalorder %s27, 3
      %p168 = por %p166, %p167
      %p170 = scmp.ne.s32.totalorder %s153, %s169
      %p171 = scmp.eq.s32.totalorder %s27, 0
      %p172 = por %p170, %p171
      %s173 = ssub.s32 %s28, %s40
      %p174 = scmp.eq.s32.totalorder %s173, 0
      %s176 = sadd.s32 %s175, 1
      %s177 = scalar_select %p174, %s175, %s176
      %p180 = pneg %p174
      %p181 = scmp.eq.s32.totalorder %s21, 3
      %p182 = por %p180, %p181
      %p183 = scmp.ne.s32.totalorder %s175, %s178
      %p184 = scmp.eq.s32.totalorder %s21, 0
      %p185 = por %p183, %p184
      %p186 = scmp.ne.s32.totalorder %s175, %s178
      %p187 = scmp.eq.s32.totalorder %s26, 3
      %p188 = por %p186, %p187
      %p189 = scmp.ne.s32.totalorder %s178, %s179
      %p190 = scmp.eq.s32.totalorder %s26, 0
      %p191 = por %p189, %p190
      %p192 = scmp.ne.s32.totalorder %s178, %s179
      %p193 = scmp.eq.s32.totalorder %s27, 3
      %p194 = por %p192, %p193
      %p196 = scmp.ne.s32.totalorder %s179, %s195
      %p197 = scmp.eq.s32.totalorder %s27, 0
      %p198 = por %p196, %p197
      %s199 = ssub.s32 %s28, %s40
      %p200 = scmp.eq.s32.totalorder %s199, 0
      %s202 = sadd.s32 %s201, 1
      %s203 = scalar_select %p200, %s201, %s202
      %p206 = pneg %p200
      %p207 = scmp.eq.s32.totalorder %s21, 3
      %p208 = por %p206, %p207
      %p209 = scmp.ne.s32.totalorder %s201, %s204
      %p210 = scmp.eq.s32.totalorder %s21, 0
      %p211 = por %p209, %p210
      %p212 = scmp.ne.s32.totalorder %s201, %s204
      %p213 = scmp.eq.s32.totalorder %s26, 3
      %p214 = por %p212, %p213
      %p215 = scmp.ne.s32.totalorder %s204, %s205
      %p216 = scmp.eq.s32.totalorder %s26, 0
      %p217 = por %p215, %p216
      %p218 = scmp.ne.s32.totalorder %s204, %s205
      %p219 = scmp.eq.s32.totalorder %s27, 3
      %p220 = por %p218, %p219
      %p222 = scmp.ne.s32.totalorder %s205, %s221
      %p223 = scmp.eq.s32.totalorder %s27, 0
      %p224 = por %p222, %p223
      %s225 = ssub.s32 %s28, %s40
      %p226 = scmp.eq.s32.totalorder %s225, 0
      %s228 = sadd.s32 %s227, 1
      %s229 = scalar_select %p226, %s227, %s228
      %p232 = pneg %p226
      %p233 = scmp.eq.s32.totalorder %s21, 3
      %p234 = por %p232, %p233
      %p235 = scmp.ne.s32.totalorder %s227, %s230
      %p236 = scmp.eq.s32.totalorder %s21, 0
      %p237 = por %p235, %p236
      %p238 = scmp.ne.s32.totalorder %s227, %s230
      %p239 = scmp.eq.s32.totalorder %s26, 3
      %p240 = por %p238, %p239
      %p241 = scmp.ne.s32.totalorder %s230, %s231
      %p242 = scmp.eq.s32.totalorder %s26, 0
      %p243 = por %p241, %p242
      %p244 = scmp.ne.s32.totalorder %s230, %s231
      %p245 = scmp.eq.s32.totalorder %s27, 3
      %p246 = por %p244, %p245
      %p248 = scmp.ne.s32.totalorder %s231, %s247
      %p249 = scmp.eq.s32.totalorder %s27, 0
      %p250 = por %p248, %p249
      %s251 = ssub.s32 %s28, %s40
      %p252 = scmp.eq.s32.totalorder %s251, 0
      %s254 = sadd.s32 %s253, 1
      %s255 = scalar_select %p252, %s253, %s254
      %p258 = pneg %p252
      %p259 = scmp.eq.s32.totalorder %s21, 3
      %p260 = por %p258, %p259
      %p261 = scmp.ne.s32.totalorder %s253, %s256
      %p262 = scmp.eq.s32.totalorder %s21, 0
      %p263 = por %p261, %p262
      %p264 = scmp.ne.s32.totalorder %s253, %s256
      %p265 = scmp.eq.s32.totalorder %s26, 3
      %p266 = por %p264, %p265
      %p267 = scmp.ne.s32.totalorder %s256, %s257
      %p268 = scmp.eq.s32.totalorder %s26, 0
      %p269 = por %p267, %p268
      %p270 = scmp.ne.s32.totalorder %s256, %s257
      %p271 = scmp.eq.s32.totalorder %s27, 3
      %p272 = por %p270, %p271
      %p274 = scmp.ne.s32.totalorder %s257, %s273
      %p275 = scmp.eq.s32.totalorder %s27, 0
      %p276 = por %p274, %p275
      %s277 = ssub.s32 %s28, %s40
      %p278 = scmp.eq.s32.totalorder %s277, 0
      %s280 = sadd.s32 %s279, 1
      %s281 = scalar_select %p278, %s279, %s280
      %p284 = pneg %p278
      %p285 = scmp.eq.s32.totalorder %s21, 3
      %p286 = por %p284, %p285
      %p287 = scmp.ne.s32.totalorder %s279, %s282
      %p288 = scmp.eq.s32.totalorder %s21, 0
      %p289 = por %p287, %p288
      %p290 = scmp.ne.s32.totalorder %s279, %s282
      %p291 = scmp.eq.s32.totalorder %s26, 3
      %p292 = por %p290, %p291
      %p293 = scmp.ne.s32.totalorder %s282, %s283
      %p294 = scmp.eq.s32.totalorder %s26, 0
      %p295 = por %p293, %p294
      %p296 = scmp.ne.s32.totalorder %s282, %s283
      %p297 = scmp.eq.s32.totalorder %s27, 3
      %p298 = por %p296, %p297
      %p300 = scmp.ne.s32.totalorder %s283, %s299
      %p301 = scmp.eq.s32.totalorder %s27, 0
      %p302 = por %p300, %p301
      %s303 = ssub.s32 %s28, %s40
      %p304 = scmp.eq.s32.totalorder %s303, 0
      %s306 = sadd.s32 %s305, 1
      %s307 = scalar_select %p304, %s305, %s306
      %p310 = pneg %p304
      %p311 = scmp.eq.s32.totalorder %s21, 3
      %p312 = por %p310, %p311
      %p313 = scmp.ne.s32.totalorder %s305, %s308
      %p314 = scmp.eq.s32.totalorder %s21, 0
      %p315 = por %p313, %p314
      %p316 = scmp.ne.s32.totalorder %s305, %s308
      %p317 = scmp.eq.s32.totalorder %s26, 3
      %p318 = por %p316, %p317
      %p319 = scmp.ne.s32.totalorder %s308, %s309
      %p320 = scmp.eq.s32.totalorder %s26, 0
      %p321 = por %p319, %p320
      %p322 = scmp.ne.s32.totalorder %s308, %s309
      %p323 = scmp.eq.s32.totalorder %s27, 3
      %p324 = por %p322, %p323
      %p326 = scmp.ne.s32.totalorder %s309, %s325
      %p327 = scmp.eq.s32.totalorder %s27, 0
      %p328 = por %p326, %p327
      %s330 = sadd.s32 %s329, 1
      %p333 = scmp.eq.s32.totalorder %s21, 3
      %p334 = scmp.ne.s32.totalorder %s329, %s331
      %p335 = scmp.eq.s32.totalorder %s21, 0
      %p336 = por %p334, %p335
      %p337 = scmp.ne.s32.totalorder %s329, %s331
      %p338 = scmp.eq.s32.totalorder %s26, 3
      %p339 = por %p337, %p338
      %p340 = scmp.ne.s32.totalorder %s331, %s332
      %p341 = scmp.eq.s32.totalorder %s26, 0
      %p342 = por %p340, %p341
      %p343 = scmp.ne.s32.totalorder %s331, %s332
      %p344 = scmp.eq.s32.totalorder %s27, 3
      %p345 = por %p343, %p344
      %p347 = scmp.ne.s32.totalorder %s332, %s346
      %p348 = scmp.eq.s32.totalorder %s27, 0
      %p349 = por %p347, %p348
      %s350 = ssub.s32 %s28, %s40
      %s351 = ssub.s32 %s29, %s36
      %s352 = sor.u32 %s350, %s351
      %p353 = scmp.eq.s32.totalorder %s352, 0
      %s355 = sadd.s32 %s354, 1
      %s356 = scalar_select %p353, %s354, %s355
      %p359 = pneg %p353
      %p360 = scmp.eq.s32.totalorder %s21, 3
      %p361 = por %p359, %p360
      %p362 = scmp.ne.s32.totalorder %s354, %s357
      %p363 = scmp.eq.s32.totalorder %s21, 0
      %p364 = por %p362, %p363
      %p365 = scmp.ne.s32.totalorder %s354, %s357
      %p366 = scmp.eq.s32.totalorder %s26, 3
      %p367 = por %p365, %p366
      %p368 = scmp.ne.s32.totalorder %s357, %s358
      %p369 = scmp.eq.s32.totalorder %s26, 0
      %p370 = por %p368, %p369
      %p371 = scmp.ne.s32.totalorder %s357, %s358
      %p372 = scmp.eq.s32.totalorder %s27, 3
      %p373 = por %p371, %p372
      %p375 = scmp.ne.s32.totalorder %s358, %s374
      %p376 = scmp.eq.s32.totalorder %s27, 0
      %p377 = por %p375, %p376
      %p378 = scmp.le.s32.totalorder 1, %s21
      %p379 = scmp.lt.s32.totalorder %s21, 5
      %p380 = pnand %p378, %p379
      %p381 = pneg %p380
      // Predicated region
      $region9: #{tpu_custom_call.1} parent=5 // pred_check
        _
      $region10: #{tpu_custom_call.1} parent=5 // pred_check_branch
        %383 = sbr.rel (%p380) target = $region12
      $region11: #{tpu_custom_call.1} parent=5 // pred_region
        %s384 = ssub.s32 %s21, 1
        // Predicated region
        $region13: #{tpu_custom_call.1} parent=11 // pred_check
          %p385 = pneg %p342
        $region14: #{tpu_custom_call.1} parent=11 // pred_check_branch
          %387 = sbr.rel (%p385) target = $region16
        $region15: #{tpu_custom_call.1} parent=11 // pred_region
          _
        $region16: #{tpu_custom_call.1} parent=11 // pred_fallthru
          _
      $region12: #{tpu_custom_call.1} parent=5 // pred_fallthru
        _
      %p388 = scmp.lt.s32.totalorder %s21, 4
      // Predicated region
      $region17: #{tpu_custom_call.1} parent=5 // pred_check
        %p389 = pneg %p388
      $region18: #{tpu_custom_call.1} parent=5 // pred_check_branch
        %391 = sbr.rel (%p389) target = $region20
      $region19: #{tpu_custom_call.1} parent=5 // pred_region
        // Predicated region
        $region21: #{tpu_custom_call.1} parent=19 // pred_check
          %p392 = pneg %p55
        $region22: #{tpu_custom_call.1} parent=19 // pred_check_branch
          %394 = sbr.rel (%p392) target = $region24
        $region23: #{tpu_custom_call.1} parent=19 // pred_region
          %p395 = scmp.lt.s32.totalorder %s28, 1
          %s396 = scalar_select %p395, %s28, 1
          %p397 = scmp.lt.s32.totalorder %s29, 1
          %s398 = scalar_select %p397, %s29, 1
          %s399 = smul.addr %s398, 4
          %s400 = smul.addr %s396, 8
          %s401 = sadd.s32 %s399, %s400
          %s402 = smul.addr %s401, 8
          %s403 = scalar_lea.vmem %s0, %s402
        $region24: #{tpu_custom_call.1} parent=19 // pred_fallthru
          _
        // Predicated region
        $region25: #{tpu_custom_call.1} parent=19 // pred_check
          %p404 = pneg %p81
        $region26: #{tpu_custom_call.1} parent=19 // pred_check_branch
          %406 = sbr.rel (%p404) target = $region28
        $region27: #{tpu_custom_call.1} parent=19 // pred_region
          %p407 = scmp.lt.s32.totalorder %s28, 1
          %s408 = scalar_select %p407, %s28, 1
          %s409 = smul.addr %s408, 32
          %s410 = smul.addr %s409, 4
          %s411 = scalar_lea.vmem %s1, %s410
        $region28: #{tpu_custom_call.1} parent=19 // pred_fallthru
          _
        // Predicated region
        $region29: #{tpu_custom_call.1} parent=19 // pred_check
          %p412 = pneg %p107
        $region30: #{tpu_custom_call.1} parent=19 // pred_check_branch
          %414 = sbr.rel (%p412) target = $region32
        $region31: #{tpu_custom_call.1} parent=19 // pred_region
          %p415 = scmp.lt.s32.totalorder %s28, 1
          %s416 = scalar_select %p415, %s28, 1
          %s417 = smul.addr %s416, 32
          %s418 = smul.addr %s417, 8
          %s419 = scalar_lea.vmem %s2, %s418
        $region32: #{tpu_custom_call.1} parent=19 // pred_fallthru
          _
        // Predicated region
        $region33: #{tpu_custom_call.1} parent=19 // pred_check
          %p420 = pneg %p133
        $region34: #{tpu_custom_call.1} parent=19 // pred_check_branch
          %422 = sbr.rel (%p420) target = $region36
        $region35: #{tpu_custom_call.1} parent=19 // pred_region
          %p423 = scmp.lt.s32.totalorder %s28, 1
          %s424 = scalar_select %p423, %s28, 1
          %s425 = smul.addr %s424, 128
          %s426 = smul.addr %s425, 4
          %s427 = scalar_lea.vmem %s3, %s426
        $region36: #{tpu_custom_call.1} parent=19 // pred_fallthru
          _
        // Predicated region
        $region37: #{tpu_custom_call.1} parent=19 // pred_check
          %p428 = pneg %p159
        $region38: #{tpu_custom_call.1} parent=19 // pred_check_branch
          %430 = sbr.rel (%p428) target = $region40
        $region39: #{tpu_custom_call.1} parent=19 // pred_region
          %p431 = scmp.lt.s32.totalorder %s28, 1
          %s432 = scalar_select %p431, %s28, 1
          %s433 = smul.addr %s432, 64
          %s434 = smul.addr %s433, 8
          %s435 = scalar_lea.vmem %s4, %s434
        $region40: #{tpu_custom_call.1} parent=19 // pred_fallthru
          _
        // Predicated region
        $region41: #{tpu_custom_call.1} parent=19 // pred_check
          %p436 = pneg %p185
        $region42: #{tpu_custom_call.1} parent=19 // pred_check_branch
          %438 = sbr.rel (%p436) target = $region44
        $region43: #{tpu_custom_call.1} parent=19 // pred_region
          %s439 = sand.u32 %s175, 1
          %s440 = scalar_lea.sflag [#allocation3], %s439
          %s441 = sand.u32 %s175, 1
          %s442 = smul.addr %s441, 512
          %s443 = scalar_lea.vmem [#allocation2], %s442
          %445 = vsyncadd %s440, 0
          %s446 = smul.addr %s28, 128
          %s447 = smul.addr %s446, 4
          %s448 = scalar_lea.hbm %s5, %s447
          %s449 = sshll.u32 %s448, 4
          %s450 = int_to_ptr.hbm [resolvable:$true] %s449
          %s451 = sshll.u32 %s443, 4
          %s452 = int_to_ptr.vmem [resolvable:$true] %s451
          %457 = dma.hbm_to_vmem [thread:$0]  %s450, 8192, %s452, %s440, 256, 256, 16
        $region44: #{tpu_custom_call.1} parent=19 // pred_fallthru
          _
        // Predicated region
        $region45: #{tpu_custom_call.1} parent=19 // pred_check
          %p458 = pneg %p211
        $region46: #{tpu_custom_call.1} parent=19 // pred_check_branch
          %460 = sbr.rel (%p458) target = $region48
        $region47: #{tpu_custom_call.1} parent=19 // pred_region
          %p461 = scmp.lt.s32.totalorder %s28, 1
          %s462 = scalar_select %p461, %s28, 1
          %s463 = smul.addr %s462, 32
          %s464 = smul.addr %s463, 8
          %s465 = scalar_lea.vmem %s6, %s464
        $region48: #{tpu_custom_call.1} parent=19 // pred_fallthru
          _
        // Predicated region
        $region49: #{tpu_custom_call.1} parent=19 // pred_check
          %p466 = pneg %p237
        $region50: #{tpu_custom_call.1} parent=19 // pred_check_branch
          %468 = sbr.rel (%p466) target = $region52
        $region51: #{tpu_custom_call.1} parent=19 // pred_region
          %p469 = scmp.lt.s32.totalorder %s28, 1
          %s470 = scalar_select %p469, %s28, 1
          %s471 = smul.addr %s470, 32
          %s472 = smul.addr %s471, 4
          %s473 = scalar_lea.vmem %s7, %s472
        $region52: #{tpu_custom_call.1} parent=19 // pred_fallthru
          _
        // Predicated region
        $region53: #{tpu_custom_call.1} parent=19 // pred_check
          %p474 = pneg %p263
        $region54: #{tpu_custom_call.1} parent=19 // pred_check_branch
          %476 = sbr.rel (%p474) target = $region56
        $region55: #{tpu_custom_call.1} parent=19 // pred_region
          %p477 = scmp.lt.s32.totalorder %s28, 1
          %s478 = scalar_select %p477, %s28, 1
          %s479 = smul.addr %s478, 16
          %s480 = smul.addr %s479, 8
          %s481 = scalar_lea.vmem %s8, %s480
        $region56: #{tpu_custom_call.1} parent=19 // pred_fallthru
          _
        // Predicated region
        $region57: #{tpu_custom_call.1} parent=19 // pred_check
          %p482 = pneg %p289
        $region58: #{tpu_custom_call.1} parent=19 // pred_check_branch
          %484 = sbr.rel (%p482) target = $region60
        $region59: #{tpu_custom_call.1} parent=19 // pred_region
          %p485 = scmp.lt.s32.totalorder %s28, 1
          %s486 = scalar_select %p485, %s28, 1
          %s487 = smul.addr %s486, 8
          %s488 = smul.addr %s487, 4
          %s489 = scalar_lea.vmem %s9, %s488
        $region60: #{tpu_custom_call.1} parent=19 // pred_fallthru
          _
        // Predicated region
        $region61: #{tpu_custom_call.1} parent=19 // pred_check
          %p490 = pneg %p315
        $region62: #{tpu_custom_call.1} parent=19 // pred_check_branch
          %492 = sbr.rel (%p490) target = $region64
        $region63: #{tpu_custom_call.1} parent=19 // pred_region
          %p493 = scmp.lt.s32.totalorder %s28, 1
          %s494 = scalar_select %p493, %s28, 1
          %s495 = smul.addr %s494, 8
          %s496 = smul.addr %s495, 8
          %s497 = scalar_lea.vmem %s10, %s496
        $region64: #{tpu_custom_call.1} parent=19 // pred_fallthru
          _
      $region20: #{tpu_custom_call.1} parent=5 // pred_fallthru
        _
      %p498 = scmp.le.s32.totalorder 1, %s21
      %p499 = scmp.lt.s32.totalorder %s21, 5
      %p500 = pnand %p498, %p499
      %p501 = pneg %p500
      // Predicated region
      $region65: #{tpu_custom_call.1} parent=5 // pred_check
        _
      $region66: #{tpu_custom_call.1} parent=5 // pred_check_branch
        %503 = sbr.rel (%p500) target = $region68
      $region67: #{tpu_custom_call.1} parent=5 // pred_region
        %s504 = ssub.s32 %s21, 1
        %s505 = sand.u32 %s178, 1
        %s506 = scalar_lea.sflag [#allocation3], %s505
        %s507 = sand.u32 %s178, 1
        %s508 = smul.addr %s507, 512
        %s509 = scalar_lea.vmem [#allocation2], %s508
        // Predicated region
        $region69: #{tpu_custom_call.1} parent=67 // pred_check
          %p510 = pneg %p191
        $region70: #{tpu_custom_call.1} parent=67 // pred_check_branch
          %512 = sbr.rel (%p510) target = $region72
        $region71: #{tpu_custom_call.1} parent=67 // pred_region
          %514 = dma.done %s506, 8192
        $region72: #{tpu_custom_call.1} parent=67 // pred_fallthru
          _
        %p515 = scmp.lt.s32.totalorder %s30, 1
        %s516 = scalar_select %p515, %s30, 1
        %p517 = scmp.lt.s32.totalorder %s31, 1
        %s518 = scalar_select %p517, %s31, 1
        %s519 = smul.addr %s518, 4
        %s520 = smul.addr %s516, 8
        %s521 = sadd.s32 %s519, %s520
        %s522 = smul.addr %s521, 8
        %s523 = scalar_lea.vmem %s0, %s522
        %p524 = pneg %p61
        %p525 = pneg %p58
        %p526 = scmp.lt.s32.totalorder %s30, 1
        %s527 = scalar_select %p526, %s30, 1
        %s528 = smul.addr %s527, 32
        %s529 = smul.addr %s528, 4
        %s530 = scalar_lea.vmem %s1, %s529
        %p531 = pneg %p87
        %p532 = pneg %p84
        %p533 = scmp.lt.s32.totalorder %s30, 1
        %s534 = scalar_select %p533, %s30, 1
        %s535 = smul.addr %s534, 32
        %s536 = smul.addr %s535, 8
        %s537 = scalar_lea.vmem %s2, %s536
        %p538 = pneg %p113
        %p539 = pneg %p110
        %p540 = scmp.lt.s32.totalorder %s30, 1
        %s541 = scalar_select %p540, %s30, 1
        %s542 = smul.addr %s541, 128
        %s543 = smul.addr %s542, 4
        %s544 = scalar_lea.vmem %s3, %s543
        %p545 = pneg %p139
        %p546 = pneg %p136
        %p547 = scmp.lt.s32.totalorder %s30, 1
        %s548 = scalar_select %p547, %s30, 1
        %s549 = smul.addr %s548, 64
        %s550 = smul.addr %s549, 8
        %s551 = scalar_lea.vmem %s4, %s550
        %p552 = pneg %p165
        %p553 = pneg %p162
        %s554 = sand.u32 %s178, 1
        %s555 = scalar_lea.sflag [#allocation3], %s554
        %s556 = sand.u32 %s178, 1
        %s557 = smul.addr %s556, 512
        %s558 = scalar_lea.vmem [#allocation2], %s557
        %p559 = pneg %p191
        %p560 = pneg %p188
        %p561 = scmp.lt.s32.totalorder %s30, 1
        %s562 = scalar_select %p561, %s30, 1
        %s563 = smul.addr %s562, 32
        %s564 = smul.addr %s563, 8
        %s565 = scalar_lea.vmem %s6, %s564
        %p566 = pneg %p217
        %p567 = pneg %p214
        %p568 = scmp.lt.s32.totalorder %s30, 1
        %s569 = scalar_select %p568, %s30, 1
        %s570 = smul.addr %s569, 32
        %s571 = smul.addr %s570, 4
        %s572 = scalar_lea.vmem %s7, %s571
        %p573 = pneg %p243
        %p574 = pneg %p240
        %p575 = scmp.lt.s32.totalorder %s30, 1
        %s576 = scalar_select %p575, %s30, 1
        %s577 = smul.addr %s576, 16
        %s578 = smul.addr %s577, 8
        %s579 = scalar_lea.vmem %s8, %s578
        %p580 = pneg %p269
        %p581 = pneg %p266
        %p582 = scmp.lt.s32.totalorder %s30, 1
        %s583 = scalar_select %p582, %s30, 1
        %s584 = smul.addr %s583, 8
        %s585 = smul.addr %s584, 4
        %s586 = scalar_lea.vmem %s9, %s585
        %p587 = pneg %p295
        %p588 = pneg %p292
        %p589 = scmp.lt.s32.totalorder %s30, 1
        %s590 = scalar_select %p589, %s30, 1
        %s591 = smul.addr %s590, 8
        %s592 = smul.addr %s591, 8
        %s593 = scalar_lea.vmem %s10, %s592
        %p594 = pneg %p321
        %p595 = pneg %p318
        %p596 = pneg %p342
        %p597 = pneg %p339
        %p598 = pneg %p370
        %p599 = pneg %p367
        %p600 = scmp.lt.s32.totalorder %s30, 1
        %s601 = scalar_select %p600, %s30, 1
        %p602 = scmp.lt.s32.totalorder %s31, 1
        %s603 = scalar_select %p602, %s31, 1
        %s604 = smul.addr %s603, 8
        %s605 = smul.addr %s601, 16
        %s606 = sadd.s32 %s604, %s605
        %s607 = smul.addr %s606, 8
        %s608 = scalar_lea.vmem %s12, %s607
        %p609 = scmp.lt.s32.totalorder %s30, 1
        %s610 = scalar_select %p609, %s30, 1
        %p611 = scmp.lt.s32.totalorder %s31, 1
        %s612 = scalar_select %p611, %s31, 1
        %s613 = smul.addr %s612, 4
        %s614 = smul.addr %s610, 8
        %s615 = sadd.s32 %s613, %s614
        %s616 = smul.addr %s615, 8
        %s617 = scalar_lea.vmem %s0, %s616
        %p618 = scmp.lt.s32.totalorder %s30, 1
        %s619 = scalar_select %p618, %s30, 1
        %s620 = smul.addr %s619, 32
        %s621 = smul.addr %s620, 4
        %s622 = scalar_lea.vmem %s1, %s621
        %p623 = scmp.lt.s32.totalorder %s30, 1
        %s624 = scalar_select %p623, %s30, 1
        %s625 = smul.addr %s624, 32
        %s626 = smul.addr %s625, 8
        %s627 = scalar_lea.vmem %s2, %s626
        %p628 = scmp.lt.s32.totalorder %s30, 1
        %s629 = scalar_select %p628, %s30, 1
        %s630 = smul.addr %s629, 128
        %s631 = smul.addr %s630, 4
        %s632 = scalar_lea.vmem %s3, %s631
        %p633 = scmp.lt.s32.totalorder %s30, 1
        %s634 = scalar_select %p633, %s30, 1
        %s635 = smul.addr %s634, 64
        %s636 = smul.addr %s635, 8
        %s637 = scalar_lea.vmem %s4, %s636
        %p638 = scmp.lt.s32.totalorder %s30, 1
        %s639 = scalar_select %p638, %s30, 1
        %s640 = smul.addr %s639, 32
        %s641 = smul.addr %s640, 8
        %s642 = scalar_lea.vmem %s6, %s641
        %p643 = scmp.lt.s32.totalorder %s30, 1
        %s644 = scalar_select %p643, %s30, 1
        %s645 = smul.addr %s644, 32
        %s646 = smul.addr %s645, 4
        %s647 = scalar_lea.vmem %s7, %s646
        %p648 = scmp.lt.s32.totalorder %s30, 1
        %s649 = scalar_select %p648, %s30, 1
        %s650 = smul.addr %s649, 16
        %s651 = smul.addr %s650, 8
        %s652 = scalar_lea.vmem %s8, %s651
        %p653 = scmp.lt.s32.totalorder %s30, 1
        %s654 = scalar_select %p653, %s30, 1
        %s655 = smul.addr %s654, 8
        %s656 = smul.addr %s655, 4
        %s657 = scalar_lea.vmem %s9, %s656
        %p658 = scmp.lt.s32.totalorder %s30, 1
        %s659 = scalar_select %p658, %s30, 1
        %s660 = smul.addr %s659, 8
        %s661 = smul.addr %s660, 8
        %s662 = scalar_lea.vmem %s10, %s661
        %p663 = scmp.lt.s32.totalorder %s30, 1
        %s664 = scalar_select %p663, %s30, 1
        %p665 = scmp.lt.s32.totalorder %s31, 1
        %s666 = scalar_select %p665, %s31, 1
        %s667 = smul.addr %s666, 8
        %s668 = smul.addr %s664, 16
        %s669 = sadd.s32 %s667, %s668
        %s670 = smul.addr %s669, 8
        %s671 = scalar_lea.vmem %s12, %s670
        %v673 = vld [vmem:[%s617] sm:$0xff]
        %v674 = vld [vmem:[%s617 + $0x8] sm:$0xff]
        %v675 = vld [vmem:[%s617 + $0x10] sm:$0xff]
        %v676 = vld [vmem:[%s617 + $0x18] sm:$0xff]
        %v677 = vld [vmem:[%s622] sm:$0xf]
        %v678 = vld [vmem:[%s622 + $0x4] sm:$0xf]
        %v679 = vld [vmem:[%s622 + $0x8] sm:$0xf]
        %v680 = vld [vmem:[%s622 + $0xc] sm:$0xf]
        %v681 = vld [vmem:[%s622 + $0x10] sm:$0xf]
        %v682 = vld [vmem:[%s622 + $0x14] sm:$0xf]
        %v683 = vld [vmem:[%s622 + $0x18] sm:$0xf]
        %v684 = vld [vmem:[%s622 + $0x1c] sm:$0xf]
        %v685 = vld [vmem:[%s622 + $0x20] sm:$0xf]
        %v686 = vld [vmem:[%s622 + $0x24] sm:$0xf]
        %v687 = vld [vmem:[%s622 + $0x28] sm:$0xf]
        %v688 = vld [vmem:[%s622 + $0x2c] sm:$0xf]
        %v689 = vld [vmem:[%s622 + $0x30] sm:$0xf]
        %v690 = vld [vmem:[%s622 + $0x34] sm:$0xf]
        %v691 = vld [vmem:[%s622 + $0x38] sm:$0xf]
        %v692 = vld [vmem:[%s622 + $0x3c] sm:$0xf]
        %v693 = vld [vmem:[%s622 + $0x40] sm:$0xf]
        %v694 = vld [vmem:[%s622 + $0x44] sm:$0xf]
        %v695 = vld [vmem:[%s622 + $0x48] sm:$0xf]
        %v696 = vld [vmem:[%s622 + $0x4c] sm:$0xf]
        %v697 = vld [vmem:[%s622 + $0x50] sm:$0xf]
        %v698 = vld [vmem:[%s622 + $0x54] sm:$0xf]
        %v699 = vld [vmem:[%s622 + $0x58] sm:$0xf]
        %v700 = vld [vmem:[%s622 + $0x5c] sm:$0xf]
        %v701 = vld [vmem:[%s622 + $0x60] sm:$0xf]
        %v702 = vld [vmem:[%s622 + $0x64] sm:$0xf]
        %v703 = vld [vmem:[%s622 + $0x68] sm:$0xf]
        %v704 = vld [vmem:[%s622 + $0x6c] sm:$0xf]
        %v705 = vld [vmem:[%s622 + $0x70] sm:$0xf]
        %v706 = vld [vmem:[%s622 + $0x74] sm:$0xf]
        %v707 = vld [vmem:[%s622 + $0x78] sm:$0xf]
        %v708 = vld [vmem:[%s622 + $0x7c] sm:$0xf]
        %v709 = vpack.c.bf16 %v675, %v673
        %v710 = vpack.c.bf16 %v676, %v674
        %v711 = vld [vmem:[%s627] sm:$0xff]
        %v712 = vld [vmem:[%s627 + $0x8] sm:$0xff]
        %v713 = vld [vmem:[%s627 + $0x10] sm:$0xff]
        %v714 = vld [vmem:[%s627 + $0x18] sm:$0xff]
        %v715 = vld [vmem:[%s627 + $0x20] sm:$0xff]
        %v716 = vld [vmem:[%s627 + $0x28] sm:$0xff]
        %v717 = vld [vmem:[%s627 + $0x30] sm:$0xff]
        %v718 = vld [vmem:[%s627 + $0x38] sm:$0xff]
        %v719 = vld [vmem:[%s627 + $0x40] sm:$0xff]
        %v720 = vld [vmem:[%s627 + $0x48] sm:$0xff]
        %v721 = vld [vmem:[%s627 + $0x50] sm:$0xff]
        %v722 = vld [vmem:[%s627 + $0x58] sm:$0xff]
        %v723 = vld [vmem:[%s627 + $0x60] sm:$0xff]
        %v724 = vld [vmem:[%s627 + $0x68] sm:$0xff]
        %v725 = vld [vmem:[%s627 + $0x70] sm:$0xff]
        %v726 = vld [vmem:[%s627 + $0x78] sm:$0xff]
        %v727 = vld [vmem:[%s627 + $0x80] sm:$0xff]
        %v728 = vld [vmem:[%s627 + $0x88] sm:$0xff]
        %v729 = vld [vmem:[%s627 + $0x90] sm:$0xff]
        %v730 = vld [vmem:[%s627 + $0x98] sm:$0xff]
        %v731 = vld [vmem:[%s627 + $0xa0] sm:$0xff]
        %v732 = vld [vmem:[%s627 + $0xa8] sm:$0xff]
        %v733 = vld [vmem:[%s627 + $0xb0] sm:$0xff]
        %v734 = vld [vmem:[%s627 + $0xb8] sm:$0xff]
        %v735 = vld [vmem:[%s627 + $0xc0] sm:$0xff]
        %v736 = vld [vmem:[%s627 + $0xc8] sm:$0xff]
        %v737 = vld [vmem:[%s627 + $0xd0] sm:$0xff]
        %v738 = vld [vmem:[%s627 + $0xd8] sm:$0xff]
        %v739 = vld [vmem:[%s627 + $0xe0] sm:$0xff]
        %v740 = vld [vmem:[%s627 + $0xe8] sm:$0xff]
        %v741 = vld [vmem:[%s627 + $0xf0] sm:$0xff]
        %v742 = vld [vmem:[%s627 + $0xf8] sm:$0xff]
        %744 = vset.pattern.permute.xlu0 0
        %745 = vperm.xlu0 %744, %v711
        %v746 = vpop.permute.xlu0 %745
        %749 = vset.pattern.permute.xlu0 0
        %750 = vperm.xlu0 %749, %v712
        %v751 = vpop.permute.xlu0 %750
        %754 = vset.pattern.permute.xlu0 0
        %755 = vperm.xlu0 %754, %v713
        %v756 = vpop.permute.xlu0 %755
        %759 = vset.pattern.permute.xlu0 0
        %760 = vperm.xlu0 %759, %v714
        %v761 = vpop.permute.xlu0 %760
        %764 = vset.pattern.permute.xlu0 0
        %765 = vperm.xlu0 %764, %v715
        %v766 = vpop.permute.xlu0 %765
        %769 = vset.pattern.permute.xlu0 0
        %770 = vperm.xlu0 %769, %v716
        %v771 = vpop.permute.xlu0 %770
        %774 = vset.pattern.permute.xlu0 0
        %775 = vperm.xlu0 %774, %v717
        %v776 = vpop.permute.xlu0 %775
        %779 = vset.pattern.permute.xlu0 0
        %780 = vperm.xlu0 %779, %v718
        %v781 = vpop.permute.xlu0 %780
        %784 = vset.pattern.permute.xlu0 0
        %785 = vperm.xlu0 %784, %v719
        %v786 = vpop.permute.xlu0 %785
        %789 = vset.pattern.permute.xlu0 0
        %790 = vperm.xlu0 %789, %v720
        %v791 = vpop.permute.xlu0 %790
        %794 = vset.pattern.permute.xlu0 0
        %795 = vperm.xlu0 %794, %v721
        %v796 = vpop.permute.xlu0 %795
        %799 = vset.pattern.permute.xlu0 0
        %800 = vperm.xlu0 %799, %v722
        %v801 = vpop.permute.xlu0 %800
        %804 = vset.pattern.permute.xlu0 0
        %805 = vperm.xlu0 %804, %v723
        %v806 = vpop.permute.xlu0 %805
        %809 = vset.pattern.permute.xlu0 0
        %810 = vperm.xlu0 %809, %v724
        %v811 = vpop.permute.xlu0 %810
        %814 = vset.pattern.permute.xlu0 0
        %815 = vperm.xlu0 %814, %v725
        %v816 = vpop.permute.xlu0 %815
        %819 = vset.pattern.permute.xlu0 0
        %820 = vperm.xlu0 %819, %v726
        %v821 = vpop.permute.xlu0 %820
        %824 = vset.pattern.permute.xlu0 0
        %825 = vperm.xlu0 %824, %v727
        %v826 = vpop.permute.xlu0 %825
        %829 = vset.pattern.permute.xlu0 0
        %830 = vperm.xlu0 %829, %v728
        %v831 = vpop.permute.xlu0 %830
        %834 = vset.pattern.permute.xlu0 0
        %835 = vperm.xlu0 %834, %v729
        %v836 = vpop.permute.xlu0 %835
        %839 = vset.pattern.permute.xlu0 0
        %840 = vperm.xlu0 %839, %v730
        %v841 = vpop.permute.xlu0 %840
        %844 = vset.pattern.permute.xlu0 0
        %845 = vperm.xlu0 %844, %v731
        %v846 = vpop.permute.xlu0 %845
        %849 = vset.pattern.permute.xlu0 0
        %850 = vperm.xlu0 %849, %v732
        %v851 = vpop.permute.xlu0 %850
        %854 = vset.pattern.permute.xlu0 0
        %855 = vperm.xlu0 %854, %v733
        %v856 = vpop.permute.xlu0 %855
        %859 = vset.pattern.permute.xlu0 0
        %860 = vperm.xlu0 %859, %v734
        %v861 = vpop.permute.xlu0 %860
        %864 = vset.pattern.permute.xlu0 0
        %865 = vperm.xlu0 %864, %v735
        %v866 = vpop.permute.xlu0 %865
        %869 = vset.pattern.permute.xlu0 0
        %870 = vperm.xlu0 %869, %v736
        %v871 = vpop.permute.xlu0 %870
        %874 = vset.pattern.permute.xlu0 0
        %875 = vperm.xlu0 %874, %v737
        %v876 = vpop.permute.xlu0 %875
        %879 = vset.pattern.permute.xlu0 0
        %880 = vperm.xlu0 %879, %v738
        %v881 = vpop.permute.xlu0 %880
        %884 = vset.pattern.permute.xlu0 0
        %885 = vperm.xlu0 %884, %v739
        %v886 = vpop.permute.xlu0 %885
        %889 = vset.pattern.permute.xlu0 0
        %890 = vperm.xlu0 %889, %v740
        %v891 = vpop.permute.xlu0 %890
        %894 = vset.pattern.permute.xlu0 0
        %895 = vperm.xlu0 %894, %v741
        %v896 = vpop.permute.xlu0 %895
        %899 = vset.pattern.permute.xlu0 0
        %900 = vperm.xlu0 %899, %v742
        %v901 = vpop.permute.xlu0 %900
        %v935 = vunpack.c.l.b16 %v677
        %v936 = vunpack.c.l.b16 %v678
        %v937 = vunpack.c.l.b16 %v679
        %v938 = vunpack.c.l.b16 %v680
        %v939 = vunpack.c.l.b16 %v681
        %v940 = vunpack.c.l.b16 %v682
        %v941 = vunpack.c.l.b16 %v683
        %v942 = vunpack.c.l.b16 %v684
        %v943 = vunpack.c.l.b16 %v685
        %v944 = vunpack.c.l.b16 %v686
        %v945 = vunpack.c.l.b16 %v687
        %v946 = vunpack.c.l.b16 %v688
        %v947 = vunpack.c.l.b16 %v689
        %v948 = vunpack.c.l.b16 %v690
        %v949 = vunpack.c.l.b16 %v691
        %v950 = vunpack.c.l.b16 %v692
        %v951 = vunpack.c.l.b16 %v693
        %v952 = vunpack.c.l.b16 %v694
        %v953 = vunpack.c.l.b16 %v695
        %v954 = vunpack.c.l.b16 %v696
        %v955 = vunpack.c.l.b16 %v697
        %v956 = vunpack.c.l.b16 %v698
        %v957 = vunpack.c.l.b16 %v699
        %v958 = vunpack.c.l.b16 %v700
        %v959 = vunpack.c.l.b16 %v701
        %v960 = vunpack.c.l.b16 %v702
        %v961 = vunpack.c.l.b16 %v703
        %v962 = vunpack.c.l.b16 %v704
        %v963 = vunpack.c.l.b16 %v705
        %v964 = vunpack.c.l.b16 %v706
        %v965 = vunpack.c.l.b16 %v707
        %v966 = vunpack.c.l.b16 %v708
        %v967 = vpack.c.b16 %v936, %v935
        %v968 = vpack.c.b16 %v938, %v937
        %v969 = vpack.c.b16 %v940, %v939
        %v970 = vpack.c.b16 %v942, %v941
        %v971 = vpack.c.b16 %v944, %v943
        %v972 = vpack.c.b16 %v946, %v945
        %v973 = vpack.c.b16 %v948, %v947
        %v974 = vpack.c.b16 %v950, %v949
        %v975 = vpack.c.b16 %v952, %v951
        %v976 = vpack.c.b16 %v954, %v953
        %v977 = vpack.c.b16 %v956, %v955
        %v978 = vpack.c.b16 %v958, %v957
        %v979 = vpack.c.b16 %v960, %v959
        %v980 = vpack.c.b16 %v962, %v961
        %v981 = vpack.c.b16 %v964, %v963
        %v982 = vpack.c.b16 %v966, %v965
        %vm983 = vcmask 130048
        %v985 = vsel %vm983, %v967, 0
        %v988 = vsel %vm983, %v968, 0
        %v991 = vsel %vm983, %v969, 0
        %v994 = vsel %vm983, %v970, 0
        %v997 = vsel %vm983, %v971, 0
        %v1000 = vsel %vm983, %v972, 0
        %v1003 = vsel %vm983, %v973, 0
        %v1006 = vsel %vm983, %v974, 0
        %v1009 = vsel %vm983, %v975, 0
        %v1012 = vsel %vm983, %v976, 0
        %v1015 = vsel %vm983, %v977, 0
        %v1018 = vsel %vm983, %v978, 0
        %v1021 = vsel %vm983, %v979, 0
        %v1024 = vsel %vm983, %v980, 0
        %v1027 = vsel %vm983, %v981, 0
        %v1030 = vsel %vm983, %v982, 0
        %1032 = vmatpush.bf16.msra.mxu0 0
        %1033 = vmatpush.bf16.msra.mxu0 0
        %1034 = vmatpush.bf16.msra.mxu0 0
        %1035 = vmatpush.bf16.msra.mxu0 0
        %1036 = vmatpush.bf16.msra.mxu0 0
        %1037 = vmatpush.bf16.msra.mxu0 0
        %1038 = vmatpush.bf16.msra.mxu0 0
        %1039 = vmatpush.bf16.msra.mxu0 %v709
        %1040 = vmatmul.bf16.gmra.mxu0 %v985
        %v1041 = vpop.f32.mrf.mxu0
        %v1042 = vadd.f32 %v746, %v1041
        %v1043 = vpop.f32.mrf.mxu0
        %v1044 = vadd.f32 %v751, %v1043
        %1045 = vmatmul.bf16.gmra.mxu0 %v988
        %v1046 = vpop.f32.mrf.mxu0
        %v1047 = vadd.f32 %v756, %v1046
        %v1048 = vpop.f32.mrf.mxu0
        %v1049 = vadd.f32 %v761, %v1048
        %1050 = vmatmul.bf16.gmra.mxu0 %v991
        %v1051 = vpop.f32.mrf.mxu0
        %v1052 = vadd.f32 %v766, %v1051
        %v1053 = vpop.f32.mrf.mxu0
        %v1054 = vadd.f32 %v771, %v1053
        %1055 = vmatmul.bf16.gmra.mxu0 %v994
        %v1056 = vpop.f32.mrf.mxu0
        %v1057 = vadd.f32 %v776, %v1056
        %v1058 = vpop.f32.mrf.mxu0
        %v1059 = vadd.f32 %v781, %v1058
        %1060 = vmatmul.bf16.gmra.mxu0 %v997
        %v1061 = vpop.f32.mrf.mxu0
        %v1062 = vadd.f32 %v786, %v1061
        %v1063 = vpop.f32.mrf.mxu0
        %v1064 = vadd.f32 %v791, %v1063
        %1065 = vmatmul.bf16.gmra.mxu0 %v1000
        %v1066 = vpop.f32.mrf.mxu0
        %v1067 = vadd.f32 %v796, %v1066
        %v1068 = vpop.f32.mrf.mxu0
        %v1069 = vadd.f32 %v801, %v1068
        %1070 = vmatmul.bf16.gmra.mxu0 %v1003
        %v1071 = vpop.f32.mrf.mxu0
        %v1072 = vadd.f32 %v806, %v1071
        %v1073 = vpop.f32.mrf.mxu0
        %v1074 = vadd.f32 %v811, %v1073
        %1075 = vmatmul.bf16.gmra.mxu0 %v1006
        %v1076 = vpop.f32.mrf.mxu0
        %v1077 = vadd.f32 %v816, %v1076
        %v1078 = vpop.f32.mrf.mxu0
        %v1079 = vadd.f32 %v821, %v1078
        %1080 = vmatmul.bf16.gmra.mxu0 %v1009
        %v1081 = vpop.f32.mrf.mxu0
        %v1082 = vadd.f32 %v826, %v1081
        %v1083 = vpop.f32.mrf.mxu0
        %v1084 = vadd.f32 %v831, %v1083
        %1085 = vmatmul.bf16.gmra.mxu0 %v1012
        %v1086 = vpop.f32.mrf.mxu0
        %v1087 = vadd.f32 %v836, %v1086
        %v1088 = vpop.f32.mrf.mxu0
        %v1089 = vadd.f32 %v841, %v1088
        %1090 = vmatmul.bf16.gmra.mxu0 %v1015
        %v1091 = vpop.f32.mrf.mxu0
        %v1092 = vadd.f32 %v846, %v1091
        %v1093 = vpop.f32.mrf.mxu0
        %v1094 = vadd.f32 %v851, %v1093
        %1095 = vmatmul.bf16.gmra.mxu0 %v1018
        %v1096 = vpop.f32.mrf.mxu0
        %v1097 = vadd.f32 %v856, %v1096
        %v1098 = vpop.f32.mrf.mxu0
        %v1099 = vadd.f32 %v861, %v1098
        %1100 = vmatmul.bf16.gmra.mxu0 %v1021
        %v1101 = vpop.f32.mrf.mxu0
        %v1102 = vadd.f32 %v866, %v1101
        %v1103 = vpop.f32.mrf.mxu0
        %v1104 = vadd.f32 %v871, %v1103
        %1105 = vmatmul.bf16.gmra.mxu0 %v1024
        %v1106 = vpop.f32.mrf.mxu0
        %v1107 = vadd.f32 %v876, %v1106
        %v1108 = vpop.f32.mrf.mxu0
        %v1109 = vadd.f32 %v881, %v1108
        %1110 = vmatmul.bf16.gmra.mxu0 %v1027
        %v1111 = vpop.f32.mrf.mxu0
        %v1112 = vadd.f32 %v886, %v1111
        %v1113 = vpop.f32.mrf.mxu0
        %v1114 = vadd.f32 %v891, %v1113
        %1115 = vmatmul.bf16.gmra.mxu0 %v1030
        %v1116 = vpop.f32.mrf.mxu0
        %v1117 = vadd.f32 %v896, %v1116
        %v1118 = vpop.f32.mrf.mxu0
        %v1119 = vadd.f32 %v901, %v1118
        %1120 = vdwg.mxu0
        %1121 = vmatpush.bf16.msra.mxu0 0
        %1122 = vmatpush.bf16.msra.mxu0 0
        %1123 = vmatpush.bf16.msra.mxu0 0
        %1124 = vmatpush.bf16.msra.mxu0 0
        %1125 = vmatpush.bf16.msra.mxu0 0
        %1126 = vmatpush.bf16.msra.mxu0 0
        %1127 = vmatpush.bf16.msra.mxu0 0
        %1128 = vmatpush.bf16.msra.mxu0 %v710
        %1129 = vmatmul.bf16.gmra.mxu0 %v985
        %v1130 = vpop.f32.mrf.mxu0
        %v1131 = vadd.f32 %v746, %v1130
        %v1132 = vpop.f32.mrf.mxu0
        %v1133 = vadd.f32 %v751, %v1132
        %1134 = vmatmul.bf16.gmra.mxu0 %v988
        %v1135 = vpop.f32.mrf.mxu0
        %v1136 = vadd.f32 %v756, %v1135
        %v1137 = vpop.f32.mrf.mxu0
        %v1138 = vadd.f32 %v761, %v1137
        %1139 = vmatmul.bf16.gmra.mxu0 %v991
        %v1140 = vpop.f32.mrf.mxu0
        %v1141 = vadd.f32 %v766, %v1140
        %v1142 = vpop.f32.mrf.mxu0
        %v1143 = vadd.f32 %v771, %v1142
        %1144 = vmatmul.bf16.gmra.mxu0 %v994
        %v1145 = vpop.f32.mrf.mxu0
        %v1146 = vadd.f32 %v776, %v1145
        %v1147 = vpop.f32.mrf.mxu0
        %v1148 = vadd.f32 %v781, %v1147
        %1149 = vmatmul.bf16.gmra.mxu0 %v997
        %v1150 = vpop.f32.mrf.mxu0
        %v1151 = vadd.f32 %v786, %v1150
        %v1152 = vpop.f32.mrf.mxu0
        %v1153 = vadd.f32 %v791, %v1152
        %1154 = vmatmul.bf16.gmra.mxu0 %v1000
        %v1155 = vpop.f32.mrf.mxu0
        %v1156 = vadd.f32 %v796, %v1155
        %v1157 = vpop.f32.mrf.mxu0
        %v1158 = vadd.f32 %v801, %v1157
        %1159 = vmatmul.bf16.gmra.mxu0 %v1003
        %v1160 = vpop.f32.mrf.mxu0
        %v1161 = vadd.f32 %v806, %v1160
        %v1162 = vpop.f32.mrf.mxu0
        %v1163 = vadd.f32 %v811, %v1162
        %1164 = vmatmul.bf16.gmra.mxu0 %v1006
        %v1165 = vpop.f32.mrf.mxu0
        %v1166 = vadd.f32 %v816, %v1165
        %v1167 = vpop.f32.mrf.mxu0
        %v1168 = vadd.f32 %v821, %v1167
        %1169 = vmatmul.bf16.gmra.mxu0 %v1009
        %v1170 = vpop.f32.mrf.mxu0
        %v1171 = vadd.f32 %v826, %v1170
        %v1172 = vpop.f32.mrf.mxu0
        %v1173 = vadd.f32 %v831, %v1172
        %1174 = vmatmul.bf16.gmra.mxu0 %v1012
        %v1175 = vpop.f32.mrf.mxu0
        %v1176 = vadd.f32 %v836, %v1175
        %v1177 = vpop.f32.mrf.mxu0
        %v1178 = vadd.f32 %v841, %v1177
        %1179 = vmatmul.bf16.gmra.mxu0 %v1015
        %v1180 = vpop.f32.mrf.mxu0
        %v1181 = vadd.f32 %v846, %v1180
        %v1182 = vpop.f32.mrf.mxu0
        %v1183 = vadd.f32 %v851, %v1182
        %1184 = vmatmul.bf16.gmra.mxu0 %v1018
        %v1185 = vpop.f32.mrf.mxu0
        %v1186 = vadd.f32 %v856, %v1185
        %v1187 = vpop.f32.mrf.mxu0
        %v1188 = vadd.f32 %v861, %v1187
        %1189 = vmatmul.bf16.gmra.mxu0 %v1021
        %v1190 = vpop.f32.mrf.mxu0
        %v1191 = vadd.f32 %v866, %v1190
        %v1192 = vpop.f32.mrf.mxu0
        %v1193 = vadd.f32 %v871, %v1192
        %1194 = vmatmul.bf16.gmra.mxu0 %v1024
        %v1195 = vpop.f32.mrf.mxu0
        %v1196 = vadd.f32 %v876, %v1195
        %v1197 = vpop.f32.mrf.mxu0
        %v1198 = vadd.f32 %v881, %v1197
        %1199 = vmatmul.bf16.gmra.mxu0 %v1027
        %v1200 = vpop.f32.mrf.mxu0
        %v1201 = vadd.f32 %v886, %v1200
        %v1202 = vpop.f32.mrf.mxu0
        %v1203 = vadd.f32 %v891, %v1202
        %1204 = vmatmul.bf16.gmra.mxu0 %v1030
        %v1205 = vpop.f32.mrf.mxu0
        %v1206 = vadd.f32 %v896, %v1205
        %v1207 = vpop.f32.mrf.mxu0
        %v1208 = vadd.f32 %v901, %v1207
        %1209 = vdwg.mxu0
        %vm1210 = vcmp.gt.f32.partialorder %v1042, 0.0
        %vm1211 = vcmp.gt.f32.partialorder %v1131, 0.0
        %vm1212 = vcmp.gt.f32.partialorder %v1044, 0.0
        %vm1213 = vcmp.gt.f32.partialorder %v1133, 0.0
        %vm1214 = vcmp.gt.f32.partialorder %v1047, 0.0
        %vm1215 = vcmp.gt.f32.partialorder %v1136, 0.0
        %vm1216 = vcmp.gt.f32.partialorder %v1049, 0.0
        %vm1217 = vcmp.gt.f32.partialorder %v1138, 0.0
        %vm1218 = vcmp.gt.f32.partialorder %v1052, 0.0
        %vm1219 = vcmp.gt.f32.partialorder %v1141, 0.0
        %vm1220 = vcmp.gt.f32.partialorder %v1054, 0.0
        %vm1221 = vcmp.gt.f32.partialorder %v1143, 0.0
        %vm1222 = vcmp.gt.f32.partialorder %v1057, 0.0
        %vm1223 = vcmp.gt.f32.partialorder %v1146, 0.0
        %vm1224 = vcmp.gt.f32.partialorder %v1059, 0.0
        %vm1225 = vcmp.gt.f32.partialorder %v1148, 0.0
        %vm1226 = vcmp.gt.f32.partialorder %v1062, 0.0
        %vm1227 = vcmp.gt.f32.partialorder %v1151, 0.0
        %vm1228 = vcmp.gt.f32.partialorder %v1064, 0.0
        %vm1229 = vcmp.gt.f32.partialorder %v1153, 0.0
        %vm1230 = vcmp.gt.f32.partialorder %v1067, 0.0
        %vm1231 = vcmp.gt.f32.partialorder %v1156, 0.0
        %vm1232 = vcmp.gt.f32.partialorder %v1069, 0.0
        %vm1233 = vcmp.gt.f32.partialorder %v1158, 0.0
        %vm1234 = vcmp.gt.f32.partialorder %v1072, 0.0
        %vm1235 = vcmp.gt.f32.partialorder %v1161, 0.0
        %vm1236 = vcmp.gt.f32.partialorder %v1074, 0.0
        %vm1237 = vcmp.gt.f32.partialorder %v1163, 0.0
        %vm1238 = vcmp.gt.f32.partialorder %v1077, 0.0
        %vm1239 = vcmp.gt.f32.partialorder %v1166, 0.0
        %vm1240 = vcmp.gt.f32.partialorder %v1079, 0.0
        %vm1241 = vcmp.gt.f32.partialorder %v1168, 0.0
        %vm1242 = vcmp.gt.f32.partialorder %v1082, 0.0
        %vm1243 = vcmp.gt.f32.partialorder %v1171, 0.0
        %vm1244 = vcmp.gt.f32.partialorder %v1084, 0.0
        %vm1245 = vcmp.gt.f32.partialorder %v1173, 0.0
        %vm1246 = vcmp.gt.f32.partialorder %v1087, 0.0
        %vm1247 = vcmp.gt.f32.partialorder %v1176, 0.0
        %vm1248 = vcmp.gt.f32.partialorder %v1089, 0.0
        %vm1249 = vcmp.gt.f32.partialorder %v1178, 0.0
        %vm1250 = vcmp.gt.f32.partialorder %v1092, 0.0
        %vm1251 = vcmp.gt.f32.partialorder %v1181, 0.0
        %vm1252 = vcmp.gt.f32.partialorder %v1094, 0.0
        %vm1253 = vcmp.gt.f32.partialorder %v1183, 0.0
        %vm1254 = vcmp.gt.f32.partialorder %v1097, 0.0
        %vm1255 = vcmp.gt.f32.partialorder %v1186, 0.0
        %vm1256 = vcmp.gt.f32.partialorder %v1099, 0.0
        %vm1257 = vcmp.gt.f32.partialorder %v1188, 0.0
        %vm1258 = vcmp.gt.f32.partialorder %v1102, 0.0
        %vm1259 = vcmp.gt.f32.partialorder %v1191, 0.0
        %vm1260 = vcmp.gt.f32.partialorder %v1104, 0.0
        %vm1261 = vcmp.gt.f32.partialorder %v1193, 0.0
        %vm1262 = vcmp.gt.f32.partialorder %v1107, 0.0
        %vm1263 = vcmp.gt.f32.partialorder %v1196, 0.0
        %vm1264 = vcmp.gt.f32.partialorder %v1109, 0.0
        %vm1265 = vcmp.gt.f32.partialorder %v1198, 0.0
        %vm1266 = vcmp.gt.f32.partialorder %v1112, 0.0
        %vm1267 = vcmp.gt.f32.partialorder %v1201, 0.0
        %vm1268 = vcmp.gt.f32.partialorder %v1114, 0.0
        %vm1269 = vcmp.gt.f32.partialorder %v1203, 0.0
        %vm1270 = vcmp.gt.f32.partialorder %v1117, 0.0
        %vm1271 = vcmp.gt.f32.partialorder %v1206, 0.0
        %vm1272 = vcmp.gt.f32.partialorder %v1119, 0.0
        %vm1273 = vcmp.gt.f32.partialorder %v1208, 0.0
        %v1274 = vmul.f32 %v1042, 0.1
        %v1275 = vmul.f32 %v1131, 0.1
        %v1276 = vmul.f32 %v1044, 0.1
        %v1277 = vmul.f32 %v1133, 0.1
        %v1278 = vmul.f32 %v1047, 0.1
        %v1279 = vmul.f32 %v1136, 0.1
        %v1280 = vmul.f32 %v1049, 0.1
        %v1281 = vmul.f32 %v1138, 0.1
        %v1282 = vmul.f32 %v1052, 0.1
        %v1283 = vmul.f32 %v1141, 0.1
        %v1284 = vmul.f32 %v1054, 0.1
        %v1285 = vmul.f32 %v1143, 0.1
        %v1286 = vmul.f32 %v1057, 0.1
        %v1287 = vmul.f32 %v1146, 0.1
        %v1288 = vmul.f32 %v1059, 0.1
        %v1289 = vmul.f32 %v1148, 0.1
        %v1290 = vmul.f32 %v1062, 0.1
        %v1291 = vmul.f32 %v1151, 0.1
        %v1292 = vmul.f32 %v1064, 0.1
        %v1293 = vmul.f32 %v1153, 0.1
        %v1294 = vmul.f32 %v1067, 0.1
        %v1295 = vmul.f32 %v1156, 0.1
        %v1296 = vmul.f32 %v1069, 0.1
        %v1297 = vmul.f32 %v1158, 0.1
        %v1298 = vmul.f32 %v1072, 0.1
        %v1299 = vmul.f32 %v1161, 0.1
        %v1300 = vmul.f32 %v1074, 0.1
        %v1301 = vmul.f32 %v1163, 0.1
        %v1302 = vmul.f32 %v1077, 0.1
        %v1303 = vmul.f32 %v1166, 0.1
        %v1304 = vmul.f32 %v1079, 0.1
        %v1305 = vmul.f32 %v1168, 0.1
        %v1306 = vmul.f32 %v1082, 0.1
        %v1307 = vmul.f32 %v1171, 0.1
        %v1308 = vmul.f32 %v1084, 0.1
        %v1309 = vmul.f32 %v1173, 0.1
        %v1310 = vmul.f32 %v1087, 0.1
        %v1311 = vmul.f32 %v1176, 0.1
        %v1312 = vmul.f32 %v1089, 0.1
        %v1313 = vmul.f32 %v1178, 0.1
        %v1314 = vmul.f32 %v1092, 0.1
        %v1315 = vmul.f32 %v1181, 0.1
        %v1316 = vmul.f32 %v1094, 0.1
        %v1317 = vmul.f32 %v1183, 0.1
        %v1318 = vmul.f32 %v1097, 0.1
        %v1319 = vmul.f32 %v1186, 0.1
        %v1320 = vmul.f32 %v1099, 0.1
        %v1321 = vmul.f32 %v1188, 0.1
        %v1322 = vmul.f32 %v1102, 0.1
        %v1323 = vmul.f32 %v1191, 0.1
        %v1324 = vmul.f32 %v1104, 0.1
        %v1325 = vmul.f32 %v1193, 0.1
        %v1326 = vmul.f32 %v1107, 0.1
        %v1327 = vmul.f32 %v1196, 0.1
        %v1328 = vmul.f32 %v1109, 0.1
        %v1329 = vmul.f32 %v1198, 0.1
        %v1330 = vmul.f32 %v1112, 0.1
        %v1331 = vmul.f32 %v1201, 0.1
        %v1332 = vmul.f32 %v1114, 0.1
        %v1333 = vmul.f32 %v1203, 0.1
        %v1334 = vmul.f32 %v1117, 0.1
        %v1335 = vmul.f32 %v1206, 0.1
        %v1336 = vmul.f32 %v1119, 0.1
        %v1337 = vmul.f32 %v1208, 0.1
        %v1338 = vsel %vm1210, %v1042, %v1274
        %v1339 = vsel %vm1211, %v1131, %v1275
        %v1340 = vsel %vm1212, %v1044, %v1276
        %v1341 = vsel %vm1213, %v1133, %v1277
        %v1342 = vsel %vm1214, %v1047, %v1278
        %v1343 = vsel %vm1215, %v1136, %v1279
        %v1344 = vsel %vm1216, %v1049, %v1280
        %v1345 = vsel %vm1217, %v1138, %v1281
        %v1346 = vsel %vm1218, %v1052, %v1282
        %v1347 = vsel %vm1219, %v1141, %v1283
        %v1348 = vsel %vm1220, %v1054, %v1284
        %v1349 = vsel %vm1221, %v1143, %v1285
        %v1350 = vsel %vm1222, %v1057, %v1286
        %v1351 = vsel %vm1223, %v1146, %v1287
        %v1352 = vsel %vm1224, %v1059, %v1288
        %v1353 = vsel %vm1225, %v1148, %v1289
        %v1354 = vsel %vm1226, %v1062, %v1290
        %v1355 = vsel %vm1227, %v1151, %v1291
        %v1356 = vsel %vm1228, %v1064, %v1292
        %v1357 = vsel %vm1229, %v1153, %v1293
        %v1358 = vsel %vm1230, %v1067, %v1294
        %v1359 = vsel %vm1231, %v1156, %v1295
        %v1360 = vsel %vm1232, %v1069, %v1296
        %v1361 = vsel %vm1233, %v1158, %v1297
        %v1362 = vsel %vm1234, %v1072, %v1298
        %v1363 = vsel %vm1235, %v1161, %v1299
        %v1364 = vsel %vm1236, %v1074, %v1300
        %v1365 = vsel %vm1237, %v1163, %v1301
        %v1366 = vsel %vm1238, %v1077, %v1302
        %v1367 = vsel %vm1239, %v1166, %v1303
        %v1368 = vsel %vm1240, %v1079, %v1304
        %v1369 = vsel %vm1241, %v1168, %v1305
        %v1370 = vsel %vm1242, %v1082, %v1306
        %v1371 = vsel %vm1243, %v1171, %v1307
        %v1372 = vsel %vm1244, %v1084, %v1308
        %v1373 = vsel %vm1245, %v1173, %v1309
        %v1374 = vsel %vm1246, %v1087, %v1310
        %v1375 = vsel %vm1247, %v1176, %v1311
        %v1376 = vsel %vm1248, %v1089, %v1312
        %v1377 = vsel %vm1249, %v1178, %v1313
        %v1378 = vsel %vm1250, %v1092, %v1314
        %v1379 = vsel %vm1251, %v1181, %v1315
        %v1380 = vsel %vm1252, %v1094, %v1316
        %v1381 = vsel %vm1253, %v1183, %v1317
        %v1382 = vsel %vm1254, %v1097, %v1318
        %v1383 = vsel %vm1255, %v1186, %v1319
        %v1384 = vsel %vm1256, %v1099, %v1320
        %v1385 = vsel %vm1257, %v1188, %v1321
        %v1386 = vsel %vm1258, %v1102, %v1322
        %v1387 = vsel %vm1259, %v1191, %v1323
        %v1388 = vsel %vm1260, %v1104, %v1324
        %v1389 = vsel %vm1261, %v1193, %v1325
        %v1390 = vsel %vm1262, %v1107, %v1326
        %v1391 = vsel %vm1263, %v1196, %v1327
        %v1392 = vsel %vm1264, %v1109, %v1328
        %v1393 = vsel %vm1265, %v1198, %v1329
        %v1394 = vsel %vm1266, %v1112, %v1330
        %v1395 = vsel %vm1267, %v1201, %v1331
        %v1396 = vsel %vm1268, %v1114, %v1332
        %v1397 = vsel %vm1269, %v1203, %v1333
        %v1398 = vsel %vm1270, %v1117, %v1334
        %v1399 = vsel %vm1271, %v1206, %v1335
        %v1400 = vsel %vm1272, %v1119, %v1336
        %v1401 = vsel %vm1273, %v1208, %v1337
        %v1402 = vld [vmem:[%s632] sm:$0xff]
        %v1403 = vld [vmem:[%s632 + $0x8] sm:$0xff]
        %v1404 = vld [vmem:[%s632 + $0x10] sm:$0xff]
        %v1405 = vld [vmem:[%s632 + $0x18] sm:$0xff]
        %v1406 = vld [vmem:[%s632 + $0x20] sm:$0xff]
        %v1407 = vld [vmem:[%s632 + $0x28] sm:$0xff]
        %v1408 = vld [vmem:[%s632 + $0x30] sm:$0xff]
        %v1409 = vld [vmem:[%s632 + $0x38] sm:$0xff]
        %v1410 = vld [vmem:[%s632 + $0x40] sm:$0xff]
        %v1411 = vld [vmem:[%s632 + $0x48] sm:$0xff]
        %v1412 = vld [vmem:[%s632 + $0x50] sm:$0xff]
        %v1413 = vld [vmem:[%s632 + $0x58] sm:$0xff]
        %v1414 = vld [vmem:[%s632 + $0x60] sm:$0xff]
        %v1415 = vld [vmem:[%s632 + $0x68] sm:$0xff]
        %v1416 = vld [vmem:[%s632 + $0x70] sm:$0xff]
        %v1417 = vld [vmem:[%s632 + $0x78] sm:$0xff]
        %v1418 = vld [vmem:[%s632 + $0x80] sm:$0xff]
        %v1419 = vld [vmem:[%s632 + $0x88] sm:$0xff]
        %v1420 = vld [vmem:[%s632 + $0x90] sm:$0xff]
        %v1421 = vld [vmem:[%s632 + $0x98] sm:$0xff]
        %v1422 = vld [vmem:[%s632 + $0xa0] sm:$0xff]
        %v1423 = vld [vmem:[%s632 + $0xa8] sm:$0xff]
        %v1424 = vld [vmem:[%s632 + $0xb0] sm:$0xff]
        %v1425 = vld [vmem:[%s632 + $0xb8] sm:$0xff]
        %v1426 = vld [vmem:[%s632 + $0xc0] sm:$0xff]
        %v1427 = vld [vmem:[%s632 + $0xc8] sm:$0xff]
        %v1428 = vld [vmem:[%s632 + $0xd0] sm:$0xff]
        %v1429 = vld [vmem:[%s632 + $0xd8] sm:$0xff]
        %v1430 = vld [vmem:[%s632 + $0xe0] sm:$0xff]
        %v1431 = vld [vmem:[%s632 + $0xe8] sm:$0xff]
        %v1432 = vld [vmem:[%s632 + $0xf0] sm:$0xff]
        %v1433 = vld [vmem:[%s632 + $0xf8] sm:$0xff]
        %v1434 = vld [vmem:[%s632 + $0x100] sm:$0xff]
        %v1435 = vld [vmem:[%s632 + $0x108] sm:$0xff]
        %v1436 = vld [vmem:[%s632 + $0x110] sm:$0xff]
        %v1437 = vld [vmem:[%s632 + $0x118] sm:$0xff]
        %v1438 = vld [vmem:[%s632 + $0x120] sm:$0xff]
        %v1439 = vld [vmem:[%s632 + $0x128] sm:$0xff]
        %v1440 = vld [vmem:[%s632 + $0x130] sm:$0xff]
        %v1441 = vld [vmem:[%s632 + $0x138] sm:$0xff]
        %v1442 = vld [vmem:[%s632 + $0x140] sm:$0xff]
        %v1443 = vld [vmem:[%s632 + $0x148] sm:$0xff]
        %v1444 = vld [vmem:[%s632 + $0x150] sm:$0xff]
        %v1445 = vld [vmem:[%s632 + $0x158] sm:$0xff]
        %v1446 = vld [vmem:[%s632 + $0x160] sm:$0xff]
        %v1447 = vld [vmem:[%s632 + $0x168] sm:$0xff]
        %v1448 = vld [vmem:[%s632 + $0x170] sm:$0xff]
        %v1449 = vld [vmem:[%s632 + $0x178] sm:$0xff]
        %v1450 = vld [vmem:[%s632 + $0x180] sm:$0xff]
        %v1451 = vld [vmem:[%s632 + $0x188] sm:$0xff]
        %v1452 = vld [vmem:[%s632 + $0x190] sm:$0xff]
        %v1453 = vld [vmem:[%s632 + $0x198] sm:$0xff]
        %v1454 = vld [vmem:[%s632 + $0x1a0] sm:$0xff]
        %v1455 = vld [vmem:[%s632 + $0x1a8] sm:$0xff]
        %v1456 = vld [vmem:[%s632 + $0x1b0] sm:$0xff]
        %v1457 = vld [vmem:[%s632 + $0x1b8] sm:$0xff]
        %v1458 = vld [vmem:[%s632 + $0x1c0] sm:$0xff]
        %v1459 = vld [vmem:[%s632 + $0x1c8] sm:$0xff]
        %v1460 = vld [vmem:[%s632 + $0x1d0] sm:$0xff]
        %v1461 = vld [vmem:[%s632 + $0x1d8] sm:$0xff]
        %v1462 = vld [vmem:[%s632 + $0x1e0] sm:$0xff]
        %v1463 = vld [vmem:[%s632 + $0x1e8] sm:$0xff]
        %v1464 = vld [vmem:[%s632 + $0x1f0] sm:$0xff]
        %v1465 = vld [vmem:[%s632 + $0x1f8] sm:$0xff]
        %v1466 = vpack.c.bf16 %v1340, %v1338
        %v1467 = vpack.c.bf16 %v1341, %v1339
        %v1468 = vpack.c.bf16 %v1344, %v1342
        %v1469 = vpack.c.bf16 %v1345, %v1343
        %v1470 = vpack.c.bf16 %v1348, %v1346
        %v1471 = vpack.c.bf16 %v1349, %v1347
        %v1472 = vpack.c.bf16 %v1352, %v1350
        %v1473 = vpack.c.bf16 %v1353, %v1351
        %v1474 = vpack.c.bf16 %v1356, %v1354
        %v1475 = vpack.c.bf16 %v1357, %v1355
        %v1476 = vpack.c.bf16 %v1360, %v1358
        %v1477 = vpack.c.bf16 %v1361, %v1359
        %v1478 = vpack.c.bf16 %v1364, %v1362
        %v1479 = vpack.c.bf16 %v1365, %v1363
        %v1480 = vpack.c.bf16 %v1368, %v1366
        %v1481 = vpack.c.bf16 %v1369, %v1367
        %v1482 = vpack.c.bf16 %v1372, %v1370
        %v1483 = vpack.c.bf16 %v1373, %v1371
        %v1484 = vpack.c.bf16 %v1376, %v1374
        %v1485 = vpack.c.bf16 %v1377, %v1375
        %v1486 = vpack.c.bf16 %v1380, %v1378
        %v1487 = vpack.c.bf16 %v1381, %v1379
        %v1488 = vpack.c.bf16 %v1384, %v1382
        %v1489 = vpack.c.bf16 %v1385, %v1383
        %v1490 = vpack.c.bf16 %v1388, %v1386
        %v1491 = vpack.c.bf16 %v1389, %v1387
        %v1492 = vpack.c.bf16 %v1392, %v1390
        %v1493 = vpack.c.bf16 %v1393, %v1391
        %v1494 = vpack.c.bf16 %v1396, %v1394
        %v1495 = vpack.c.bf16 %v1397, %v1395
        %v1496 = vpack.c.bf16 %v1400, %v1398
        %v1497 = vpack.c.bf16 %v1401, %v1399
        %v1498 = vld [vmem:[%s637] sm:$0xff]
        %v1499 = vld [vmem:[%s637 + $0x8] sm:$0xff]
        %v1500 = vld [vmem:[%s637 + $0x10] sm:$0xff]
        %v1501 = vld [vmem:[%s637 + $0x18] sm:$0xff]
        %v1502 = vld [vmem:[%s637 + $0x20] sm:$0xff]
        %v1503 = vld [vmem:[%s637 + $0x28] sm:$0xff]
        %v1504 = vld [vmem:[%s637 + $0x30] sm:$0xff]
        %v1505 = vld [vmem:[%s637 + $0x38] sm:$0xff]
        %v1506 = vld [vmem:[%s637 + $0x40] sm:$0xff]
        %v1507 = vld [vmem:[%s637 + $0x48] sm:$0xff]
        %v1508 = vld [vmem:[%s637 + $0x50] sm:$0xff]
        %v1509 = vld [vmem:[%s637 + $0x58] sm:$0xff]
        %v1510 = vld [vmem:[%s637 + $0x60] sm:$0xff]
        %v1511 = vld [vmem:[%s637 + $0x68] sm:$0xff]
        %v1512 = vld [vmem:[%s637 + $0x70] sm:$0xff]
        %v1513 = vld [vmem:[%s637 + $0x78] sm:$0xff]
        %v1514 = vld [vmem:[%s637 + $0x80] sm:$0xff]
        %v1515 = vld [vmem:[%s637 + $0x88] sm:$0xff]
        %v1516 = vld [vmem:[%s637 + $0x90] sm:$0xff]
        %v1517 = vld [vmem:[%s637 + $0x98] sm:$0xff]
        %v1518 = vld [vmem:[%s637 + $0xa0] sm:$0xff]
        %v1519 = vld [vmem:[%s637 + $0xa8] sm:$0xff]
        %v1520 = vld [vmem:[%s637 + $0xb0] sm:$0xff]
        %v1521 = vld [vmem:[%s637 + $0xb8] sm:$0xff]
        %v1522 = vld [vmem:[%s637 + $0xc0] sm:$0xff]
        %v1523 = vld [vmem:[%s637 + $0xc8] sm:$0xff]
        %v1524 = vld [vmem:[%s637 + $0xd0] sm:$0xff]
        %v1525 = vld [vmem:[%s637 + $0xd8] sm:$0xff]
        %v1526 = vld [vmem:[%s637 + $0xe0] sm:$0xff]
        %v1527 = vld [vmem:[%s637 + $0xe8] sm:$0xff]
        %v1528 = vld [vmem:[%s637 + $0xf0] sm:$0xff]
        %v1529 = vld [vmem:[%s637 + $0xf8] sm:$0xff]
        %v1530 = vld [vmem:[%s637 + $0x100] sm:$0xff]
        %v1531 = vld [vmem:[%s637 + $0x108] sm:$0xff]
        %v1532 = vld [vmem:[%s637 + $0x110] sm:$0xff]
        %v1533 = vld [vmem:[%s637 + $0x118] sm:$0xff]
        %v1534 = vld [vmem:[%s637 + $0x120] sm:$0xff]
        %v1535 = vld [vmem:[%s637 + $0x128] sm:$0xff]
        %v1536 = vld [vmem:[%s637 + $0x130] sm:$0xff]
        %v1537 = vld [vmem:[%s637 + $0x138] sm:$0xff]
        %v1538 = vld [vmem:[%s637 + $0x140] sm:$0xff]
        %v1539 = vld [vmem:[%s637 + $0x148] sm:$0xff]
        %v1540 = vld [vmem:[%s637 + $0x150] sm:$0xff]
        %v1541 = vld [vmem:[%s637 + $0x158] sm:$0xff]
        %v1542 = vld [vmem:[%s637 + $0x160] sm:$0xff]
        %v1543 = vld [vmem:[%s637 + $0x168] sm:$0xff]
        %v1544 = vld [vmem:[%s637 + $0x170] sm:$0xff]
        %v1545 = vld [vmem:[%s637 + $0x178] sm:$0xff]
        %v1546 = vld [vmem:[%s637 + $0x180] sm:$0xff]
        %v1547 = vld [vmem:[%s637 + $0x188] sm:$0xff]
        %v1548 = vld [vmem:[%s637 + $0x190] sm:$0xff]
        %v1549 = vld [vmem:[%s637 + $0x198] sm:$0xff]
        %v1550 = vld [vmem:[%s637 + $0x1a0] sm:$0xff]
        %v1551 = vld [vmem:[%s637 + $0x1a8] sm:$0xff]
        %v1552 = vld [vmem:[%s637 + $0x1b0] sm:$0xff]
        %v1553 = vld [vmem:[%s637 + $0x1b8] sm:$0xff]
        %v1554 = vld [vmem:[%s637 + $0x1c0] sm:$0xff]
        %v1555 = vld [vmem:[%s637 + $0x1c8] sm:$0xff]
        %v1556 = vld [vmem:[%s637 + $0x1d0] sm:$0xff]
        %v1557 = vld [vmem:[%s637 + $0x1d8] sm:$0xff]
        %v1558 = vld [vmem:[%s637 + $0x1e0] sm:$0xff]
        %v1559 = vld [vmem:[%s637 + $0x1e8] sm:$0xff]
        %v1560 = vld [vmem:[%s637 + $0x1f0] sm:$0xff]
        %v1561 = vld [vmem:[%s637 + $0x1f8] sm:$0xff]
        %1563 = vset.pattern.permute.xlu0 0
        %1564 = vperm.xlu0 %1563, %v1498
        %v1565 = vpop.permute.xlu0 %1564
        %1568 = vset.pattern.permute.xlu0 0
        %1569 = vperm.xlu0 %1568, %v1499
        %v1570 = vpop.permute.xlu0 %1569
        %1573 = vset.pattern.permute.xlu0 0
        %1574 = vperm.xlu0 %1573, %v1500
        %v1575 = vpop.permute.xlu0 %1574
        %1578 = vset.pattern.permute.xlu0 0
        %1579 = vperm.xlu0 %1578, %v1501
        %v1580 = vpop.permute.xlu0 %1579
        %1583 = vset.pattern.permute.xlu0 0
        %1584 = vperm.xlu0 %1583, %v1502
        %v1585 = vpop.permute.xlu0 %1584
        %1588 = vset.pattern.permute.xlu0 0
        %1589 = vperm.xlu0 %1588, %v1503
        %v1590 = vpop.permute.xlu0 %1589
        %1593 = vset.pattern.permute.xlu0 0
        %1594 = vperm.xlu0 %1593, %v1504
        %v1595 = vpop.permute.xlu0 %1594
        %1598 = vset.pattern.permute.xlu0 0
        %1599 = vperm.xlu0 %1598, %v1505
        %v1600 = vpop.permute.xlu0 %1599
        %1603 = vset.pattern.permute.xlu0 0
        %1604 = vperm.xlu0 %1603, %v1506
        %v1605 = vpop.permute.xlu0 %1604
        %1608 = vset.pattern.permute.xlu0 0
        %1609 = vperm.xlu0 %1608, %v1507
        %v1610 = vpop.permute.xlu0 %1609
        %1613 = vset.pattern.permute.xlu0 0
        %1614 = vperm.xlu0 %1613, %v1508
        %v1615 = vpop.permute.xlu0 %1614
        %1618 = vset.pattern.permute.xlu0 0
        %1619 = vperm.xlu0 %1618, %v1509
        %v1620 = vpop.permute.xlu0 %1619
        %1623 = vset.pattern.permute.xlu0 0
        %1624 = vperm.xlu0 %1623, %v1510
        %v1625 = vpop.permute.xlu0 %1624
        %1628 = vset.pattern.permute.xlu0 0
        %1629 = vperm.xlu0 %1628, %v1511
        %v1630 = vpop.permute.xlu0 %1629
        %1633 = vset.pattern.permute.xlu0 0
        %1634 = vperm.xlu0 %1633, %v1512
        %v1635 = vpop.permute.xlu0 %1634
        %1638 = vset.pattern.permute.xlu0 0
        %1639 = vperm.xlu0 %1638, %v1513
        %v1640 = vpop.permute.xlu0 %1639
        %1643 = vset.pattern.permute.xlu0 0
        %1644 = vperm.xlu0 %1643, %v1514
        %v1645 = vpop.permute.xlu0 %1644
        %1648 = vset.pattern.permute.xlu0 0
        %1649 = vperm.xlu0 %1648, %v1515
        %v1650 = vpop.permute.xlu0 %1649
        %1653 = vset.pattern.permute.xlu0 0
        %1654 = vperm.xlu0 %1653, %v1516
        %v1655 = vpop.permute.xlu0 %1654
        %1658 = vset.pattern.permute.xlu0 0
        %1659 = vperm.xlu0 %1658, %v1517
        %v1660 = vpop.permute.xlu0 %1659
        %1663 = vset.pattern.permute.xlu0 0
        %1664 = vperm.xlu0 %1663, %v1518
        %v1665 = vpop.permute.xlu0 %1664
        %1668 = vset.pattern.permute.xlu0 0
        %1669 = vperm.xlu0 %1668, %v1519
        %v1670 = vpop.permute.xlu0 %1669
        %1673 = vset.pattern.permute.xlu0 0
        %1674 = vperm.xlu0 %1673, %v1520
        %v1675 = vpop.permute.xlu0 %1674
        %1678 = vset.pattern.permute.xlu0 0
        %1679 = vperm.xlu0 %1678, %v1521
        %v1680 = vpop.permute.xlu0 %1679
        %1683 = vset.pattern.permute.xlu0 0
        %1684 = vperm.xlu0 %1683, %v1522
        %v1685 = vpop.permute.xlu0 %1684
        %1688 = vset.pattern.permute.xlu0 0
        %1689 = vperm.xlu0 %1688, %v1523
        %v1690 = vpop.permute.xlu0 %1689
        %1693 = vset.pattern.permute.xlu0 0
        %1694 = vperm.xlu0 %1693, %v1524
        %v1695 = vpop.permute.xlu0 %1694
        %1698 = vset.pattern.permute.xlu0 0
        %1699 = vperm.xlu0 %1698, %v1525
        %v1700 = vpop.permute.xlu0 %1699
        %1703 = vset.pattern.permute.xlu0 0
        %1704 = vperm.xlu0 %1703, %v1526
        %v1705 = vpop.permute.xlu0 %1704
        %1708 = vset.pattern.permute.xlu0 0
        %1709 = vperm.xlu0 %1708, %v1527
        %v1710 = vpop.permute.xlu0 %1709
        %1713 = vset.pattern.permute.xlu0 0
        %1714 = vperm.xlu0 %1713, %v1528
        %v1715 = vpop.permute.xlu0 %1714
        %1718 = vset.pattern.permute.xlu0 0
        %1719 = vperm.xlu0 %1718, %v1529
        %v1720 = vpop.permute.xlu0 %1719
        %1723 = vset.pattern.permute.xlu0 0
        %1724 = vperm.xlu0 %1723, %v1530
        %v1725 = vpop.permute.xlu0 %1724
        %1728 = vset.pattern.permute.xlu0 0
        %1729 = vperm.xlu0 %1728, %v1531
        %v1730 = vpop.permute.xlu0 %1729
        %1733 = vset.pattern.permute.xlu0 0
        %1734 = vperm.xlu0 %1733, %v1532
        %v1735 = vpop.permute.xlu0 %1734
        %1738 = vset.pattern.permute.xlu0 0
        %1739 = vperm.xlu0 %1738, %v1533
        %v1740 = vpop.permute.xlu0 %1739
        %1743 = vset.pattern.permute.xlu0 0
        %1744 = vperm.xlu0 %1743, %v1534
        %v1745 = vpop.permute.xlu0 %1744
        %1748 = vset.pattern.permute.xlu0 0
        %1749 = vperm.xlu0 %1748, %v1535
        %v1750 = vpop.permute.xlu0 %1749
        %1753 = vset.pattern.permute.xlu0 0
        %1754 = vperm.xlu0 %1753, %v1536
        %v1755 = vpop.permute.xlu0 %1754
        %1758 = vset.pattern.permute.xlu0 0
        %1759 = vperm.xlu0 %1758, %v1537
        %v1760 = vpop.permute.xlu0 %1759
        %1763 = vset.pattern.permute.xlu0 0
        %1764 = vperm.xlu0 %1763, %v1538
        %v1765 = vpop.permute.xlu0 %1764
        %1768 = vset.pattern.permute.xlu0 0
        %1769 = vperm.xlu0 %1768, %v1539
        %v1770 = vpop.permute.xlu0 %1769
        %1773 = vset.pattern.permute.xlu0 0
        %1774 = vperm.xlu0 %1773, %v1540
        %v1775 = vpop.permute.xlu0 %1774
        %1778 = vset.pattern.permute.xlu0 0
        %1779 = vperm.xlu0 %1778, %v1541
        %v1780 = vpop.permute.xlu0 %1779
        %1783 = vset.pattern.permute.xlu0 0
        %1784 = vperm.xlu0 %1783, %v1542
        %v1785 = vpop.permute.xlu0 %1784
        %1788 = vset.pattern.permute.xlu0 0
        %1789 = vperm.xlu0 %1788, %v1543
        %v1790 = vpop.permute.xlu0 %1789
        %1793 = vset.pattern.permute.xlu0 0
        %1794 = vperm.xlu0 %1793, %v1544
        %v1795 = vpop.permute.xlu0 %1794
        %1798 = vset.pattern.permute.xlu0 0
        %1799 = vperm.xlu0 %1798, %v1545
        %v1800 = vpop.permute.xlu0 %1799
        %1803 = vset.pattern.permute.xlu0 0
        %1804 = vperm.xlu0 %1803, %v1546
        %v1805 = vpop.permute.xlu0 %1804
        %1808 = vset.pattern.permute.xlu0 0
        %1809 = vperm.xlu0 %1808, %v1547
        %v1810 = vpop.permute.xlu0 %1809
        %1813 = vset.pattern.permute.xlu0 0
        %1814 = vperm.xlu0 %1813, %v1548
        %v1815 = vpop.permute.xlu0 %1814
        %1818 = vset.pattern.permute.xlu0 0
        %1819 = vperm.xlu0 %1818, %v1549
        %v1820 = vpop.permute.xlu0 %1819
        %1823 = vset.pattern.permute.xlu0 0
        %1824 = vperm.xlu0 %1823, %v1550
        %v1825 = vpop.permute.xlu0 %1824
        %1828 = vset.pattern.permute.xlu0 0
        %1829 = vperm.xlu0 %1828, %v1551
        %v1830 = vpop.permute.xlu0 %1829
        %1833 = vset.pattern.permute.xlu0 0
        %1834 = vperm.xlu0 %1833, %v1552
        %v1835 = vpop.permute.xlu0 %1834
        %1838 = vset.pattern.permute.xlu0 0
        %1839 = vperm.xlu0 %1838, %v1553
        %v1840 = vpop.permute.xlu0 %1839
        %1843 = vset.pattern.permute.xlu0 0
        %1844 = vperm.xlu0 %1843, %v1554
        %v1845 = vpop.permute.xlu0 %1844
        %1848 = vset.pattern.permute.xlu0 0
        %1849 = vperm.xlu0 %1848, %v1555
        %v1850 = vpop.permute.xlu0 %1849
        %1853 = vset.pattern.permute.xlu0 0
        %1854 = vperm.xlu0 %1853, %v1556
        %v1855 = vpop.permute.xlu0 %1854
        %1858 = vset.pattern.permute.xlu0 0
        %1859 = vperm.xlu0 %1858, %v1557
        %v1860 = vpop.permute.xlu0 %1859
        %1863 = vset.pattern.permute.xlu0 0
        %1864 = vperm.xlu0 %1863, %v1558
        %v1865 = vpop.permute.xlu0 %1864
        %1868 = vset.pattern.permute.xlu0 0
        %1869 = vperm.xlu0 %1868, %v1559
        %v1870 = vpop.permute.xlu0 %1869
        %1873 = vset.pattern.permute.xlu0 0
        %1874 = vperm.xlu0 %1873, %v1560
        %v1875 = vpop.permute.xlu0 %1874
        %1878 = vset.pattern.permute.xlu0 0
        %1879 = vperm.xlu0 %1878, %v1561
        %v1880 = vpop.permute.xlu0 %1879
        %v1946 = vunpack.c.l.b16 %v1402
        %v1947 = vunpack.c.h.b16 %v1402
        %v1948 = vunpack.c.l.b16 %v1403
        %v1949 = vunpack.c.h.b16 %v1403
        %v1950 = vunpack.c.l.b16 %v1404
        %v1951 = vunpack.c.h.b16 %v1404
        %v1952 = vunpack.c.l.b16 %v1405
        %v1953 = vunpack.c.h.b16 %v1405
        %v1954 = vunpack.c.l.b16 %v1406
        %v1955 = vunpack.c.h.b16 %v1406
        %v1956 = vunpack.c.l.b16 %v1407
        %v1957 = vunpack.c.h.b16 %v1407
        %v1958 = vunpack.c.l.b16 %v1408
        %v1959 = vunpack.c.h.b16 %v1408
        %v1960 = vunpack.c.l.b16 %v1409
        %v1961 = vunpack.c.h.b16 %v1409
        %v1962 = vunpack.c.l.b16 %v1410
        %v1963 = vunpack.c.h.b16 %v1410
        %v1964 = vunpack.c.l.b16 %v1411
        %v1965 = vunpack.c.h.b16 %v1411
        %v1966 = vunpack.c.l.b16 %v1412
        %v1967 = vunpack.c.h.b16 %v1412
        %v1968 = vunpack.c.l.b16 %v1413
        %v1969 = vunpack.c.h.b16 %v1413
        %v1970 = vunpack.c.l.b16 %v1414
        %v1971 = vunpack.c.h.b16 %v1414
        %v1972 = vunpack.c.l.b16 %v1415
        %v1973 = vunpack.c.h.b16 %v1415
        %v1974 = vunpack.c.l.b16 %v1416
        %v1975 = vunpack.c.h.b16 %v1416
        %v1976 = vunpack.c.l.b16 %v1417
        %v1977 = vunpack.c.h.b16 %v1417
        %v1978 = vunpack.c.l.b16 %v1418
        %v1979 = vunpack.c.h.b16 %v1418
        %v1980 = vunpack.c.l.b16 %v1419
        %v1981 = vunpack.c.h.b16 %v1419
        %v1982 = vunpack.c.l.b16 %v1420
        %v1983 = vunpack.c.h.b16 %v1420
        %v1984 = vunpack.c.l.b16 %v1421
        %v1985 = vunpack.c.h.b16 %v1421
        %v1986 = vunpack.c.l.b16 %v1422
        %v1987 = vunpack.c.h.b16 %v1422
        %v1988 = vunpack.c.l.b16 %v1423
        %v1989 = vunpack.c.h.b16 %v1423
        %v1990 = vunpack.c.l.b16 %v1424
        %v1991 = vunpack.c.h.b16 %v1424
        %v1992 = vunpack.c.l.b16 %v1425
        %v1993 = vunpack.c.h.b16 %v1425
        %v1994 = vunpack.c.l.b16 %v1426
        %v1995 = vunpack.c.h.b16 %v1426
        %v1996 = vunpack.c.l.b16 %v1427
        %v1997 = vunpack.c.h.b16 %v1427
        %v1998 = vunpack.c.l.b16 %v1428
        %v1999 = vunpack.c.h.b16 %v1428
        %v2000 = vunpack.c.l.b16 %v1429
        %v2001 = vunpack.c.h.b16 %v1429
        %v2002 = vunpack.c.l.b16 %v1430
        %v2003 = vunpack.c.h.b16 %v1430
        %v2004 = vunpack.c.l.b16 %v1431
        %v2005 = vunpack.c.h.b16 %v1431
        %v2006 = vunpack.c.l.b16 %v1432
        %v2007 = vunpack.c.h.b16 %v1432
        %v2008 = vunpack.c.l.b16 %v1433
        %v2009 = vunpack.c.h.b16 %v1433
        %v2010 = vunpack.c.l.b16 %v1434
        %v2011 = vunpack.c.h.b16 %v1434
        %v2012 = vunpack.c.l.b16 %v1435
        %v2013 = vunpack.c.h.b16 %v1435
        %v2014 = vunpack.c.l.b16 %v1436
        %v2015 = vunpack.c.h.b16 %v1436
        %v2016 = vunpack.c.l.b16 %v1437
        %v2017 = vunpack.c.h.b16 %v1437
        %v2018 = vunpack.c.l.b16 %v1438
        %v2019 = vunpack.c.h.b16 %v1438
        %v2020 = vunpack.c.l.b16 %v1439
        %v2021 = vunpack.c.h.b16 %v1439
        %v2022 = vunpack.c.l.b16 %v1440
        %v2023 = vunpack.c.h.b16 %v1440
        %v2024 = vunpack.c.l.b16 %v1441
        %v2025 = vunpack.c.h.b16 %v1441
        %v2026 = vunpack.c.l.b16 %v1442
        %v2027 = vunpack.c.h.b16 %v1442
        %v2028 = vunpack.c.l.b16 %v1443
        %v2029 = vunpack.c.h.b16 %v1443
        %v2030 = vunpack.c.l.b16 %v1444
        %v2031 = vunpack.c.h.b16 %v1444
        %v2032 = vunpack.c.l.b16 %v1445
        %v2033 = vunpack.c.h.b16 %v1445
        %v2034 = vunpack.c.l.b16 %v1446
        %v2035 = vunpack.c.h.b16 %v1446
        %v2036 = vunpack.c.l.b16 %v1447
        %v2037 = vunpack.c.h.b16 %v1447
        %v2038 = vunpack.c.l.b16 %v1448
        %v2039 = vunpack.c.h.b16 %v1448
        %v2040 = vunpack.c.l.b16 %v1449
        %v2041 = vunpack.c.h.b16 %v1449
        %v2042 = vunpack.c.l.b16 %v1450
        %v2043 = vunpack.c.h.b16 %v1450
        %v2044 = vunpack.c.l.b16 %v1451
        %v2045 = vunpack.c.h.b16 %v1451
        %v2046 = vunpack.c.l.b16 %v1452
        %v2047 = vunpack.c.h.b16 %v1452
        %v2048 = vunpack.c.l.b16 %v1453
        %v2049 = vunpack.c.h.b16 %v1453
        %v2050 = vunpack.c.l.b16 %v1454
        %v2051 = vunpack.c.h.b16 %v1454
        %v2052 = vunpack.c.l.b16 %v1455
        %v2053 = vunpack.c.h.b16 %v1455
        %v2054 = vunpack.c.l.b16 %v1456
        %v2055 = vunpack.c.h.b16 %v1456
        %v2056 = vunpack.c.l.b16 %v1457
        %v2057 = vunpack.c.h.b16 %v1457
        %v2058 = vunpack.c.l.b16 %v1458
        %v2059 = vunpack.c.h.b16 %v1458
        %v2060 = vunpack.c.l.b16 %v1459
        %v2061 = vunpack.c.h.b16 %v1459
        %v2062 = vunpack.c.l.b16 %v1460
        %v2063 = vunpack.c.h.b16 %v1460
        %v2064 = vunpack.c.l.b16 %v1461
        %v2065 = vunpack.c.h.b16 %v1461
        %v2066 = vunpack.c.l.b16 %v1462
        %v2067 = vunpack.c.h.b16 %v1462
        %v2068 = vunpack.c.l.b16 %v1463
        %v2069 = vunpack.c.h.b16 %v1463
        %v2070 = vunpack.c.l.b16 %v1464
        %v2071 = vunpack.c.h.b16 %v1464
        %v2072 = vunpack.c.l.b16 %v1465
        %v2073 = vunpack.c.h.b16 %v1465
        %v2074 = vpack.c.b16 %v1948, %v1946
        %v2075 = vpack.c.b16 %v1949, %v1947
        %v2076 = vpack.c.b16 %v1952, %v1950
        %v2077 = vpack.c.b16 %v1953, %v1951
        %v2078 = vpack.c.b16 %v1956, %v1954
        %v2079 = vpack.c.b16 %v1957, %v1955
        %v2080 = vpack.c.b16 %v1960, %v1958
        %v2081 = vpack.c.b16 %v1961, %v1959
        %v2082 = vpack.c.b16 %v1964, %v1962
        %v2083 = vpack.c.b16 %v1965, %v1963
        %v2084 = vpack.c.b16 %v1968, %v1966
        %v2085 = vpack.c.b16 %v1969, %v1967
        %v2086 = vpack.c.b16 %v1972, %v1970
        %v2087 = vpack.c.b16 %v1973, %v1971
        %v2088 = vpack.c.b16 %v1976, %v1974
        %v2089 = vpack.c.b16 %v1977, %v1975
        %v2090 = vpack.c.b16 %v1980, %v1978
        %v2091 = vpack.c.b16 %v1981, %v1979
        %v2092 = vpack.c.b16 %v1984, %v1982
        %v2093 = vpack.c.b16 %v1985, %v1983
        %v2094 = vpack.c.b16 %v1988, %v1986
        %v2095 = vpack.c.b16 %v1989, %v1987
        %v2096 = vpack.c.b16 %v1992, %v1990
        %v2097 = vpack.c.b16 %v1993, %v1991
        %v2098 = vpack.c.b16 %v1996, %v1994
        %v2099 = vpack.c.b16 %v1997, %v1995
        %v2100 = vpack.c.b16 %v2000, %v1998
        %v2101 = vpack.c.b16 %v2001, %v1999
        %v2102 = vpack.c.b16 %v2004, %v2002
        %v2103 = vpack.c.b16 %v2005, %v2003
        %v2104 = vpack.c.b16 %v2008, %v2006
        %v2105 = vpack.c.b16 %v2009, %v2007
        %v2106 = vpack.c.b16 %v2012, %v2010
        %v2107 = vpack.c.b16 %v2013, %v2011
        %v2108 = vpack.c.b16 %v2016, %v2014
        %v2109 = vpack.c.b16 %v2017, %v2015
        %v2110 = vpack.c.b16 %v2020, %v2018
        %v2111 = vpack.c.b16 %v2021, %v2019
        %v2112 = vpack.c.b16 %v2024, %v2022
        %v2113 = vpack.c.b16 %v2025, %v2023
        %v2114 = vpack.c.b16 %v2028, %v2026
        %v2115 = vpack.c.b16 %v2029, %v2027
        %v2116 = vpack.c.b16 %v2032, %v2030
        %v2117 = vpack.c.b16 %v2033, %v2031
        %v2118 = vpack.c.b16 %v2036, %v2034
        %v2119 = vpack.c.b16 %v2037, %v2035
        %v2120 = vpack.c.b16 %v2040, %v2038
        %v2121 = vpack.c.b16 %v2041, %v2039
        %v2122 = vpack.c.b16 %v2044, %v2042
        %v2123 = vpack.c.b16 %v2045, %v2043
        %v2124 = vpack.c.b16 %v2048, %v2046
        %v2125 = vpack.c.b16 %v2049, %v2047
        %v2126 = vpack.c.b16 %v2052, %v2050
        %v2127 = vpack.c.b16 %v2053, %v2051
        %v2128 = vpack.c.b16 %v2056, %v2054
        %v2129 = vpack.c.b16 %v2057, %v2055
        %v2130 = vpack.c.b16 %v2060, %v2058
        %v2131 = vpack.c.b16 %v2061, %v2059
        %v2132 = vpack.c.b16 %v2064, %v2062
        %v2133 = vpack.c.b16 %v2065, %v2063
        %v2134 = vpack.c.b16 %v2068, %v2066
        %v2135 = vpack.c.b16 %v2069, %v2067
        %v2136 = vpack.c.b16 %v2072, %v2070
        %v2137 = vpack.c.b16 %v2073, %v2071
        %2202 = vmatpush.bf16.msra.mxu0 %v1480
        %2203 = vmatpush.bf16.msra.mxu0 %v1478
        %2204 = vmatpush.bf16.msra.mxu0 %v1476
        %2205 = vmatpush.bf16.msra.mxu0 %v1474
        %2206 = vmatpush.bf16.msra.mxu0 %v1472
        %2207 = vmatpush.bf16.msra.mxu0 %v1470
        %2208 = vmatpush.bf16.msra.mxu0 %v1468
        %2209 = vmatpush.bf16.msra.mxu0 %v1466
        %2210 = vmatmul.bf16.gmra.mxu0 %v2074
        %v2211 = vpop.f32.mrf.mxu0
        %v2212 = vadd.f32 %v1565, %v2211
        %v2213 = vpop.f32.mrf.mxu0
        %v2214 = vadd.f32 %v1570, %v2213
        %2215 = vmatmul.bf16.gmra.mxu0 %v2076
        %v2216 = vpop.f32.mrf.mxu0
        %v2217 = vadd.f32 %v1575, %v2216
        %v2218 = vpop.f32.mrf.mxu0
        %v2219 = vadd.f32 %v1580, %v2218
        %2220 = vmatmul.bf16.gmra.mxu0 %v2078
        %v2221 = vpop.f32.mrf.mxu0
        %v2222 = vadd.f32 %v1585, %v2221
        %v2223 = vpop.f32.mrf.mxu0
        %v2224 = vadd.f32 %v1590, %v2223
        %2225 = vmatmul.bf16.gmra.mxu0 %v2080
        %v2226 = vpop.f32.mrf.mxu0
        %v2227 = vadd.f32 %v1595, %v2226
        %v2228 = vpop.f32.mrf.mxu0
        %v2229 = vadd.f32 %v1600, %v2228
        %2230 = vmatmul.bf16.gmra.mxu0 %v2082
        %v2231 = vpop.f32.mrf.mxu0
        %v2232 = vadd.f32 %v1605, %v2231
        %v2233 = vpop.f32.mrf.mxu0
        %v2234 = vadd.f32 %v1610, %v2233
        %2235 = vmatmul.bf16.gmra.mxu0 %v2084
        %v2236 = vpop.f32.mrf.mxu0
        %v2237 = vadd.f32 %v1615, %v2236
        %v2238 = vpop.f32.mrf.mxu0
        %v2239 = vadd.f32 %v1620, %v2238
        %2240 = vmatmul.bf16.gmra.mxu0 %v2086
        %v2241 = vpop.f32.mrf.mxu0
        %v2242 = vadd.f32 %v1625, %v2241
        %v2243 = vpop.f32.mrf.mxu0
        %v2244 = vadd.f32 %v1630, %v2243
        %2245 = vmatmul.bf16.gmra.mxu0 %v2088
        %v2246 = vpop.f32.mrf.mxu0
        %v2247 = vadd.f32 %v1635, %v2246
        %v2248 = vpop.f32.mrf.mxu0
        %v2249 = vadd.f32 %v1640, %v2248
        %2250 = vmatmul.bf16.gmra.mxu0 %v2090
        %v2251 = vpop.f32.mrf.mxu0
        %v2252 = vadd.f32 %v1645, %v2251
        %v2253 = vpop.f32.mrf.mxu0
        %v2254 = vadd.f32 %v1650, %v2253
        %2255 = vmatmul.bf16.gmra.mxu0 %v2092
        %v2256 = vpop.f32.mrf.mxu0
        %v2257 = vadd.f32 %v1655, %v2256
        %v2258 = vpop.f32.mrf.mxu0
        %v2259 = vadd.f32 %v1660, %v2258
        %2260 = vmatmul.bf16.gmra.mxu0 %v2094
        %v2261 = vpop.f32.mrf.mxu0
        %v2262 = vadd.f32 %v1665, %v2261
        %v2263 = vpop.f32.mrf.mxu0
        %v2264 = vadd.f32 %v1670, %v2263
        %2265 = vmatmul.bf16.gmra.mxu0 %v2096
        %v2266 = vpop.f32.mrf.mxu0
        %v2267 = vadd.f32 %v1675, %v2266
        %v2268 = vpop.f32.mrf.mxu0
        %v2269 = vadd.f32 %v1680, %v2268
        %2270 = vmatmul.bf16.gmra.mxu0 %v2098
        %v2271 = vpop.f32.mrf.mxu0
        %v2272 = vadd.f32 %v1685, %v2271
        %v2273 = vpop.f32.mrf.mxu0
        %v2274 = vadd.f32 %v1690, %v2273
        %2275 = vmatmul.bf16.gmra.mxu0 %v2100
        %v2276 = vpop.f32.mrf.mxu0
        %v2277 = vadd.f32 %v1695, %v2276
        %v2278 = vpop.f32.mrf.mxu0
        %v2279 = vadd.f32 %v1700, %v2278
        %2280 = vmatmul.bf16.gmra.mxu0 %v2102
        %v2281 = vpop.f32.mrf.mxu0
        %v2282 = vadd.f32 %v1705, %v2281
        %v2283 = vpop.f32.mrf.mxu0
        %v2284 = vadd.f32 %v1710, %v2283
        %2285 = vmatmul.bf16.gmra.mxu0 %v2104
        %v2286 = vpop.f32.mrf.mxu0
        %v2287 = vadd.f32 %v1715, %v2286
        %v2288 = vpop.f32.mrf.mxu0
        %v2289 = vadd.f32 %v1720, %v2288
        %2290 = vmatmul.bf16.gmra.mxu0 %v2106
        %v2291 = vpop.f32.mrf.mxu0
        %v2292 = vadd.f32 %v1725, %v2291
        %v2293 = vpop.f32.mrf.mxu0
        %v2294 = vadd.f32 %v1730, %v2293
        %2295 = vmatmul.bf16.gmra.mxu0 %v2108
        %v2296 = vpop.f32.mrf.mxu0
        %v2297 = vadd.f32 %v1735, %v2296
        %v2298 = vpop.f32.mrf.mxu0
        %v2299 = vadd.f32 %v1740, %v2298
        %2300 = vmatmul.bf16.gmra.mxu0 %v2110
        %v2301 = vpop.f32.mrf.mxu0
        %v2302 = vadd.f32 %v1745, %v2301
        %v2303 = vpop.f32.mrf.mxu0
        %v2304 = vadd.f32 %v1750, %v2303
        %2305 = vmatmul.bf16.gmra.mxu0 %v2112
        %v2306 = vpop.f32.mrf.mxu0
        %v2307 = vadd.f32 %v1755, %v2306
        %v2308 = vpop.f32.mrf.mxu0
        %v2309 = vadd.f32 %v1760, %v2308
        %2310 = vmatmul.bf16.gmra.mxu0 %v2114
        %v2311 = vpop.f32.mrf.mxu0
        %v2312 = vadd.f32 %v1765, %v2311
        %v2313 = vpop.f32.mrf.mxu0
        %v2314 = vadd.f32 %v1770, %v2313
        %2315 = vmatmul.bf16.gmra.mxu0 %v2116
        %v2316 = vpop.f32.mrf.mxu0
        %v2317 = vadd.f32 %v1775, %v2316
        %v2318 = vpop.f32.mrf.mxu0
        %v2319 = vadd.f32 %v1780, %v2318
        %2320 = vmatmul.bf16.gmra.mxu0 %v2118
        %v2321 = vpop.f32.mrf.mxu0
        %v2322 = vadd.f32 %v1785, %v2321
        %v2323 = vpop.f32.mrf.mxu0
        %v2324 = vadd.f32 %v1790, %v2323
        %2325 = vmatmul.bf16.gmra.mxu0 %v2120
        %v2326 = vpop.f32.mrf.mxu0
        %v2327 = vadd.f32 %v1795, %v2326
        %v2328 = vpop.f32.mrf.mxu0
        %v2329 = vadd.f32 %v1800, %v2328
        %2330 = vmatmul.bf16.gmra.mxu0 %v2122
        %v2331 = vpop.f32.mrf.mxu0
        %v2332 = vadd.f32 %v1805, %v2331
        %v2333 = vpop.f32.mrf.mxu0
        %v2334 = vadd.f32 %v1810, %v2333
        %2335 = vmatmul.bf16.gmra.mxu0 %v2124
        %v2336 = vpop.f32.mrf.mxu0
        %v2337 = vadd.f32 %v1815, %v2336
        %v2338 = vpop.f32.mrf.mxu0
        %v2339 = vadd.f32 %v1820, %v2338
        %2340 = vmatmul.bf16.gmra.mxu0 %v2126
        %v2341 = vpop.f32.mrf.mxu0
        %v2342 = vadd.f32 %v1825, %v2341
        %v2343 = vpop.f32.mrf.mxu0
        %v2344 = vadd.f32 %v1830, %v2343
        %2345 = vmatmul.bf16.gmra.mxu0 %v2128
        %v2346 = vpop.f32.mrf.mxu0
        %v2347 = vadd.f32 %v1835, %v2346
        %v2348 = vpop.f32.mrf.mxu0
        %v2349 = vadd.f32 %v1840, %v2348
        %2350 = vmatmul.bf16.gmra.mxu0 %v2130
        %v2351 = vpop.f32.mrf.mxu0
        %v2352 = vadd.f32 %v1845, %v2351
        %v2353 = vpop.f32.mrf.mxu0
        %v2354 = vadd.f32 %v1850, %v2353
        %2355 = vmatmul.bf16.gmra.mxu0 %v2132
        %v2356 = vpop.f32.mrf.mxu0
        %v2357 = vadd.f32 %v1855, %v2356
        %v2358 = vpop.f32.mrf.mxu0
        %v2359 = vadd.f32 %v1860, %v2358
        %2360 = vmatmul.bf16.gmra.mxu0 %v2134
        %v2361 = vpop.f32.mrf.mxu0
        %v2362 = vadd.f32 %v1865, %v2361
        %v2363 = vpop.f32.mrf.mxu0
        %v2364 = vadd.f32 %v1870, %v2363
        %2365 = vmatmul.bf16.gmra.mxu0 %v2136
        %v2366 = vpop.f32.mrf.mxu0
        %v2367 = vadd.f32 %v1875, %v2366
        %v2368 = vpop.f32.mrf.mxu0
        %v2369 = vadd.f32 %v1880, %v2368
        %2370 = vdwg.mxu0
        %2371 = vmatpush.bf16.msra.mxu0 %v1496
        %2372 = vmatpush.bf16.msra.mxu0 %v1494
        %2373 = vmatpush.bf16.msra.mxu0 %v1492
        %2374 = vmatpush.bf16.msra.mxu0 %v1490
        %2375 = vmatpush.bf16.msra.mxu0 %v1488
        %2376 = vmatpush.bf16.msra.mxu0 %v1486
        %2377 = vmatpush.bf16.msra.mxu0 %v1484
        %2378 = vmatpush.bf16.msra.mxu0 %v1482
        %2379 = vmatmul.bf16.gmra.mxu0 %v2075
        %v2380 = vpop.f32.mrf.mxu0
        %v2381 = vadd.f32 %v2212, %v2380
        %v2382 = vpop.f32.mrf.mxu0
        %v2383 = vadd.f32 %v2214, %v2382
        %2384 = vmatmul.bf16.gmra.mxu0 %v2077
        %v2385 = vpop.f32.mrf.mxu0
        %v2386 = vadd.f32 %v2217, %v2385
        %v2387 = vpop.f32.mrf.mxu0
        %v2388 = vadd.f32 %v2219, %v2387
        %2389 = vmatmul.bf16.gmra.mxu0 %v2079
        %v2390 = vpop.f32.mrf.mxu0
        %v2391 = vadd.f32 %v2222, %v2390
        %v2392 = vpop.f32.mrf.mxu0
        %v2393 = vadd.f32 %v2224, %v2392
        %2394 = vmatmul.bf16.gmra.mxu0 %v2081
        %v2395 = vpop.f32.mrf.mxu0
        %v2396 = vadd.f32 %v2227, %v2395
        %v2397 = vpop.f32.mrf.mxu0
        %v2398 = vadd.f32 %v2229, %v2397
        %2399 = vmatmul.bf16.gmra.mxu0 %v2083
        %v2400 = vpop.f32.mrf.mxu0
        %v2401 = vadd.f32 %v2232, %v2400
        %v2402 = vpop.f32.mrf.mxu0
        %v2403 = vadd.f32 %v2234, %v2402
        %2404 = vmatmul.bf16.gmra.mxu0 %v2085
        %v2405 = vpop.f32.mrf.mxu0
        %v2406 = vadd.f32 %v2237, %v2405
        %v2407 = vpop.f32.mrf.mxu0
        %v2408 = vadd.f32 %v2239, %v2407
        %2409 = vmatmul.bf16.gmra.mxu0 %v2087
        %v2410 = vpop.f32.mrf.mxu0
        %v2411 = vadd.f32 %v2242, %v2410
        %v2412 = vpop.f32.mrf.mxu0
        %v2413 = vadd.f32 %v2244, %v2412
        %2414 = vmatmul.bf16.gmra.mxu0 %v2089
        %v2415 = vpop.f32.mrf.mxu0
        %v2416 = vadd.f32 %v2247, %v2415
        %v2417 = vpop.f32.mrf.mxu0
        %v2418 = vadd.f32 %v2249, %v2417
        %2419 = vmatmul.bf16.gmra.mxu0 %v2091
        %v2420 = vpop.f32.mrf.mxu0
        %v2421 = vadd.f32 %v2252, %v2420
        %v2422 = vpop.f32.mrf.mxu0
        %v2423 = vadd.f32 %v2254, %v2422
        %2424 = vmatmul.bf16.gmra.mxu0 %v2093
        %v2425 = vpop.f32.mrf.mxu0
        %v2426 = vadd.f32 %v2257, %v2425
        %v2427 = vpop.f32.mrf.mxu0
        %v2428 = vadd.f32 %v2259, %v2427
        %2429 = vmatmul.bf16.gmra.mxu0 %v2095
        %v2430 = vpop.f32.mrf.mxu0
        %v2431 = vadd.f32 %v2262, %v2430
        %v2432 = vpop.f32.mrf.mxu0
        %v2433 = vadd.f32 %v2264, %v2432
        %2434 = vmatmul.bf16.gmra.mxu0 %v2097
        %v2435 = vpop.f32.mrf.mxu0
        %v2436 = vadd.f32 %v2267, %v2435
        %v2437 = vpop.f32.mrf.mxu0
        %v2438 = vadd.f32 %v2269, %v2437
        %2439 = vmatmul.bf16.gmra.mxu0 %v2099
        %v2440 = vpop.f32.mrf.mxu0
        %v2441 = vadd.f32 %v2272, %v2440
        %v2442 = vpop.f32.mrf.mxu0
        %v2443 = vadd.f32 %v2274, %v2442
        %2444 = vmatmul.bf16.gmra.mxu0 %v2101
        %v2445 = vpop.f32.mrf.mxu0
        %v2446 = vadd.f32 %v2277, %v2445
        %v2447 = vpop.f32.mrf.mxu0
        %v2448 = vadd.f32 %v2279, %v2447
        %2449 = vmatmul.bf16.gmra.mxu0 %v2103
        %v2450 = vpop.f32.mrf.mxu0
        %v2451 = vadd.f32 %v2282, %v2450
        %v2452 = vpop.f32.mrf.mxu0
        %v2453 = vadd.f32 %v2284, %v2452
        %2454 = vmatmul.bf16.gmra.mxu0 %v2105
        %v2455 = vpop.f32.mrf.mxu0
        %v2456 = vadd.f32 %v2287, %v2455
        %v2457 = vpop.f32.mrf.mxu0
        %v2458 = vadd.f32 %v2289, %v2457
        %2459 = vmatmul.bf16.gmra.mxu0 %v2107
        %v2460 = vpop.f32.mrf.mxu0
        %v2461 = vadd.f32 %v2292, %v2460
        %v2462 = vpop.f32.mrf.mxu0
        %v2463 = vadd.f32 %v2294, %v2462
        %2464 = vmatmul.bf16.gmra.mxu0 %v2109
        %v2465 = vpop.f32.mrf.mxu0
        %v2466 = vadd.f32 %v2297, %v2465
        %v2467 = vpop.f32.mrf.mxu0
        %v2468 = vadd.f32 %v2299, %v2467
        %2469 = vmatmul.bf16.gmra.mxu0 %v2111
        %v2470 = vpop.f32.mrf.mxu0
        %v2471 = vadd.f32 %v2302, %v2470
        %v2472 = vpop.f32.mrf.mxu0
        %v2473 = vadd.f32 %v2304, %v2472
        %2474 = vmatmul.bf16.gmra.mxu0 %v2113
        %v2475 = vpop.f32.mrf.mxu0
        %v2476 = vadd.f32 %v2307, %v2475
        %v2477 = vpop.f32.mrf.mxu0
        %v2478 = vadd.f32 %v2309, %v2477
        %2479 = vmatmul.bf16.gmra.mxu0 %v2115
        %v2480 = vpop.f32.mrf.mxu0
        %v2481 = vadd.f32 %v2312, %v2480
        %v2482 = vpop.f32.mrf.mxu0
        %v2483 = vadd.f32 %v2314, %v2482
        %2484 = vmatmul.bf16.gmra.mxu0 %v2117
        %v2485 = vpop.f32.mrf.mxu0
        %v2486 = vadd.f32 %v2317, %v2485
        %v2487 = vpop.f32.mrf.mxu0
        %v2488 = vadd.f32 %v2319, %v2487
        %2489 = vmatmul.bf16.gmra.mxu0 %v2119
        %v2490 = vpop.f32.mrf.mxu0
        %v2491 = vadd.f32 %v2322, %v2490
        %v2492 = vpop.f32.mrf.mxu0
        %v2493 = vadd.f32 %v2324, %v2492
        %2494 = vmatmul.bf16.gmra.mxu0 %v2121
        %v2495 = vpop.f32.mrf.mxu0
        %v2496 = vadd.f32 %v2327, %v2495
        %v2497 = vpop.f32.mrf.mxu0
        %v2498 = vadd.f32 %v2329, %v2497
        %2499 = vmatmul.bf16.gmra.mxu0 %v2123
        %v2500 = vpop.f32.mrf.mxu0
        %v2501 = vadd.f32 %v2332, %v2500
        %v2502 = vpop.f32.mrf.mxu0
        %v2503 = vadd.f32 %v2334, %v2502
        %2504 = vmatmul.bf16.gmra.mxu0 %v2125
        %v2505 = vpop.f32.mrf.mxu0
        %v2506 = vadd.f32 %v2337, %v2505
        %v2507 = vpop.f32.mrf.mxu0
        %v2508 = vadd.f32 %v2339, %v2507
        %2509 = vmatmul.bf16.gmra.mxu0 %v2127
        %v2510 = vpop.f32.mrf.mxu0
        %v2511 = vadd.f32 %v2342, %v2510
        %v2512 = vpop.f32.mrf.mxu0
        %v2513 = vadd.f32 %v2344, %v2512
        %2514 = vmatmul.bf16.gmra.mxu0 %v2129
        %v2515 = vpop.f32.mrf.mxu0
        %v2516 = vadd.f32 %v2347, %v2515
        %v2517 = vpop.f32.mrf.mxu0
        %v2518 = vadd.f32 %v2349, %v2517
        %2519 = vmatmul.bf16.gmra.mxu0 %v2131
        %v2520 = vpop.f32.mrf.mxu0
        %v2521 = vadd.f32 %v2352, %v2520
        %v2522 = vpop.f32.mrf.mxu0
        %v2523 = vadd.f32 %v2354, %v2522
        %2524 = vmatmul.bf16.gmra.mxu0 %v2133
        %v2525 = vpop.f32.mrf.mxu0
        %v2526 = vadd.f32 %v2357, %v2525
        %v2527 = vpop.f32.mrf.mxu0
        %v2528 = vadd.f32 %v2359, %v2527
        %2529 = vmatmul.bf16.gmra.mxu0 %v2135
        %v2530 = vpop.f32.mrf.mxu0
        %v2531 = vadd.f32 %v2362, %v2530
        %v2532 = vpop.f32.mrf.mxu0
        %v2533 = vadd.f32 %v2364, %v2532
        %2534 = vmatmul.bf16.gmra.mxu0 %v2137
        %v2535 = vpop.f32.mrf.mxu0
        %v2536 = vadd.f32 %v2367, %v2535
        %v2537 = vpop.f32.mrf.mxu0
        %v2538 = vadd.f32 %v2369, %v2537
        %2539 = vdwg.mxu0
        %2540 = vmatpush.bf16.msra.mxu0 %v1481
        %2541 = vmatpush.bf16.msra.mxu0 %v1479
        %2542 = vmatpush.bf16.msra.mxu0 %v1477
        %2543 = vmatpush.bf16.msra.mxu0 %v1475
        %2544 = vmatpush.bf16.msra.mxu0 %v1473
        %2545 = vmatpush.bf16.msra.mxu0 %v1471
        %2546 = vmatpush.bf16.msra.mxu0 %v1469
        %2547 = vmatpush.bf16.msra.mxu0 %v1467
        %2548 = vmatmul.bf16.gmra.mxu0 %v2074
        %v2549 = vpop.f32.mrf.mxu0
        %v2550 = vadd.f32 %v1565, %v2549
        %v2551 = vpop.f32.mrf.mxu0
        %v2552 = vadd.f32 %v1570, %v2551
        %2553 = vmatmul.bf16.gmra.mxu0 %v2076
        %v2554 = vpop.f32.mrf.mxu0
        %v2555 = vadd.f32 %v1575, %v2554
        %v2556 = vpop.f32.mrf.mxu0
        %v2557 = vadd.f32 %v1580, %v2556
        %2558 = vmatmul.bf16.gmra.mxu0 %v2078
        %v2559 = vpop.f32.mrf.mxu0
        %v2560 = vadd.f32 %v1585, %v2559
        %v2561 = vpop.f32.mrf.mxu0
        %v2562 = vadd.f32 %v1590, %v2561
        %2563 = vmatmul.bf16.gmra.mxu0 %v2080
        %v2564 = vpop.f32.mrf.mxu0
        %v2565 = vadd.f32 %v1595, %v2564
        %v2566 = vpop.f32.mrf.mxu0
        %v2567 = vadd.f32 %v1600, %v2566
        %2568 = vmatmul.bf16.gmra.mxu0 %v2082
        %v2569 = vpop.f32.mrf.mxu0
        %v2570 = vadd.f32 %v1605, %v2569
        %v2571 = vpop.f32.mrf.mxu0
        %v2572 = vadd.f32 %v1610, %v2571
        %2573 = vmatmul.bf16.gmra.mxu0 %v2084
        %v2574 = vpop.f32.mrf.mxu0
        %v2575 = vadd.f32 %v1615, %v2574
        %v2576 = vpop.f32.mrf.mxu0
        %v2577 = vadd.f32 %v1620, %v2576
        %2578 = vmatmul.bf16.gmra.mxu0 %v2086
        %v2579 = vpop.f32.mrf.mxu0
        %v2580 = vadd.f32 %v1625, %v2579
        %v2581 = vpop.f32.mrf.mxu0
        %v2582 = vadd.f32 %v1630, %v2581
        %2583 = vmatmul.bf16.gmra.mxu0 %v2088
        %v2584 = vpop.f32.mrf.mxu0
        %v2585 = vadd.f32 %v1635, %v2584
        %v2586 = vpop.f32.mrf.mxu0
        %v2587 = vadd.f32 %v1640, %v2586
        %2588 = vmatmul.bf16.gmra.mxu0 %v2090
        %v2589 = vpop.f32.mrf.mxu0
        %v2590 = vadd.f32 %v1645, %v2589
        %v2591 = vpop.f32.mrf.mxu0
        %v2592 = vadd.f32 %v1650, %v2591
        %2593 = vmatmul.bf16.gmra.mxu0 %v2092
        %v2594 = vpop.f32.mrf.mxu0
        %v2595 = vadd.f32 %v1655, %v2594
        %v2596 = vpop.f32.mrf.mxu0
        %v2597 = vadd.f32 %v1660, %v2596
        %2598 = vmatmul.bf16.gmra.mxu0 %v2094
        %v2599 = vpop.f32.mrf.mxu0
        %v2600 = vadd.f32 %v1665, %v2599
        %v2601 = vpop.f32.mrf.mxu0
        %v2602 = vadd.f32 %v1670, %v2601
        %2603 = vmatmul.bf16.gmra.mxu0 %v2096
        %v2604 = vpop.f32.mrf.mxu0
        %v2605 = vadd.f32 %v1675, %v2604
        %v2606 = vpop.f32.mrf.mxu0
        %v2607 = vadd.f32 %v1680, %v2606
        %2608 = vmatmul.bf16.gmra.mxu0 %v2098
        %v2609 = vpop.f32.mrf.mxu0
        %v2610 = vadd.f32 %v1685, %v2609
        %v2611 = vpop.f32.mrf.mxu0
        %v2612 = vadd.f32 %v1690, %v2611
        %2613 = vmatmul.bf16.gmra.mxu0 %v2100
        %v2614 = vpop.f32.mrf.mxu0
        %v2615 = vadd.f32 %v1695, %v2614
        %v2616 = vpop.f32.mrf.mxu0
        %v2617 = vadd.f32 %v1700, %v2616
        %2618 = vmatmul.bf16.gmra.mxu0 %v2102
        %v2619 = vpop.f32.mrf.mxu0
        %v2620 = vadd.f32 %v1705, %v2619
        %v2621 = vpop.f32.mrf.mxu0
        %v2622 = vadd.f32 %v1710, %v2621
        %2623 = vmatmul.bf16.gmra.mxu0 %v2104
        %v2624 = vpop.f32.mrf.mxu0
        %v2625 = vadd.f32 %v1715, %v2624
        %v2626 = vpop.f32.mrf.mxu0
        %v2627 = vadd.f32 %v1720, %v2626
        %2628 = vmatmul.bf16.gmra.mxu0 %v2106
        %v2629 = vpop.f32.mrf.mxu0
        %v2630 = vadd.f32 %v1725, %v2629
        %v2631 = vpop.f32.mrf.mxu0
        %v2632 = vadd.f32 %v1730, %v2631
        %2633 = vmatmul.bf16.gmra.mxu0 %v2108
        %v2634 = vpop.f32.mrf.mxu0
        %v2635 = vadd.f32 %v1735, %v2634
        %v2636 = vpop.f32.mrf.mxu0
        %v2637 = vadd.f32 %v1740, %v2636
        %2638 = vmatmul.bf16.gmra.mxu0 %v2110
        %v2639 = vpop.f32.mrf.mxu0
        %v2640 = vadd.f32 %v1745, %v2639
        %v2641 = vpop.f32.mrf.mxu0
        %v2642 = vadd.f32 %v1750, %v2641
        %2643 = vmatmul.bf16.gmra.mxu0 %v2112
        %v2644 = vpop.f32.mrf.mxu0
        %v2645 = vadd.f32 %v1755, %v2644
        %v2646 = vpop.f32.mrf.mxu0
        %v2647 = vadd.f32 %v1760, %v2646
        %2648 = vmatmul.bf16.gmra.mxu0 %v2114
        %v2649 = vpop.f32.mrf.mxu0
        %v2650 = vadd.f32 %v1765, %v2649
        %v2651 = vpop.f32.mrf.mxu0
        %v2652 = vadd.f32 %v1770, %v2651
        %2653 = vmatmul.bf16.gmra.mxu0 %v2116
        %v2654 = vpop.f32.mrf.mxu0
        %v2655 = vadd.f32 %v1775, %v2654
        %v2656 = vpop.f32.mrf.mxu0
        %v2657 = vadd.f32 %v1780, %v2656
        %2658 = vmatmul.bf16.gmra.mxu0 %v2118
        %v2659 = vpop.f32.mrf.mxu0
        %v2660 = vadd.f32 %v1785, %v2659
        %v2661 = vpop.f32.mrf.mxu0
        %v2662 = vadd.f32 %v1790, %v2661
        %2663 = vmatmul.bf16.gmra.mxu0 %v2120
        %v2664 = vpop.f32.mrf.mxu0
        %v2665 = vadd.f32 %v1795, %v2664
        %v2666 = vpop.f32.mrf.mxu0
        %v2667 = vadd.f32 %v1800, %v2666
        %2668 = vmatmul.bf16.gmra.mxu0 %v2122
        %v2669 = vpop.f32.mrf.mxu0
        %v2670 = vadd.f32 %v1805, %v2669
        %v2671 = vpop.f32.mrf.mxu0
        %v2672 = vadd.f32 %v1810, %v2671
        %2673 = vmatmul.bf16.gmra.mxu0 %v2124
        %v2674 = vpop.f32.mrf.mxu0
        %v2675 = vadd.f32 %v1815, %v2674
        %v2676 = vpop.f32.mrf.mxu0
        %v2677 = vadd.f32 %v1820, %v2676
        %2678 = vmatmul.bf16.gmra.mxu0 %v2126
        %v2679 = vpop.f32.mrf.mxu0
        %v2680 = vadd.f32 %v1825, %v2679
        %v2681 = vpop.f32.mrf.mxu0
        %v2682 = vadd.f32 %v1830, %v2681
        %2683 = vmatmul.bf16.gmra.mxu0 %v2128
        %v2684 = vpop.f32.mrf.mxu0
        %v2685 = vadd.f32 %v1835, %v2684
        %v2686 = vpop.f32.mrf.mxu0
        %v2687 = vadd.f32 %v1840, %v2686
        %2688 = vmatmul.bf16.gmra.mxu0 %v2130
        %v2689 = vpop.f32.mrf.mxu0
        %v2690 = vadd.f32 %v1845, %v2689
        %v2691 = vpop.f32.mrf.mxu0
        %v2692 = vadd.f32 %v1850, %v2691
        %2693 = vmatmul.bf16.gmra.mxu0 %v2132
        %v2694 = vpop.f32.mrf.mxu0
        %v2695 = vadd.f32 %v1855, %v2694
        %v2696 = vpop.f32.mrf.mxu0
        %v2697 = vadd.f32 %v1860, %v2696
        %2698 = vmatmul.bf16.gmra.mxu0 %v2134
        %v2699 = vpop.f32.mrf.mxu0
        %v2700 = vadd.f32 %v1865, %v2699
        %v2701 = vpop.f32.mrf.mxu0
        %v2702 = vadd.f32 %v1870, %v2701
        %2703 = vmatmul.bf16.gmra.mxu0 %v2136
        %v2704 = vpop.f32.mrf.mxu0
        %v2705 = vadd.f32 %v1875, %v2704
        %v2706 = vpop.f32.mrf.mxu0
        %v2707 = vadd.f32 %v1880, %v2706
        %2708 = vdwg.mxu0
        %2709 = vmatpush.bf16.msra.mxu0 %v1497
        %2710 = vmatpush.bf16.msra.mxu0 %v1495
        %2711 = vmatpush.bf16.msra.mxu0 %v1493
        %2712 = vmatpush.bf16.msra.mxu0 %v1491
        %2713 = vmatpush.bf16.msra.mxu0 %v1489
        %2714 = vmatpush.bf16.msra.mxu0 %v1487
        %2715 = vmatpush.bf16.msra.mxu0 %v1485
        %2716 = vmatpush.bf16.msra.mxu0 %v1483
        %2717 = vmatmul.bf16.gmra.mxu0 %v2075
        %v2718 = vpop.f32.mrf.mxu0
        %v2719 = vadd.f32 %v2550, %v2718
        %v2720 = vpop.f32.mrf.mxu0
        %v2721 = vadd.f32 %v2552, %v2720
        %2722 = vmatmul.bf16.gmra.mxu0 %v2077
        %v2723 = vpop.f32.mrf.mxu0
        %v2724 = vadd.f32 %v2555, %v2723
        %v2725 = vpop.f32.mrf.mxu0
        %v2726 = vadd.f32 %v2557, %v2725
        %2727 = vmatmul.bf16.gmra.mxu0 %v2079
        %v2728 = vpop.f32.mrf.mxu0
        %v2729 = vadd.f32 %v2560, %v2728
        %v2730 = vpop.f32.mrf.mxu0
        %v2731 = vadd.f32 %v2562, %v2730
        %2732 = vmatmul.bf16.gmra.mxu0 %v2081
        %v2733 = vpop.f32.mrf.mxu0
        %v2734 = vadd.f32 %v2565, %v2733
        %v2735 = vpop.f32.mrf.mxu0
        %v2736 = vadd.f32 %v2567, %v2735
        %2737 = vmatmul.bf16.gmra.mxu0 %v2083
        %v2738 = vpop.f32.mrf.mxu0
        %v2739 = vadd.f32 %v2570, %v2738
        %v2740 = vpop.f32.mrf.mxu0
        %v2741 = vadd.f32 %v2572, %v2740
        %2742 = vmatmul.bf16.gmra.mxu0 %v2085
        %v2743 = vpop.f32.mrf.mxu0
        %v2744 = vadd.f32 %v2575, %v2743
        %v2745 = vpop.f32.mrf.mxu0
        %v2746 = vadd.f32 %v2577, %v2745
        %2747 = vmatmul.bf16.gmra.mxu0 %v2087
        %v2748 = vpop.f32.mrf.mxu0
        %v2749 = vadd.f32 %v2580, %v2748
        %v2750 = vpop.f32.mrf.mxu0
        %v2751 = vadd.f32 %v2582, %v2750
        %2752 = vmatmul.bf16.gmra.mxu0 %v2089
        %v2753 = vpop.f32.mrf.mxu0
        %v2754 = vadd.f32 %v2585, %v2753
        %v2755 = vpop.f32.mrf.mxu0
        %v2756 = vadd.f32 %v2587, %v2755
        %2757 = vmatmul.bf16.gmra.mxu0 %v2091
        %v2758 = vpop.f32.mrf.mxu0
        %v2759 = vadd.f32 %v2590, %v2758
        %v2760 = vpop.f32.mrf.mxu0
        %v2761 = vadd.f32 %v2592, %v2760
        %2762 = vmatmul.bf16.gmra.mxu0 %v2093
        %v2763 = vpop.f32.mrf.mxu0
        %v2764 = vadd.f32 %v2595, %v2763
        %v2765 = vpop.f32.mrf.mxu0
        %v2766 = vadd.f32 %v2597, %v2765
        %2767 = vmatmul.bf16.gmra.mxu0 %v2095
        %v2768 = vpop.f32.mrf.mxu0
        %v2769 = vadd.f32 %v2600, %v2768
        %v2770 = vpop.f32.mrf.mxu0
        %v2771 = vadd.f32 %v2602, %v2770
        %2772 = vmatmul.bf16.gmra.mxu0 %v2097
        %v2773 = vpop.f32.mrf.mxu0
        %v2774 = vadd.f32 %v2605, %v2773
        %v2775 = vpop.f32.mrf.mxu0
        %v2776 = vadd.f32 %v2607, %v2775
        %2777 = vmatmul.bf16.gmra.mxu0 %v2099
        %v2778 = vpop.f32.mrf.mxu0
        %v2779 = vadd.f32 %v2610, %v2778
        %v2780 = vpop.f32.mrf.mxu0
        %v2781 = vadd.f32 %v2612, %v2780
        %2782 = vmatmul.bf16.gmra.mxu0 %v2101
        %v2783 = vpop.f32.mrf.mxu0
        %v2784 = vadd.f32 %v2615, %v2783
        %v2785 = vpop.f32.mrf.mxu0
        %v2786 = vadd.f32 %v2617, %v2785
        %2787 = vmatmul.bf16.gmra.mxu0 %v2103
        %v2788 = vpop.f32.mrf.mxu0
        %v2789 = vadd.f32 %v2620, %v2788
        %v2790 = vpop.f32.mrf.mxu0
        %v2791 = vadd.f32 %v2622, %v2790
        %2792 = vmatmul.bf16.gmra.mxu0 %v2105
        %v2793 = vpop.f32.mrf.mxu0
        %v2794 = vadd.f32 %v2625, %v2793
        %v2795 = vpop.f32.mrf.mxu0
        %v2796 = vadd.f32 %v2627, %v2795
        %2797 = vmatmul.bf16.gmra.mxu0 %v2107
        %v2798 = vpop.f32.mrf.mxu0
        %v2799 = vadd.f32 %v2630, %v2798
        %v2800 = vpop.f32.mrf.mxu0
        %v2801 = vadd.f32 %v2632, %v2800
        %2802 = vmatmul.bf16.gmra.mxu0 %v2109
        %v2803 = vpop.f32.mrf.mxu0
        %v2804 = vadd.f32 %v2635, %v2803
        %v2805 = vpop.f32.mrf.mxu0
        %v2806 = vadd.f32 %v2637, %v2805
        %2807 = vmatmul.bf16.gmra.mxu0 %v2111
        %v2808 = vpop.f32.mrf.mxu0
        %v2809 = vadd.f32 %v2640, %v2808
        %v2810 = vpop.f32.mrf.mxu0
        %v2811 = vadd.f32 %v2642, %v2810
        %2812 = vmatmul.bf16.gmra.mxu0 %v2113
        %v2813 = vpop.f32.mrf.mxu0
        %v2814 = vadd.f32 %v2645, %v2813
        %v2815 = vpop.f32.mrf.mxu0
        %v2816 = vadd.f32 %v2647, %v2815
        %2817 = vmatmul.bf16.gmra.mxu0 %v2115
        %v2818 = vpop.f32.mrf.mxu0
        %v2819 = vadd.f32 %v2650, %v2818
        %v2820 = vpop.f32.mrf.mxu0
        %v2821 = vadd.f32 %v2652, %v2820
        %2822 = vmatmul.bf16.gmra.mxu0 %v2117
        %v2823 = vpop.f32.mrf.mxu0
        %v2824 = vadd.f32 %v2655, %v2823
        %v2825 = vpop.f32.mrf.mxu0
        %v2826 = vadd.f32 %v2657, %v2825
        %2827 = vmatmul.bf16.gmra.mxu0 %v2119
        %v2828 = vpop.f32.mrf.mxu0
        %v2829 = vadd.f32 %v2660, %v2828
        %v2830 = vpop.f32.mrf.mxu0
        %v2831 = vadd.f32 %v2662, %v2830
        %2832 = vmatmul.bf16.gmra.mxu0 %v2121
        %v2833 = vpop.f32.mrf.mxu0
        %v2834 = vadd.f32 %v2665, %v2833
        %v2835 = vpop.f32.mrf.mxu0
        %v2836 = vadd.f32 %v2667, %v2835
        %2837 = vmatmul.bf16.gmra.mxu0 %v2123
        %v2838 = vpop.f32.mrf.mxu0
        %v2839 = vadd.f32 %v2670, %v2838
        %v2840 = vpop.f32.mrf.mxu0
        %v2841 = vadd.f32 %v2672, %v2840
        %2842 = vmatmul.bf16.gmra.mxu0 %v2125
        %v2843 = vpop.f32.mrf.mxu0
        %v2844 = vadd.f32 %v2675, %v2843
        %v2845 = vpop.f32.mrf.mxu0
        %v2846 = vadd.f32 %v2677, %v2845
        %2847 = vmatmul.bf16.gmra.mxu0 %v2127
        %v2848 = vpop.f32.mrf.mxu0
        %v2849 = vadd.f32 %v2680, %v2848
        %v2850 = vpop.f32.mrf.mxu0
        %v2851 = vadd.f32 %v2682, %v2850
        %2852 = vmatmul.bf16.gmra.mxu0 %v2129
        %v2853 = vpop.f32.mrf.mxu0
        %v2854 = vadd.f32 %v2685, %v2853
        %v2855 = vpop.f32.mrf.mxu0
        %v2856 = vadd.f32 %v2687, %v2855
        %2857 = vmatmul.bf16.gmra.mxu0 %v2131
        %v2858 = vpop.f32.mrf.mxu0
        %v2859 = vadd.f32 %v2690, %v2858
        %v2860 = vpop.f32.mrf.mxu0
        %v2861 = vadd.f32 %v2692, %v2860
        %2862 = vmatmul.bf16.gmra.mxu0 %v2133
        %v2863 = vpop.f32.mrf.mxu0
        %v2864 = vadd.f32 %v2695, %v2863
        %v2865 = vpop.f32.mrf.mxu0
        %v2866 = vadd.f32 %v2697, %v2865
        %2867 = vmatmul.bf16.gmra.mxu0 %v2135
        %v2868 = vpop.f32.mrf.mxu0
        %v2869 = vadd.f32 %v2700, %v2868
        %v2870 = vpop.f32.mrf.mxu0
        %v2871 = vadd.f32 %v2702, %v2870
        %2872 = vmatmul.bf16.gmra.mxu0 %v2137
        %v2873 = vpop.f32.mrf.mxu0
        %v2874 = vadd.f32 %v2705, %v2873
        %v2875 = vpop.f32.mrf.mxu0
        %v2876 = vadd.f32 %v2707, %v2875
        %2877 = vdwg.mxu0
        %vm2878 = vcmp.gt.f32.partialorder %v2381, 0.0
        %vm2879 = vcmp.gt.f32.partialorder %v2719, 0.0
        %vm2880 = vcmp.gt.f32.partialorder %v2383, 0.0
        %vm2881 = vcmp.gt.f32.partialorder %v2721, 0.0
        %vm2882 = vcmp.gt.f32.partialorder %v2386, 0.0
        %vm2883 = vcmp.gt.f32.partialorder %v2724, 0.0
        %vm2884 = vcmp.gt.f32.partialorder %v2388, 0.0
        %vm2885 = vcmp.gt.f32.partialorder %v2726, 0.0
        %vm2886 = vcmp.gt.f32.partialorder %v2391, 0.0
        %vm2887 = vcmp.gt.f32.partialorder %v2729, 0.0
        %vm2888 = vcmp.gt.f32.partialorder %v2393, 0.0
        %vm2889 = vcmp.gt.f32.partialorder %v2731, 0.0
        %vm2890 = vcmp.gt.f32.partialorder %v2396, 0.0
        %vm2891 = vcmp.gt.f32.partialorder %v2734, 0.0
        %vm2892 = vcmp.gt.f32.partialorder %v2398, 0.0
        %vm2893 = vcmp.gt.f32.partialorder %v2736, 0.0
        %vm2894 = vcmp.gt.f32.partialorder %v2401, 0.0
        %vm2895 = vcmp.gt.f32.partialorder %v2739, 0.0
        %vm2896 = vcmp.gt.f32.partialorder %v2403, 0.0
        %vm2897 = vcmp.gt.f32.partialorder %v2741, 0.0
        %vm2898 = vcmp.gt.f32.partialorder %v2406, 0.0
        %vm2899 = vcmp.gt.f32.partialorder %v2744, 0.0
        %vm2900 = vcmp.gt.f32.partialorder %v2408, 0.0
        %vm2901 = vcmp.gt.f32.partialorder %v2746, 0.0
        %vm2902 = vcmp.gt.f32.partialorder %v2411, 0.0
        %vm2903 = vcmp.gt.f32.partialorder %v2749, 0.0
        %vm2904 = vcmp.gt.f32.partialorder %v2413, 0.0
        %vm2905 = vcmp.gt.f32.partialorder %v2751, 0.0
        %vm2906 = vcmp.gt.f32.partialorder %v2416, 0.0
        %vm2907 = vcmp.gt.f32.partialorder %v2754, 0.0
        %vm2908 = vcmp.gt.f32.partialorder %v2418, 0.0
        %vm2909 = vcmp.gt.f32.partialorder %v2756, 0.0
        %vm2910 = vcmp.gt.f32.partialorder %v2421, 0.0
        %vm2911 = vcmp.gt.f32.partialorder %v2759, 0.0
        %vm2912 = vcmp.gt.f32.partialorder %v2423, 0.0
        %vm2913 = vcmp.gt.f32.partialorder %v2761, 0.0
        %vm2914 = vcmp.gt.f32.partialorder %v2426, 0.0
        %vm2915 = vcmp.gt.f32.partialorder %v2764, 0.0
        %vm2916 = vcmp.gt.f32.partialorder %v2428, 0.0
        %vm2917 = vcmp.gt.f32.partialorder %v2766, 0.0
        %vm2918 = vcmp.gt.f32.partialorder %v2431, 0.0
        %vm2919 = vcmp.gt.f32.partialorder %v2769, 0.0
        %vm2920 = vcmp.gt.f32.partialorder %v2433, 0.0
        %vm2921 = vcmp.gt.f32.partialorder %v2771, 0.0
        %vm2922 = vcmp.gt.f32.partialorder %v2436, 0.0
        %vm2923 = vcmp.gt.f32.partialorder %v2774, 0.0
        %vm2924 = vcmp.gt.f32.partialorder %v2438, 0.0
        %vm2925 = vcmp.gt.f32.partialorder %v2776, 0.0
        %vm2926 = vcmp.gt.f32.partialorder %v2441, 0.0
        %vm2927 = vcmp.gt.f32.partialorder %v2779, 0.0
        %vm2928 = vcmp.gt.f32.partialorder %v2443, 0.0
        %vm2929 = vcmp.gt.f32.partialorder %v2781, 0.0
        %vm2930 = vcmp.gt.f32.partialorder %v2446, 0.0
        %vm2931 = vcmp.gt.f32.partialorder %v2784, 0.0
        %vm2932 = vcmp.gt.f32.partialorder %v2448, 0.0
        %vm2933 = vcmp.gt.f32.partialorder %v2786, 0.0
        %vm2934 = vcmp.gt.f32.partialorder %v2451, 0.0
        %vm2935 = vcmp.gt.f32.partialorder %v2789, 0.0
        %vm2936 = vcmp.gt.f32.partialorder %v2453, 0.0
        %vm2937 = vcmp.gt.f32.partialorder %v2791, 0.0
        %vm2938 = vcmp.gt.f32.partialorder %v2456, 0.0
        %vm2939 = vcmp.gt.f32.partialorder %v2794, 0.0
        %vm2940 = vcmp.gt.f32.partialorder %v2458, 0.0
        %vm2941 = vcmp.gt.f32.partialorder %v2796, 0.0
        %vm2942 = vcmp.gt.f32.partialorder %v2461, 0.0
        %vm2943 = vcmp.gt.f32.partialorder %v2799, 0.0
        %vm2944 = vcmp.gt.f32.partialorder %v2463, 0.0
        %vm2945 = vcmp.gt.f32.partialorder %v2801, 0.0
        %vm2946 = vcmp.gt.f32.partialorder %v2466, 0.0
        %vm2947 = vcmp.gt.f32.partialorder %v2804, 0.0
        %vm2948 = vcmp.gt.f32.partialorder %v2468, 0.0
        %vm2949 = vcmp.gt.f32.partialorder %v2806, 0.0
        %vm2950 = vcmp.gt.f32.partialorder %v2471, 0.0
        %vm2951 = vcmp.gt.f32.partialorder %v2809, 0.0
        %vm2952 = vcmp.gt.f32.partialorder %v2473, 0.0
        %vm2953 = vcmp.gt.f32.partialorder %v2811, 0.0
        %vm2954 = vcmp.gt.f32.partialorder %v2476, 0.0
        %vm2955 = vcmp.gt.f32.partialorder %v2814, 0.0
        %vm2956 = vcmp.gt.f32.partialorder %v2478, 0.0
        %vm2957 = vcmp.gt.f32.partialorder %v2816, 0.0
        %vm2958 = vcmp.gt.f32.partialorder %v2481, 0.0
        %vm2959 = vcmp.gt.f32.partialorder %v2819, 0.0
        %vm2960 = vcmp.gt.f32.partialorder %v2483, 0.0
        %vm2961 = vcmp.gt.f32.partialorder %v2821, 0.0
        %vm2962 = vcmp.gt.f32.partialorder %v2486, 0.0
        %vm2963 = vcmp.gt.f32.partialorder %v2824, 0.0
        %vm2964 = vcmp.gt.f32.partialorder %v2488, 0.0
        %vm2965 = vcmp.gt.f32.partialorder %v2826, 0.0
        %vm2966 = vcmp.gt.f32.partialorder %v2491, 0.0
        %vm2967 = vcmp.gt.f32.partialorder %v2829, 0.0
        %vm2968 = vcmp.gt.f32.partialorder %v2493, 0.0
        %vm2969 = vcmp.gt.f32.partialorder %v2831, 0.0
        %vm2970 = vcmp.gt.f32.partialorder %v2496, 0.0
        %vm2971 = vcmp.gt.f32.partialorder %v2834, 0.0
        %vm2972 = vcmp.gt.f32.partialorder %v2498, 0.0
        %vm2973 = vcmp.gt.f32.partialorder %v2836, 0.0
        %vm2974 = vcmp.gt.f32.partialorder %v2501, 0.0
        %vm2975 = vcmp.gt.f32.partialorder %v2839, 0.0
        %vm2976 = vcmp.gt.f32.partialorder %v2503, 0.0
        %vm2977 = vcmp.gt.f32.partialorder %v2841, 0.0
        %vm2978 = vcmp.gt.f32.partialorder %v2506, 0.0
        %vm2979 = vcmp.gt.f32.partialorder %v2844, 0.0
        %vm2980 = vcmp.gt.f32.partialorder %v2508, 0.0
        %vm2981 = vcmp.gt.f32.partialorder %v2846, 0.0
        %vm2982 = vcmp.gt.f32.partialorder %v2511, 0.0
        %vm2983 = vcmp.gt.f32.partialorder %v2849, 0.0
        %vm2984 = vcmp.gt.f32.partialorder %v2513, 0.0
        %vm2985 = vcmp.gt.f32.partialorder %v2851, 0.0
        %vm2986 = vcmp.gt.f32.partialorder %v2516, 0.0
        %vm2987 = vcmp.gt.f32.partialorder %v2854, 0.0
        %vm2988 = vcmp.gt.f32.partialorder %v2518, 0.0
        %vm2989 = vcmp.gt.f32.partialorder %v2856, 0.0
        %vm2990 = vcmp.gt.f32.partialorder %v2521, 0.0
        %vm2991 = vcmp.gt.f32.partialorder %v2859, 0.0
        %vm2992 = vcmp.gt.f32.partialorder %v2523, 0.0
        %vm2993 = vcmp.gt.f32.partialorder %v2861, 0.0
        %vm2994 = vcmp.gt.f32.partialorder %v2526, 0.0
        %vm2995 = vcmp.gt.f32.partialorder %v2864, 0.0
        %vm2996 = vcmp.gt.f32.partialorder %v2528, 0.0
        %vm2997 = vcmp.gt.f32.partialorder %v2866, 0.0
        %vm2998 = vcmp.gt.f32.partialorder %v2531, 0.0
        %vm2999 = vcmp.gt.f32.partialorder %v2869, 0.0
        %vm3000 = vcmp.gt.f32.partialorder %v2533, 0.0
        %vm3001 = vcmp.gt.f32.partialorder %v2871, 0.0
        %vm3002 = vcmp.gt.f32.partialorder %v2536, 0.0
        %vm3003 = vcmp.gt.f32.partialorder %v2874, 0.0
        %vm3004 = vcmp.gt.f32.partialorder %v2538, 0.0
        %vm3005 = vcmp.gt.f32.partialorder %v2876, 0.0
        %v3006 = vmul.f32 %v2381, 0.1
        %v3007 = vmul.f32 %v2719, 0.1
        %v3008 = vmul.f32 %v2383, 0.1
        %v3009 = vmul.f32 %v2721, 0.1
        %v3010 = vmul.f32 %v2386, 0.1
        %v3011 = vmul.f32 %v2724, 0.1
        %v3012 = vmul.f32 %v2388, 0.1
        %v3013 = vmul.f32 %v2726, 0.1
        %v3014 = vmul.f32 %v2391, 0.1
        %v3015 = vmul.f32 %v2729, 0.1
        %v3016 = vmul.f32 %v2393, 0.1
        %v3017 = vmul.f32 %v2731, 0.1
        %v3018 = vmul.f32 %v2396, 0.1
        %v3019 = vmul.f32 %v2734, 0.1
        %v3020 = vmul.f32 %v2398, 0.1
        %v3021 = vmul.f32 %v2736, 0.1
        %v3022 = vmul.f32 %v2401, 0.1
        %v3023 = vmul.f32 %v2739, 0.1
        %v3024 = vmul.f32 %v2403, 0.1
        %v3025 = vmul.f32 %v2741, 0.1
        %v3026 = vmul.f32 %v2406, 0.1
        %v3027 = vmul.f32 %v2744, 0.1
        %v3028 = vmul.f32 %v2408, 0.1
        %v3029 = vmul.f32 %v2746, 0.1
        %v3030 = vmul.f32 %v2411, 0.1
        %v3031 = vmul.f32 %v2749, 0.1
        %v3032 = vmul.f32 %v2413, 0.1
        %v3033 = vmul.f32 %v2751, 0.1
        %v3034 = vmul.f32 %v2416, 0.1
        %v3035 = vmul.f32 %v2754, 0.1
        %v3036 = vmul.f32 %v2418, 0.1
        %v3037 = vmul.f32 %v2756, 0.1
        %v3038 = vmul.f32 %v2421, 0.1
        %v3039 = vmul.f32 %v2759, 0.1
        %v3040 = vmul.f32 %v2423, 0.1
        %v3041 = vmul.f32 %v2761, 0.1
        %v3042 = vmul.f32 %v2426, 0.1
        %v3043 = vmul.f32 %v2764, 0.1
        %v3044 = vmul.f32 %v2428, 0.1
        %v3045 = vmul.f32 %v2766, 0.1
        %v3046 = vmul.f32 %v2431, 0.1
        %v3047 = vmul.f32 %v2769, 0.1
        %v3048 = vmul.f32 %v2433, 0.1
        %v3049 = vmul.f32 %v2771, 0.1
        %v3050 = vmul.f32 %v2436, 0.1
        %v3051 = vmul.f32 %v2774, 0.1
        %v3052 = vmul.f32 %v2438, 0.1
        %v3053 = vmul.f32 %v2776, 0.1
        %v3054 = vmul.f32 %v2441, 0.1
        %v3055 = vmul.f32 %v2779, 0.1
        %v3056 = vmul.f32 %v2443, 0.1
        %v3057 = vmul.f32 %v2781, 0.1
        %v3058 = vmul.f32 %v2446, 0.1
        %v3059 = vmul.f32 %v2784, 0.1
        %v3060 = vmul.f32 %v2448, 0.1
        %v3061 = vmul.f32 %v2786, 0.1
        %v3062 = vmul.f32 %v2451, 0.1
        %v3063 = vmul.f32 %v2789, 0.1
        %v3064 = vmul.f32 %v2453, 0.1
        %v3065 = vmul.f32 %v2791, 0.1
        %v3066 = vmul.f32 %v2456, 0.1
        %v3067 = vmul.f32 %v2794, 0.1
        %v3068 = vmul.f32 %v2458, 0.1
        %v3069 = vmul.f32 %v2796, 0.1
        %v3070 = vmul.f32 %v2461, 0.1
        %v3071 = vmul.f32 %v2799, 0.1
        %v3072 = vmul.f32 %v2463, 0.1
        %v3073 = vmul.f32 %v2801, 0.1
        %v3074 = vmul.f32 %v2466, 0.1
        %v3075 = vmul.f32 %v2804, 0.1
        %v3076 = vmul.f32 %v2468, 0.1
        %v3077 = vmul.f32 %v2806, 0.1
        %v3078 = vmul.f32 %v2471, 0.1
        %v3079 = vmul.f32 %v2809, 0.1
        %v3080 = vmul.f32 %v2473, 0.1
        %v3081 = vmul.f32 %v2811, 0.1
        %v3082 = vmul.f32 %v2476, 0.1
        %v3083 = vmul.f32 %v2814, 0.1
        %v3084 = vmul.f32 %v2478, 0.1
        %v3085 = vmul.f32 %v2816, 0.1
        %v3086 = vmul.f32 %v2481, 0.1
        %v3087 = vmul.f32 %v2819, 0.1
        %v3088 = vmul.f32 %v2483, 0.1
        %v3089 = vmul.f32 %v2821, 0.1
        %v3090 = vmul.f32 %v2486, 0.1
        %v3091 = vmul.f32 %v2824, 0.1
        %v3092 = vmul.f32 %v2488, 0.1
        %v3093 = vmul.f32 %v2826, 0.1
        %v3094 = vmul.f32 %v2491, 0.1
        %v3095 = vmul.f32 %v2829, 0.1
        %v3096 = vmul.f32 %v2493, 0.1
        %v3097 = vmul.f32 %v2831, 0.1
        %v3098 = vmul.f32 %v2496, 0.1
        %v3099 = vmul.f32 %v2834, 0.1
        %v3100 = vmul.f32 %v2498, 0.1
        %v3101 = vmul.f32 %v2836, 0.1
        %v3102 = vmul.f32 %v2501, 0.1
        %v3103 = vmul.f32 %v2839, 0.1
        %v3104 = vmul.f32 %v2503, 0.1
        %v3105 = vmul.f32 %v2841, 0.1
        %v3106 = vmul.f32 %v2506, 0.1
        %v3107 = vmul.f32 %v2844, 0.1
        %v3108 = vmul.f32 %v2508, 0.1
        %v3109 = vmul.f32 %v2846, 0.1
        %v3110 = vmul.f32 %v2511, 0.1
        %v3111 = vmul.f32 %v2849, 0.1
        %v3112 = vmul.f32 %v2513, 0.1
        %v3113 = vmul.f32 %v2851, 0.1
        %v3114 = vmul.f32 %v2516, 0.1
        %v3115 = vmul.f32 %v2854, 0.1
        %v3116 = vmul.f32 %v2518, 0.1
        %v3117 = vmul.f32 %v2856, 0.1
        %v3118 = vmul.f32 %v2521, 0.1
        %v3119 = vmul.f32 %v2859, 0.1
        %v3120 = vmul.f32 %v2523, 0.1
        %v3121 = vmul.f32 %v2861, 0.1
        %v3122 = vmul.f32 %v2526, 0.1
        %v3123 = vmul.f32 %v2864, 0.1
        %v3124 = vmul.f32 %v2528, 0.1
        %v3125 = vmul.f32 %v2866, 0.1
        %v3126 = vmul.f32 %v2531, 0.1
        %v3127 = vmul.f32 %v2869, 0.1
        %v3128 = vmul.f32 %v2533, 0.1
        %v3129 = vmul.f32 %v2871, 0.1
        %v3130 = vmul.f32 %v2536, 0.1
        %v3131 = vmul.f32 %v2874, 0.1
        %v3132 = vmul.f32 %v2538, 0.1
        %v3133 = vmul.f32 %v2876, 0.1
        %v3134 = vsel %vm2878, %v2381, %v3006
        %v3135 = vsel %vm2879, %v2719, %v3007
        %v3136 = vsel %vm2880, %v2383, %v3008
        %v3137 = vsel %vm2881, %v2721, %v3009
        %v3138 = vsel %vm2882, %v2386, %v3010
        %v3139 = vsel %vm2883, %v2724, %v3011
        %v3140 = vsel %vm2884, %v2388, %v3012
        %v3141 = vsel %vm2885, %v2726, %v3013
        %v3142 = vsel %vm2886, %v2391, %v3014
        %v3143 = vsel %vm2887, %v2729, %v3015
        %v3144 = vsel %vm2888, %v2393, %v3016
        %v3145 = vsel %vm2889, %v2731, %v3017
        %v3146 = vsel %vm2890, %v2396, %v3018
        %v3147 = vsel %vm2891, %v2734, %v3019
        %v3148 = vsel %vm2892, %v2398, %v3020
        %v3149 = vsel %vm2893, %v2736, %v3021
        %v3150 = vsel %vm2894, %v2401, %v3022
        %v3151 = vsel %vm2895, %v2739, %v3023
        %v3152 = vsel %vm2896, %v2403, %v3024
        %v3153 = vsel %vm2897, %v2741, %v3025
        %v3154 = vsel %vm2898, %v2406, %v3026
        %v3155 = vsel %vm2899, %v2744, %v3027
        %v3156 = vsel %vm2900, %v2408, %v3028
        %v3157 = vsel %vm2901, %v2746, %v3029
        %v3158 = vsel %vm2902, %v2411, %v3030
        %v3159 = vsel %vm2903, %v2749, %v3031
        %v3160 = vsel %vm2904, %v2413, %v3032
        %v3161 = vsel %vm2905, %v2751, %v3033
        %v3162 = vsel %vm2906, %v2416, %v3034
        %v3163 = vsel %vm2907, %v2754, %v3035
        %v3164 = vsel %vm2908, %v2418, %v3036
        %v3165 = vsel %vm2909, %v2756, %v3037
        %v3166 = vsel %vm2910, %v2421, %v3038
        %v3167 = vsel %vm2911, %v2759, %v3039
        %v3168 = vsel %vm2912, %v2423, %v3040
        %v3169 = vsel %vm2913, %v2761, %v3041
        %v3170 = vsel %vm2914, %v2426, %v3042
        %v3171 = vsel %vm2915, %v2764, %v3043
        %v3172 = vsel %vm2916, %v2428, %v3044
        %v3173 = vsel %vm2917, %v2766, %v3045
        %v3174 = vsel %vm2918, %v2431, %v3046
        %v3175 = vsel %vm2919, %v2769, %v3047
        %v3176 = vsel %vm2920, %v2433, %v3048
        %v3177 = vsel %vm2921, %v2771, %v3049
        %v3178 = vsel %vm2922, %v2436, %v3050
        %v3179 = vsel %vm2923, %v2774, %v3051
        %v3180 = vsel %vm2924, %v2438, %v3052
        %v3181 = vsel %vm2925, %v2776, %v3053
        %v3182 = vsel %vm2926, %v2441, %v3054
        %v3183 = vsel %vm2927, %v2779, %v3055
        %v3184 = vsel %vm2928, %v2443, %v3056
        %v3185 = vsel %vm2929, %v2781, %v3057
        %v3186 = vsel %vm2930, %v2446, %v3058
        %v3187 = vsel %vm2931, %v2784, %v3059
        %v3188 = vsel %vm2932, %v2448, %v3060
        %v3189 = vsel %vm2933, %v2786, %v3061
        %v3190 = vsel %vm2934, %v2451, %v3062
        %v3191 = vsel %vm2935, %v2789, %v3063
        %v3192 = vsel %vm2936, %v2453, %v3064
        %v3193 = vsel %vm2937, %v2791, %v3065
        %v3194 = vsel %vm2938, %v2456, %v3066
        %v3195 = vsel %vm2939, %v2794, %v3067
        %v3196 = vsel %vm2940, %v2458, %v3068
        %v3197 = vsel %vm2941, %v2796, %v3069
        %v3198 = vsel %vm2942, %v2461, %v3070
        %v3199 = vsel %vm2943, %v2799, %v3071
        %v3200 = vsel %vm2944, %v2463, %v3072
        %v3201 = vsel %vm2945, %v2801, %v3073
        %v3202 = vsel %vm2946, %v2466, %v3074
        %v3203 = vsel %vm2947, %v2804, %v3075
        %v3204 = vsel %vm2948, %v2468, %v3076
        %v3205 = vsel %vm2949, %v2806, %v3077
        %v3206 = vsel %vm2950, %v2471, %v3078
        %v3207 = vsel %vm2951, %v2809, %v3079
        %v3208 = vsel %vm2952, %v2473, %v3080
        %v3209 = vsel %vm2953, %v2811, %v3081
        %v3210 = vsel %vm2954, %v2476, %v3082
        %v3211 = vsel %vm2955, %v2814, %v3083
        %v3212 = vsel %vm2956, %v2478, %v3084
        %v3213 = vsel %vm2957, %v2816, %v3085
        %v3214 = vsel %vm2958, %v2481, %v3086
        %v3215 = vsel %vm2959, %v2819, %v3087
        %v3216 = vsel %vm2960, %v2483, %v3088
        %v3217 = vsel %vm2961, %v2821, %v3089
        %v3218 = vsel %vm2962, %v2486, %v3090
        %v3219 = vsel %vm2963, %v2824, %v3091
        %v3220 = vsel %vm2964, %v2488, %v3092
        %v3221 = vsel %vm2965, %v2826, %v3093
        %v3222 = vsel %vm2966, %v2491, %v3094
        %v3223 = vsel %vm2967, %v2829, %v3095
        %v3224 = vsel %vm2968, %v2493, %v3096
        %v3225 = vsel %vm2969, %v2831, %v3097
        %v3226 = vsel %vm2970, %v2496, %v3098
        %v3227 = vsel %vm2971, %v2834, %v3099
        %v3228 = vsel %vm2972, %v2498, %v3100
        %v3229 = vsel %vm2973, %v2836, %v3101
        %v3230 = vsel %vm2974, %v2501, %v3102
        %v3231 = vsel %vm2975, %v2839, %v3103
        %v3232 = vsel %vm2976, %v2503, %v3104
        %v3233 = vsel %vm2977, %v2841, %v3105
        %v3234 = vsel %vm2978, %v2506, %v3106
        %v3235 = vsel %vm2979, %v2844, %v3107
        %v3236 = vsel %vm2980, %v2508, %v3108
        %v3237 = vsel %vm2981, %v2846, %v3109
        %v3238 = vsel %vm2982, %v2511, %v3110
        %v3239 = vsel %vm2983, %v2849, %v3111
        %v3240 = vsel %vm2984, %v2513, %v3112
        %v3241 = vsel %vm2985, %v2851, %v3113
        %v3242 = vsel %vm2986, %v2516, %v3114
        %v3243 = vsel %vm2987, %v2854, %v3115
        %v3244 = vsel %vm2988, %v2518, %v3116
        %v3245 = vsel %vm2989, %v2856, %v3117
        %v3246 = vsel %vm2990, %v2521, %v3118
        %v3247 = vsel %vm2991, %v2859, %v3119
        %v3248 = vsel %vm2992, %v2523, %v3120
        %v3249 = vsel %vm2993, %v2861, %v3121
        %v3250 = vsel %vm2994, %v2526, %v3122
        %v3251 = vsel %vm2995, %v2864, %v3123
        %v3252 = vsel %vm2996, %v2528, %v3124
        %v3253 = vsel %vm2997, %v2866, %v3125
        %v3254 = vsel %vm2998, %v2531, %v3126
        %v3255 = vsel %vm2999, %v2869, %v3127
        %v3256 = vsel %vm3000, %v2533, %v3128
        %v3257 = vsel %vm3001, %v2871, %v3129
        %v3258 = vsel %vm3002, %v2536, %v3130
        %v3259 = vsel %vm3003, %v2874, %v3131
        %v3260 = vsel %vm3004, %v2538, %v3132
        %v3261 = vsel %vm3005, %v2876, %v3133
        %v3262 = vld [vmem:[%s509] sm:$0xff]
        %v3263 = vld [vmem:[%s509 + $0x8] sm:$0xff]
        %v3264 = vld [vmem:[%s509 + $0x10] sm:$0xff]
        %v3265 = vld [vmem:[%s509 + $0x18] sm:$0xff]
        %v3266 = vld [vmem:[%s509 + $0x20] sm:$0xff]
        %v3267 = vld [vmem:[%s509 + $0x28] sm:$0xff]
        %v3268 = vld [vmem:[%s509 + $0x30] sm:$0xff]
        %v3269 = vld [vmem:[%s509 + $0x38] sm:$0xff]
        %v3270 = vld [vmem:[%s509 + $0x40] sm:$0xff]
        %v3271 = vld [vmem:[%s509 + $0x48] sm:$0xff]
        %v3272 = vld [vmem:[%s509 + $0x50] sm:$0xff]
        %v3273 = vld [vmem:[%s509 + $0x58] sm:$0xff]
        %v3274 = vld [vmem:[%s509 + $0x60] sm:$0xff]
        %v3275 = vld [vmem:[%s509 + $0x68] sm:$0xff]
        %v3276 = vld [vmem:[%s509 + $0x70] sm:$0xff]
        %v3277 = vld [vmem:[%s509 + $0x78] sm:$0xff]
        %v3278 = vld [vmem:[%s509 + $0x80] sm:$0xff]
        %v3279 = vld [vmem:[%s509 + $0x88] sm:$0xff]
        %v3280 = vld [vmem:[%s509 + $0x90] sm:$0xff]
        %v3281 = vld [vmem:[%s509 + $0x98] sm:$0xff]
        %v3282 = vld [vmem:[%s509 + $0xa0] sm:$0xff]
        %v3283 = vld [vmem:[%s509 + $0xa8] sm:$0xff]
        %v3284 = vld [vmem:[%s509 + $0xb0] sm:$0xff]
        %v3285 = vld [vmem:[%s509 + $0xb8] sm:$0xff]
        %v3286 = vld [vmem:[%s509 + $0xc0] sm:$0xff]
        %v3287 = vld [vmem:[%s509 + $0xc8] sm:$0xff]
        %v3288 = vld [vmem:[%s509 + $0xd0] sm:$0xff]
        %v3289 = vld [vmem:[%s509 + $0xd8] sm:$0xff]
        %v3290 = vld [vmem:[%s509 + $0xe0] sm:$0xff]
        %v3291 = vld [vmem:[%s509 + $0xe8] sm:$0xff]
        %v3292 = vld [vmem:[%s509 + $0xf0] sm:$0xff]
        %v3293 = vld [vmem:[%s509 + $0xf8] sm:$0xff]
        %v3294 = vld [vmem:[%s509 + $0x100] sm:$0xff]
        %v3295 = vld [vmem:[%s509 + $0x108] sm:$0xff]
        %v3296 = vld [vmem:[%s509 + $0x110] sm:$0xff]
        %v3297 = vld [vmem:[%s509 + $0x118] sm:$0xff]
        %v3298 = vld [vmem:[%s509 + $0x120] sm:$0xff]
        %v3299 = vld [vmem:[%s509 + $0x128] sm:$0xff]
        %v3300 = vld [vmem:[%s509 + $0x130] sm:$0xff]
        %v3301 = vld [vmem:[%s509 + $0x138] sm:$0xff]
        %v3302 = vld [vmem:[%s509 + $0x140] sm:$0xff]
        %v3303 = vld [vmem:[%s509 + $0x148] sm:$0xff]
        %v3304 = vld [vmem:[%s509 + $0x150] sm:$0xff]
        %v3305 = vld [vmem:[%s509 + $0x158] sm:$0xff]
        %v3306 = vld [vmem:[%s509 + $0x160] sm:$0xff]
        %v3307 = vld [vmem:[%s509 + $0x168] sm:$0xff]
        %v3308 = vld [vmem:[%s509 + $0x170] sm:$0xff]
        %v3309 = vld [vmem:[%s509 + $0x178] sm:$0xff]
        %v3310 = vld [vmem:[%s509 + $0x180] sm:$0xff]
        %v3311 = vld [vmem:[%s509 + $0x188] sm:$0xff]
        %v3312 = vld [vmem:[%s509 + $0x190] sm:$0xff]
        %v3313 = vld [vmem:[%s509 + $0x198] sm:$0xff]
        %v3314 = vld [vmem:[%s509 + $0x1a0] sm:$0xff]
        %v3315 = vld [vmem:[%s509 + $0x1a8] sm:$0xff]
        %v3316 = vld [vmem:[%s509 + $0x1b0] sm:$0xff]
        %v3317 = vld [vmem:[%s509 + $0x1b8] sm:$0xff]
        %v3318 = vld [vmem:[%s509 + $0x1c0] sm:$0xff]
        %v3319 = vld [vmem:[%s509 + $0x1c8] sm:$0xff]
        %v3320 = vld [vmem:[%s509 + $0x1d0] sm:$0xff]
        %v3321 = vld [vmem:[%s509 + $0x1d8] sm:$0xff]
        %v3322 = vld [vmem:[%s509 + $0x1e0] sm:$0xff]
        %v3323 = vld [vmem:[%s509 + $0x1e8] sm:$0xff]
        %v3324 = vld [vmem:[%s509 + $0x1f0] sm:$0xff]
        %v3325 = vld [vmem:[%s509 + $0x1f8] sm:$0xff]
        %v3326 = vpack.c.bf16 %v3136, %v3134
        %v3327 = vpack.c.bf16 %v3137, %v3135
        %v3328 = vpack.c.bf16 %v3140, %v3138
        %v3329 = vpack.c.bf16 %v3141, %v3139
        %v3330 = vpack.c.bf16 %v3144, %v3142
        %v3331 = vpack.c.bf16 %v3145, %v3143
        %v3332 = vpack.c.bf16 %v3148, %v3146
        %v3333 = vpack.c.bf16 %v3149, %v3147
        %v3334 = vpack.c.bf16 %v3152, %v3150
        %v3335 = vpack.c.bf16 %v3153, %v3151
        %v3336 = vpack.c.bf16 %v3156, %v3154
        %v3337 = vpack.c.bf16 %v3157, %v3155
        %v3338 = vpack.c.bf16 %v3160, %v3158
        %v3339 = vpack.c.bf16 %v3161, %v3159
        %v3340 = vpack.c.bf16 %v3164, %v3162
        %v3341 = vpack.c.bf16 %v3165, %v3163
        %v3342 = vpack.c.bf16 %v3168, %v3166
        %v3343 = vpack.c.bf16 %v3169, %v3167
        %v3344 = vpack.c.bf16 %v3172, %v3170
        %v3345 = vpack.c.bf16 %v3173, %v3171
        %v3346 = vpack.c.bf16 %v3176, %v3174
        %v3347 = vpack.c.bf16 %v3177, %v3175
        %v3348 = vpack.c.bf16 %v3180, %v3178
        %v3349 = vpack.c.bf16 %v3181, %v3179
        %v3350 = vpack.c.bf16 %v3184, %v3182
        %v3351 = vpack.c.bf16 %v3185, %v3183
        %v3352 = vpack.c.bf16 %v3188, %v3186
        %v3353 = vpack.c.bf16 %v3189, %v3187
        %v3354 = vpack.c.bf16 %v3192, %v3190
        %v3355 = vpack.c.bf16 %v3193, %v3191
        %v3356 = vpack.c.bf16 %v3196, %v3194
        %v3357 = vpack.c.bf16 %v3197, %v3195
        %v3358 = vpack.c.bf16 %v3200, %v3198
        %v3359 = vpack.c.bf16 %v3201, %v3199
        %v3360 = vpack.c.bf16 %v3204, %v3202
        %v3361 = vpack.c.bf16 %v3205, %v3203
        %v3362 = vpack.c.bf16 %v3208, %v3206
        %v3363 = vpack.c.bf16 %v3209, %v3207
        %v3364 = vpack.c.bf16 %v3212, %v3210
        %v3365 = vpack.c.bf16 %v3213, %v3211
        %v3366 = vpack.c.bf16 %v3216, %v3214
        %v3367 = vpack.c.bf16 %v3217, %v3215
        %v3368 = vpack.c.bf16 %v3220, %v3218
        %v3369 = vpack.c.bf16 %v3221, %v3219
        %v3370 = vpack.c.bf16 %v3224, %v3222
        %v3371 = vpack.c.bf16 %v3225, %v3223
        %v3372 = vpack.c.bf16 %v3228, %v3226
        %v3373 = vpack.c.bf16 %v3229, %v3227
        %v3374 = vpack.c.bf16 %v3232, %v3230
        %v3375 = vpack.c.bf16 %v3233, %v3231
        %v3376 = vpack.c.bf16 %v3236, %v3234
        %v3377 = vpack.c.bf16 %v3237, %v3235
        %v3378 = vpack.c.bf16 %v3240, %v3238
        %v3379 = vpack.c.bf16 %v3241, %v3239
        %v3380 = vpack.c.bf16 %v3244, %v3242
        %v3381 = vpack.c.bf16 %v3245, %v3243
        %v3382 = vpack.c.bf16 %v3248, %v3246
        %v3383 = vpack.c.bf16 %v3249, %v3247
        %v3384 = vpack.c.bf16 %v3252, %v3250
        %v3385 = vpack.c.bf16 %v3253, %v3251
        %v3386 = vpack.c.bf16 %v3256, %v3254
        %v3387 = vpack.c.bf16 %v3257, %v3255
        %v3388 = vpack.c.bf16 %v3260, %v3258
        %v3389 = vpack.c.bf16 %v3261, %v3259
        %v3390 = vld [vmem:[%s642] sm:$0xff]
        %v3391 = vld [vmem:[%s642 + $0x8] sm:$0xff]
        %v3392 = vld [vmem:[%s642 + $0x10] sm:$0xff]
        %v3393 = vld [vmem:[%s642 + $0x18] sm:$0xff]
        %v3394 = vld [vmem:[%s642 + $0x20] sm:$0xff]
        %v3395 = vld [vmem:[%s642 + $0x28] sm:$0xff]
        %v3396 = vld [vmem:[%s642 + $0x30] sm:$0xff]
        %v3397 = vld [vmem:[%s642 + $0x38] sm:$0xff]
        %v3398 = vld [vmem:[%s642 + $0x40] sm:$0xff]
        %v3399 = vld [vmem:[%s642 + $0x48] sm:$0xff]
        %v3400 = vld [vmem:[%s642 + $0x50] sm:$0xff]
        %v3401 = vld [vmem:[%s642 + $0x58] sm:$0xff]
        %v3402 = vld [vmem:[%s642 + $0x60] sm:$0xff]
        %v3403 = vld [vmem:[%s642 + $0x68] sm:$0xff]
        %v3404 = vld [vmem:[%s642 + $0x70] sm:$0xff]
        %v3405 = vld [vmem:[%s642 + $0x78] sm:$0xff]
        %v3406 = vld [vmem:[%s642 + $0x80] sm:$0xff]
        %v3407 = vld [vmem:[%s642 + $0x88] sm:$0xff]
        %v3408 = vld [vmem:[%s642 + $0x90] sm:$0xff]
        %v3409 = vld [vmem:[%s642 + $0x98] sm:$0xff]
        %v3410 = vld [vmem:[%s642 + $0xa0] sm:$0xff]
        %v3411 = vld [vmem:[%s642 + $0xa8] sm:$0xff]
        %v3412 = vld [vmem:[%s642 + $0xb0] sm:$0xff]
        %v3413 = vld [vmem:[%s642 + $0xb8] sm:$0xff]
        %v3414 = vld [vmem:[%s642 + $0xc0] sm:$0xff]
        %v3415 = vld [vmem:[%s642 + $0xc8] sm:$0xff]
        %v3416 = vld [vmem:[%s642 + $0xd0] sm:$0xff]
        %v3417 = vld [vmem:[%s642 + $0xd8] sm:$0xff]
        %v3418 = vld [vmem:[%s642 + $0xe0] sm:$0xff]
        %v3419 = vld [vmem:[%s642 + $0xe8] sm:$0xff]
        %v3420 = vld [vmem:[%s642 + $0xf0] sm:$0xff]
        %v3421 = vld [vmem:[%s642 + $0xf8] sm:$0xff]
        %3423 = vset.pattern.permute.xlu0 0
        %3424 = vperm.xlu0 %3423, %v3390
        %v3425 = vpop.permute.xlu0 %3424
        %3428 = vset.pattern.permute.xlu0 0
        %3429 = vperm.xlu0 %3428, %v3391
        %v3430 = vpop.permute.xlu0 %3429
        %3433 = vset.pattern.permute.xlu0 0
        %3434 = vperm.xlu0 %3433, %v3392
        %v3435 = vpop.permute.xlu0 %3434
        %3438 = vset.pattern.permute.xlu0 0
        %3439 = vperm.xlu0 %3438, %v3393
        %v3440 = vpop.permute.xlu0 %3439
        %3443 = vset.pattern.permute.xlu0 0
        %3444 = vperm.xlu0 %3443, %v3394
        %v3445 = vpop.permute.xlu0 %3444
        %3448 = vset.pattern.permute.xlu0 0
        %3449 = vperm.xlu0 %3448, %v3395
        %v3450 = vpop.permute.xlu0 %3449
        %3453 = vset.pattern.permute.xlu0 0
        %3454 = vperm.xlu0 %3453, %v3396
        %v3455 = vpop.permute.xlu0 %3454
        %3458 = vset.pattern.permute.xlu0 0
        %3459 = vperm.xlu0 %3458, %v3397
        %v3460 = vpop.permute.xlu0 %3459
        %3463 = vset.pattern.permute.xlu0 0
        %3464 = vperm.xlu0 %3463, %v3398
        %v3465 = vpop.permute.xlu0 %3464
        %3468 = vset.pattern.permute.xlu0 0
        %3469 = vperm.xlu0 %3468, %v3399
        %v3470 = vpop.permute.xlu0 %3469
        %3473 = vset.pattern.permute.xlu0 0
        %3474 = vperm.xlu0 %3473, %v3400
        %v3475 = vpop.permute.xlu0 %3474
        %3478 = vset.pattern.permute.xlu0 0
        %3479 = vperm.xlu0 %3478, %v3401
        %v3480 = vpop.permute.xlu0 %3479
        %3483 = vset.pattern.permute.xlu0 0
        %3484 = vperm.xlu0 %3483, %v3402
        %v3485 = vpop.permute.xlu0 %3484
        %3488 = vset.pattern.permute.xlu0 0
        %3489 = vperm.xlu0 %3488, %v3403
        %v3490 = vpop.permute.xlu0 %3489
        %3493 = vset.pattern.permute.xlu0 0
        %3494 = vperm.xlu0 %3493, %v3404
        %v3495 = vpop.permute.xlu0 %3494
        %3498 = vset.pattern.permute.xlu0 0
        %3499 = vperm.xlu0 %3498, %v3405
        %v3500 = vpop.permute.xlu0 %3499
        %3503 = vset.pattern.permute.xlu0 0
        %3504 = vperm.xlu0 %3503, %v3406
        %v3505 = vpop.permute.xlu0 %3504
        %3508 = vset.pattern.permute.xlu0 0
        %3509 = vperm.xlu0 %3508, %v3407
        %v3510 = vpop.permute.xlu0 %3509
        %3513 = vset.pattern.permute.xlu0 0
        %3514 = vperm.xlu0 %3513, %v3408
        %v3515 = vpop.permute.xlu0 %3514
        %3518 = vset.pattern.permute.xlu0 0
        %3519 = vperm.xlu0 %3518, %v3409
        %v3520 = vpop.permute.xlu0 %3519
        %3523 = vset.pattern.permute.xlu0 0
        %3524 = vperm.xlu0 %3523, %v3410
        %v3525 = vpop.permute.xlu0 %3524
        %3528 = vset.pattern.permute.xlu0 0
        %3529 = vperm.xlu0 %3528, %v3411
        %v3530 = vpop.permute.xlu0 %3529
        %3533 = vset.pattern.permute.xlu0 0
        %3534 = vperm.xlu0 %3533, %v3412
        %v3535 = vpop.permute.xlu0 %3534
        %3538 = vset.pattern.permute.xlu0 0
        %3539 = vperm.xlu0 %3538, %v3413
        %v3540 = vpop.permute.xlu0 %3539
        %3543 = vset.pattern.permute.xlu0 0
        %3544 = vperm.xlu0 %3543, %v3414
        %v3545 = vpop.permute.xlu0 %3544
        %3548 = vset.pattern.permute.xlu0 0
        %3549 = vperm.xlu0 %3548, %v3415
        %v3550 = vpop.permute.xlu0 %3549
        %3553 = vset.pattern.permute.xlu0 0
        %3554 = vperm.xlu0 %3553, %v3416
        %v3555 = vpop.permute.xlu0 %3554
        %3558 = vset.pattern.permute.xlu0 0
        %3559 = vperm.xlu0 %3558, %v3417
        %v3560 = vpop.permute.xlu0 %3559
        %3563 = vset.pattern.permute.xlu0 0
        %3564 = vperm.xlu0 %3563, %v3418
        %v3565 = vpop.permute.xlu0 %3564
        %3568 = vset.pattern.permute.xlu0 0
        %3569 = vperm.xlu0 %3568, %v3419
        %v3570 = vpop.permute.xlu0 %3569
        %3573 = vset.pattern.permute.xlu0 0
        %3574 = vperm.xlu0 %3573, %v3420
        %v3575 = vpop.permute.xlu0 %3574
        %3578 = vset.pattern.permute.xlu0 0
        %3579 = vperm.xlu0 %3578, %v3421
        %v3580 = vpop.permute.xlu0 %3579
        %v3646 = vunpack.c.l.b16 %v3262
        %v3647 = vunpack.c.h.b16 %v3262
        %v3648 = vunpack.c.l.b16 %v3263
        %v3649 = vunpack.c.h.b16 %v3263
        %v3650 = vunpack.c.l.b16 %v3264
        %v3651 = vunpack.c.h.b16 %v3264
        %v3652 = vunpack.c.l.b16 %v3265
        %v3653 = vunpack.c.h.b16 %v3265
        %v3654 = vunpack.c.l.b16 %v3266
        %v3655 = vunpack.c.h.b16 %v3266
        %v3656 = vunpack.c.l.b16 %v3267
        %v3657 = vunpack.c.h.b16 %v3267
        %v3658 = vunpack.c.l.b16 %v3268
        %v3659 = vunpack.c.h.b16 %v3268
        %v3660 = vunpack.c.l.b16 %v3269
        %v3661 = vunpack.c.h.b16 %v3269
        %v3662 = vunpack.c.l.b16 %v3270
        %v3663 = vunpack.c.h.b16 %v3270
        %v3664 = vunpack.c.l.b16 %v3271
        %v3665 = vunpack.c.h.b16 %v3271
        %v3666 = vunpack.c.l.b16 %v3272
        %v3667 = vunpack.c.h.b16 %v3272
        %v3668 = vunpack.c.l.b16 %v3273
        %v3669 = vunpack.c.h.b16 %v3273
        %v3670 = vunpack.c.l.b16 %v3274
        %v3671 = vunpack.c.h.b16 %v3274
        %v3672 = vunpack.c.l.b16 %v3275
        %v3673 = vunpack.c.h.b16 %v3275
        %v3674 = vunpack.c.l.b16 %v3276
        %v3675 = vunpack.c.h.b16 %v3276
        %v3676 = vunpack.c.l.b16 %v3277
        %v3677 = vunpack.c.h.b16 %v3277
        %v3678 = vunpack.c.l.b16 %v3278
        %v3679 = vunpack.c.h.b16 %v3278
        %v3680 = vunpack.c.l.b16 %v3279
        %v3681 = vunpack.c.h.b16 %v3279
        %v3682 = vunpack.c.l.b16 %v3280
        %v3683 = vunpack.c.h.b16 %v3280
        %v3684 = vunpack.c.l.b16 %v3281
        %v3685 = vunpack.c.h.b16 %v3281
        %v3686 = vunpack.c.l.b16 %v3282
        %v3687 = vunpack.c.h.b16 %v3282
        %v3688 = vunpack.c.l.b16 %v3283
        %v3689 = vunpack.c.h.b16 %v3283
        %v3690 = vunpack.c.l.b16 %v3284
        %v3691 = vunpack.c.h.b16 %v3284
        %v3692 = vunpack.c.l.b16 %v3285
        %v3693 = vunpack.c.h.b16 %v3285
        %v3694 = vunpack.c.l.b16 %v3286
        %v3695 = vunpack.c.h.b16 %v3286
        %v3696 = vunpack.c.l.b16 %v3287
        %v3697 = vunpack.c.h.b16 %v3287
        %v3698 = vunpack.c.l.b16 %v3288
        %v3699 = vunpack.c.h.b16 %v3288
        %v3700 = vunpack.c.l.b16 %v3289
        %v3701 = vunpack.c.h.b16 %v3289
        %v3702 = vunpack.c.l.b16 %v3290
        %v3703 = vunpack.c.h.b16 %v3290
        %v3704 = vunpack.c.l.b16 %v3291
        %v3705 = vunpack.c.h.b16 %v3291
        %v3706 = vunpack.c.l.b16 %v3292
        %v3707 = vunpack.c.h.b16 %v3292
        %v3708 = vunpack.c.l.b16 %v3293
        %v3709 = vunpack.c.h.b16 %v3293
        %v3710 = vunpack.c.l.b16 %v3294
        %v3711 = vunpack.c.h.b16 %v3294
        %v3712 = vunpack.c.l.b16 %v3295
        %v3713 = vunpack.c.h.b16 %v3295
        %v3714 = vunpack.c.l.b16 %v3296
        %v3715 = vunpack.c.h.b16 %v3296
        %v3716 = vunpack.c.l.b16 %v3297
        %v3717 = vunpack.c.h.b16 %v3297
        %v3718 = vunpack.c.l.b16 %v3298
        %v3719 = vunpack.c.h.b16 %v3298
        %v3720 = vunpack.c.l.b16 %v3299
        %v3721 = vunpack.c.h.b16 %v3299
        %v3722 = vunpack.c.l.b16 %v3300
        %v3723 = vunpack.c.h.b16 %v3300
        %v3724 = vunpack.c.l.b16 %v3301
        %v3725 = vunpack.c.h.b16 %v3301
        %v3726 = vunpack.c.l.b16 %v3302
        %v3727 = vunpack.c.h.b16 %v3302
        %v3728 = vunpack.c.l.b16 %v3303
        %v3729 = vunpack.c.h.b16 %v3303
        %v3730 = vunpack.c.l.b16 %v3304
        %v3731 = vunpack.c.h.b16 %v3304
        %v3732 = vunpack.c.l.b16 %v3305
        %v3733 = vunpack.c.h.b16 %v3305
        %v3734 = vunpack.c.l.b16 %v3306
        %v3735 = vunpack.c.h.b16 %v3306
        %v3736 = vunpack.c.l.b16 %v3307
        %v3737 = vunpack.c.h.b16 %v3307
        %v3738 = vunpack.c.l.b16 %v3308
        %v3739 = vunpack.c.h.b16 %v3308
        %v3740 = vunpack.c.l.b16 %v3309
        %v3741 = vunpack.c.h.b16 %v3309
        %v3742 = vunpack.c.l.b16 %v3310
        %v3743 = vunpack.c.h.b16 %v3310
        %v3744 = vunpack.c.l.b16 %v3311
        %v3745 = vunpack.c.h.b16 %v3311
        %v3746 = vunpack.c.l.b16 %v3312
        %v3747 = vunpack.c.h.b16 %v3312
        %v3748 = vunpack.c.l.b16 %v3313
        %v3749 = vunpack.c.h.b16 %v3313
        %v3750 = vunpack.c.l.b16 %v3314
        %v3751 = vunpack.c.h.b16 %v3314
        %v3752 = vunpack.c.l.b16 %v3315
        %v3753 = vunpack.c.h.b16 %v3315
        %v3754 = vunpack.c.l.b16 %v3316
        %v3755 = vunpack.c.h.b16 %v3316
        %v3756 = vunpack.c.l.b16 %v3317
        %v3757 = vunpack.c.h.b16 %v3317
        %v3758 = vunpack.c.l.b16 %v3318
        %v3759 = vunpack.c.h.b16 %v3318
        %v3760 = vunpack.c.l.b16 %v3319
        %v3761 = vunpack.c.h.b16 %v3319
        %v3762 = vunpack.c.l.b16 %v3320
        %v3763 = vunpack.c.h.b16 %v3320
        %v3764 = vunpack.c.l.b16 %v3321
        %v3765 = vunpack.c.h.b16 %v3321
        %v3766 = vunpack.c.l.b16 %v3322
        %v3767 = vunpack.c.h.b16 %v3322
        %v3768 = vunpack.c.l.b16 %v3323
        %v3769 = vunpack.c.h.b16 %v3323
        %v3770 = vunpack.c.l.b16 %v3324
        %v3771 = vunpack.c.h.b16 %v3324
        %v3772 = vunpack.c.l.b16 %v3325
        %v3773 = vunpack.c.h.b16 %v3325
        %v3774 = vpack.c.b16 %v3650, %v3646
        %v3775 = vpack.c.b16 %v3651, %v3647
        %v3776 = vpack.c.b16 %v3652, %v3648
        %v3777 = vpack.c.b16 %v3653, %v3649
        %v3778 = vpack.c.b16 %v3658, %v3654
        %v3779 = vpack.c.b16 %v3659, %v3655
        %v3780 = vpack.c.b16 %v3660, %v3656
        %v3781 = vpack.c.b16 %v3661, %v3657
        %v3782 = vpack.c.b16 %v3666, %v3662
        %v3783 = vpack.c.b16 %v3667, %v3663
        %v3784 = vpack.c.b16 %v3668, %v3664
        %v3785 = vpack.c.b16 %v3669, %v3665
        %v3786 = vpack.c.b16 %v3674, %v3670
        %v3787 = vpack.c.b16 %v3675, %v3671
        %v3788 = vpack.c.b16 %v3676, %v3672
        %v3789 = vpack.c.b16 %v3677, %v3673
        %v3790 = vpack.c.b16 %v3682, %v3678
        %v3791 = vpack.c.b16 %v3683, %v3679
        %v3792 = vpack.c.b16 %v3684, %v3680
        %v3793 = vpack.c.b16 %v3685, %v3681
        %v3794 = vpack.c.b16 %v3690, %v3686
        %v3795 = vpack.c.b16 %v3691, %v3687
        %v3796 = vpack.c.b16 %v3692, %v3688
        %v3797 = vpack.c.b16 %v3693, %v3689
        %v3798 = vpack.c.b16 %v3698, %v3694
        %v3799 = vpack.c.b16 %v3699, %v3695
        %v3800 = vpack.c.b16 %v3700, %v3696
        %v3801 = vpack.c.b16 %v3701, %v3697
        %v3802 = vpack.c.b16 %v3706, %v3702
        %v3803 = vpack.c.b16 %v3707, %v3703
        %v3804 = vpack.c.b16 %v3708, %v3704
        %v3805 = vpack.c.b16 %v3709, %v3705
        %v3806 = vpack.c.b16 %v3714, %v3710
        %v3807 = vpack.c.b16 %v3715, %v3711
        %v3808 = vpack.c.b16 %v3716, %v3712
        %v3809 = vpack.c.b16 %v3717, %v3713
        %v3810 = vpack.c.b16 %v3722, %v3718
        %v3811 = vpack.c.b16 %v3723, %v3719
        %v3812 = vpack.c.b16 %v3724, %v3720
        %v3813 = vpack.c.b16 %v3725, %v3721
        %v3814 = vpack.c.b16 %v3730, %v3726
        %v3815 = vpack.c.b16 %v3731, %v3727
        %v3816 = vpack.c.b16 %v3732, %v3728
        %v3817 = vpack.c.b16 %v3733, %v3729
        %v3818 = vpack.c.b16 %v3738, %v3734
        %v3819 = vpack.c.b16 %v3739, %v3735
        %v3820 = vpack.c.b16 %v3740, %v3736
        %v3821 = vpack.c.b16 %v3741, %v3737
        %v3822 = vpack.c.b16 %v3746, %v3742
        %v3823 = vpack.c.b16 %v3747, %v3743
        %v3824 = vpack.c.b16 %v3748, %v3744
        %v3825 = vpack.c.b16 %v3749, %v3745
        %v3826 = vpack.c.b16 %v3754, %v3750
        %v3827 = vpack.c.b16 %v3755, %v3751
        %v3828 = vpack.c.b16 %v3756, %v3752
        %v3829 = vpack.c.b16 %v3757, %v3753
        %v3830 = vpack.c.b16 %v3762, %v3758
        %v3831 = vpack.c.b16 %v3763, %v3759
        %v3832 = vpack.c.b16 %v3764, %v3760
        %v3833 = vpack.c.b16 %v3765, %v3761
        %v3834 = vpack.c.b16 %v3770, %v3766
        %v3835 = vpack.c.b16 %v3771, %v3767
        %v3836 = vpack.c.b16 %v3772, %v3768
        %v3837 = vpack.c.b16 %v3773, %v3769
        %3902 = vmatpush.bf16.msra.mxu0 %v3340
        %3903 = vmatpush.bf16.msra.mxu0 %v3338
        %3904 = vmatpush.bf16.msra.mxu0 %v3336
        %3905 = vmatpush.bf16.msra.mxu0 %v3334
        %3906 = vmatpush.bf16.msra.mxu0 %v3332
        %3907 = vmatpush.bf16.msra.mxu0 %v3330
        %3908 = vmatpush.bf16.msra.mxu0 %v3328
        %3909 = vmatpush.bf16.msra.mxu0 %v3326
        %3910 = vmatmul.bf16.gmra.mxu0 %v3774
        %v3911 = vpop.f32.mrf.mxu0
        %v3912 = vadd.f32 %v3425, %v3911
        %v3913 = vpop.f32.mrf.mxu0
        %v3914 = vadd.f32 %v3430, %v3913
        %3915 = vmatmul.bf16.gmra.mxu0 %v3778
        %v3916 = vpop.f32.mrf.mxu0
        %v3917 = vadd.f32 %v3435, %v3916
        %v3918 = vpop.f32.mrf.mxu0
        %v3919 = vadd.f32 %v3440, %v3918
        %3920 = vmatmul.bf16.gmra.mxu0 %v3782
        %v3921 = vpop.f32.mrf.mxu0
        %v3922 = vadd.f32 %v3445, %v3921
        %v3923 = vpop.f32.mrf.mxu0
        %v3924 = vadd.f32 %v3450, %v3923
        %3925 = vmatmul.bf16.gmra.mxu0 %v3786
        %v3926 = vpop.f32.mrf.mxu0
        %v3927 = vadd.f32 %v3455, %v3926
        %v3928 = vpop.f32.mrf.mxu0
        %v3929 = vadd.f32 %v3460, %v3928
        %3930 = vmatmul.bf16.gmra.mxu0 %v3790
        %v3931 = vpop.f32.mrf.mxu0
        %v3932 = vadd.f32 %v3465, %v3931
        %v3933 = vpop.f32.mrf.mxu0
        %v3934 = vadd.f32 %v3470, %v3933
        %3935 = vmatmul.bf16.gmra.mxu0 %v3794
        %v3936 = vpop.f32.mrf.mxu0
        %v3937 = vadd.f32 %v3475, %v3936
        %v3938 = vpop.f32.mrf.mxu0
        %v3939 = vadd.f32 %v3480, %v3938
        %3940 = vmatmul.bf16.gmra.mxu0 %v3798
        %v3941 = vpop.f32.mrf.mxu0
        %v3942 = vadd.f32 %v3485, %v3941
        %v3943 = vpop.f32.mrf.mxu0
        %v3944 = vadd.f32 %v3490, %v3943
        %3945 = vmatmul.bf16.gmra.mxu0 %v3802
        %v3946 = vpop.f32.mrf.mxu0
        %v3947 = vadd.f32 %v3495, %v3946
        %v3948 = vpop.f32.mrf.mxu0
        %v3949 = vadd.f32 %v3500, %v3948
        %3950 = vmatmul.bf16.gmra.mxu0 %v3806
        %v3951 = vpop.f32.mrf.mxu0
        %v3952 = vadd.f32 %v3505, %v3951
        %v3953 = vpop.f32.mrf.mxu0
        %v3954 = vadd.f32 %v3510, %v3953
        %3955 = vmatmul.bf16.gmra.mxu0 %v3810
        %v3956 = vpop.f32.mrf.mxu0
        %v3957 = vadd.f32 %v3515, %v3956
        %v3958 = vpop.f32.mrf.mxu0
        %v3959 = vadd.f32 %v3520, %v3958
        %3960 = vmatmul.bf16.gmra.mxu0 %v3814
        %v3961 = vpop.f32.mrf.mxu0
        %v3962 = vadd.f32 %v3525, %v3961
        %v3963 = vpop.f32.mrf.mxu0
        %v3964 = vadd.f32 %v3530, %v3963
        %3965 = vmatmul.bf16.gmra.mxu0 %v3818
        %v3966 = vpop.f32.mrf.mxu0
        %v3967 = vadd.f32 %v3535, %v3966
        %v3968 = vpop.f32.mrf.mxu0
        %v3969 = vadd.f32 %v3540, %v3968
        %3970 = vmatmul.bf16.gmra.mxu0 %v3822
        %v3971 = vpop.f32.mrf.mxu0
        %v3972 = vadd.f32 %v3545, %v3971
        %v3973 = vpop.f32.mrf.mxu0
        %v3974 = vadd.f32 %v3550, %v3973
        %3975 = vmatmul.bf16.gmra.mxu0 %v3826
        %v3976 = vpop.f32.mrf.mxu0
        %v3977 = vadd.f32 %v3555, %v3976
        %v3978 = vpop.f32.mrf.mxu0
        %v3979 = vadd.f32 %v3560, %v3978
        %3980 = vmatmul.bf16.gmra.mxu0 %v3830
        %v3981 = vpop.f32.mrf.mxu0
        %v3982 = vadd.f32 %v3565, %v3981
        %v3983 = vpop.f32.mrf.mxu0
        %v3984 = vadd.f32 %v3570, %v3983
        %3985 = vmatmul.bf16.gmra.mxu0 %v3834
        %v3986 = vpop.f32.mrf.mxu0
        %v3987 = vadd.f32 %v3575, %v3986
        %v3988 = vpop.f32.mrf.mxu0
        %v3989 = vadd.f32 %v3580, %v3988
        %3990 = vdwg.mxu0
        %3991 = vmatpush.bf16.msra.mxu0 %v3356
        %3992 = vmatpush.bf16.msra.mxu0 %v3354
        %3993 = vmatpush.bf16.msra.mxu0 %v3352
        %3994 = vmatpush.bf16.msra.mxu0 %v3350
        %3995 = vmatpush.bf16.msra.mxu0 %v3348
        %3996 = vmatpush.bf16.msra.mxu0 %v3346
        %3997 = vmatpush.bf16.msra.mxu0 %v3344
        %3998 = vmatpush.bf16.msra.mxu0 %v3342
        %3999 = vmatmul.bf16.gmra.mxu0 %v3775
        %v4000 = vpop.f32.mrf.mxu0
        %v4001 = vadd.f32 %v3912, %v4000
        %v4002 = vpop.f32.mrf.mxu0
        %v4003 = vadd.f32 %v3914, %v4002
        %4004 = vmatmul.bf16.gmra.mxu0 %v3779
        %v4005 = vpop.f32.mrf.mxu0
        %v4006 = vadd.f32 %v3917, %v4005
        %v4007 = vpop.f32.mrf.mxu0
        %v4008 = vadd.f32 %v3919, %v4007
        %4009 = vmatmul.bf16.gmra.mxu0 %v3783
        %v4010 = vpop.f32.mrf.mxu0
        %v4011 = vadd.f32 %v3922, %v4010
        %v4012 = vpop.f32.mrf.mxu0
        %v4013 = vadd.f32 %v3924, %v4012
        %4014 = vmatmul.bf16.gmra.mxu0 %v3787
        %v4015 = vpop.f32.mrf.mxu0
        %v4016 = vadd.f32 %v3927, %v4015
        %v4017 = vpop.f32.mrf.mxu0
        %v4018 = vadd.f32 %v3929, %v4017
        %4019 = vmatmul.bf16.gmra.mxu0 %v3791
        %v4020 = vpop.f32.mrf.mxu0
        %v4021 = vadd.f32 %v3932, %v4020
        %v4022 = vpop.f32.mrf.mxu0
        %v4023 = vadd.f32 %v3934, %v4022
        %4024 = vmatmul.bf16.gmra.mxu0 %v3795
        %v4025 = vpop.f32.mrf.mxu0
        %v4026 = vadd.f32 %v3937, %v4025
        %v4027 = vpop.f32.mrf.mxu0
        %v4028 = vadd.f32 %v3939, %v4027
        %4029 = vmatmul.bf16.gmra.mxu0 %v3799
        %v4030 = vpop.f32.mrf.mxu0
        %v4031 = vadd.f32 %v3942, %v4030
        %v4032 = vpop.f32.mrf.mxu0
        %v4033 = vadd.f32 %v3944, %v4032
        %4034 = vmatmul.bf16.gmra.mxu0 %v3803
        %v4035 = vpop.f32.mrf.mxu0
        %v4036 = vadd.f32 %v3947, %v4035
        %v4037 = vpop.f32.mrf.mxu0
        %v4038 = vadd.f32 %v3949, %v4037
        %4039 = vmatmul.bf16.gmra.mxu0 %v3807
        %v4040 = vpop.f32.mrf.mxu0
        %v4041 = vadd.f32 %v3952, %v4040
        %v4042 = vpop.f32.mrf.mxu0
        %v4043 = vadd.f32 %v3954, %v4042
        %4044 = vmatmul.bf16.gmra.mxu0 %v3811
        %v4045 = vpop.f32.mrf.mxu0
        %v4046 = vadd.f32 %v3957, %v4045
        %v4047 = vpop.f32.mrf.mxu0
        %v4048 = vadd.f32 %v3959, %v4047
        %4049 = vmatmul.bf16.gmra.mxu0 %v3815
        %v4050 = vpop.f32.mrf.mxu0
        %v4051 = vadd.f32 %v3962, %v4050
        %v4052 = vpop.f32.mrf.mxu0
        %v4053 = vadd.f32 %v3964, %v4052
        %4054 = vmatmul.bf16.gmra.mxu0 %v3819
        %v4055 = vpop.f32.mrf.mxu0
        %v4056 = vadd.f32 %v3967, %v4055
        %v4057 = vpop.f32.mrf.mxu0
        %v4058 = vadd.f32 %v3969, %v4057
        %4059 = vmatmul.bf16.gmra.mxu0 %v3823
        %v4060 = vpop.f32.mrf.mxu0
        %v4061 = vadd.f32 %v3972, %v4060
        %v4062 = vpop.f32.mrf.mxu0
        %v4063 = vadd.f32 %v3974, %v4062
        %4064 = vmatmul.bf16.gmra.mxu0 %v3827
        %v4065 = vpop.f32.mrf.mxu0
        %v4066 = vadd.f32 %v3977, %v4065
        %v4067 = vpop.f32.mrf.mxu0
        %v4068 = vadd.f32 %v3979, %v4067
        %4069 = vmatmul.bf16.gmra.mxu0 %v3831
        %v4070 = vpop.f32.mrf.mxu0
        %v4071 = vadd.f32 %v3982, %v4070
        %v4072 = vpop.f32.mrf.mxu0
        %v4073 = vadd.f32 %v3984, %v4072
        %4074 = vmatmul.bf16.gmra.mxu0 %v3835
        %v4075 = vpop.f32.mrf.mxu0
        %v4076 = vadd.f32 %v3987, %v4075
        %v4077 = vpop.f32.mrf.mxu0
        %v4078 = vadd.f32 %v3989, %v4077
        %4079 = vdwg.mxu0
        %4080 = vmatpush.bf16.msra.mxu0 %v3372
        %4081 = vmatpush.bf16.msra.mxu0 %v3370
        %4082 = vmatpush.bf16.msra.mxu0 %v3368
        %4083 = vmatpush.bf16.msra.mxu0 %v3366
        %4084 = vmatpush.bf16.msra.mxu0 %v3364
        %4085 = vmatpush.bf16.msra.mxu0 %v3362
        %4086 = vmatpush.bf16.msra.mxu0 %v3360
        %4087 = vmatpush.bf16.msra.mxu0 %v3358
        %4088 = vmatmul.bf16.gmra.mxu0 %v3776
        %v4089 = vpop.f32.mrf.mxu0
        %v4090 = vadd.f32 %v4001, %v4089
        %v4091 = vpop.f32.mrf.mxu0
        %v4092 = vadd.f32 %v4003, %v4091
        %4093 = vmatmul.bf16.gmra.mxu0 %v3780
        %v4094 = vpop.f32.mrf.mxu0
        %v4095 = vadd.f32 %v4006, %v4094
        %v4096 = vpop.f32.mrf.mxu0
        %v4097 = vadd.f32 %v4008, %v4096
        %4098 = vmatmul.bf16.gmra.mxu0 %v3784
        %v4099 = vpop.f32.mrf.mxu0
        %v4100 = vadd.f32 %v4011, %v4099
        %v4101 = vpop.f32.mrf.mxu0
        %v4102 = vadd.f32 %v4013, %v4101
        %4103 = vmatmul.bf16.gmra.mxu0 %v3788
        %v4104 = vpop.f32.mrf.mxu0
        %v4105 = vadd.f32 %v4016, %v4104
        %v4106 = vpop.f32.mrf.mxu0
        %v4107 = vadd.f32 %v4018, %v4106
        %4108 = vmatmul.bf16.gmra.mxu0 %v3792
        %v4109 = vpop.f32.mrf.mxu0
        %v4110 = vadd.f32 %v4021, %v4109
        %v4111 = vpop.f32.mrf.mxu0
        %v4112 = vadd.f32 %v4023, %v4111
        %4113 = vmatmul.bf16.gmra.mxu0 %v3796
        %v4114 = vpop.f32.mrf.mxu0
        %v4115 = vadd.f32 %v4026, %v4114
        %v4116 = vpop.f32.mrf.mxu0
        %v4117 = vadd.f32 %v4028, %v4116
        %4118 = vmatmul.bf16.gmra.mxu0 %v3800
        %v4119 = vpop.f32.mrf.mxu0
        %v4120 = vadd.f32 %v4031, %v4119
        %v4121 = vpop.f32.mrf.mxu0
        %v4122 = vadd.f32 %v4033, %v4121
        %4123 = vmatmul.bf16.gmra.mxu0 %v3804
        %v4124 = vpop.f32.mrf.mxu0
        %v4125 = vadd.f32 %v4036, %v4124
        %v4126 = vpop.f32.mrf.mxu0
        %v4127 = vadd.f32 %v4038, %v4126
        %4128 = vmatmul.bf16.gmra.mxu0 %v3808
        %v4129 = vpop.f32.mrf.mxu0
        %v4130 = vadd.f32 %v4041, %v4129
        %v4131 = vpop.f32.mrf.mxu0
        %v4132 = vadd.f32 %v4043, %v4131
        %4133 = vmatmul.bf16.gmra.mxu0 %v3812
        %v4134 = vpop.f32.mrf.mxu0
        %v4135 = vadd.f32 %v4046, %v4134
        %v4136 = vpop.f32.mrf.mxu0
        %v4137 = vadd.f32 %v4048, %v4136
        %4138 = vmatmul.bf16.gmra.mxu0 %v3816
        %v4139 = vpop.f32.mrf.mxu0
        %v4140 = vadd.f32 %v4051, %v4139
        %v4141 = vpop.f32.mrf.mxu0
        %v4142 = vadd.f32 %v4053, %v4141
        %4143 = vmatmul.bf16.gmra.mxu0 %v3820
        %v4144 = vpop.f32.mrf.mxu0
        %v4145 = vadd.f32 %v4056, %v4144
        %v4146 = vpop.f32.mrf.mxu0
        %v4147 = vadd.f32 %v4058, %v4146
        %4148 = vmatmul.bf16.gmra.mxu0 %v3824
        %v4149 = vpop.f32.mrf.mxu0
        %v4150 = vadd.f32 %v4061, %v4149
        %v4151 = vpop.f32.mrf.mxu0
        %v4152 = vadd.f32 %v4063, %v4151
        %4153 = vmatmul.bf16.gmra.mxu0 %v3828
        %v4154 = vpop.f32.mrf.mxu0
        %v4155 = vadd.f32 %v4066, %v4154
        %v4156 = vpop.f32.mrf.mxu0
        %v4157 = vadd.f32 %v4068, %v4156
        %4158 = vmatmul.bf16.gmra.mxu0 %v3832
        %v4159 = vpop.f32.mrf.mxu0
        %v4160 = vadd.f32 %v4071, %v4159
        %v4161 = vpop.f32.mrf.mxu0
        %v4162 = vadd.f32 %v4073, %v4161
        %4163 = vmatmul.bf16.gmra.mxu0 %v3836
        %v4164 = vpop.f32.mrf.mxu0
        %v4165 = vadd.f32 %v4076, %v4164
        %v4166 = vpop.f32.mrf.mxu0
        %v4167 = vadd.f32 %v4078, %v4166
        %4168 = vdwg.mxu0
        %4169 = vmatpush.bf16.msra.mxu0 %v3388
        %4170 = vmatpush.bf16.msra.mxu0 %v3386
        %4171 = vmatpush.bf16.msra.mxu0 %v3384
        %4172 = vmatpush.bf16.msra.mxu0 %v3382
        %4173 = vmatpush.bf16.msra.mxu0 %v3380
        %4174 = vmatpush.bf16.msra.mxu0 %v3378
        %4175 = vmatpush.bf16.msra.mxu0 %v3376
        %4176 = vmatpush.bf16.msra.mxu0 %v3374
        %4177 = vmatmul.bf16.gmra.mxu0 %v3777
        %v4178 = vpop.f32.mrf.mxu0
        %v4179 = vadd.f32 %v4090, %v4178
        %v4180 = vpop.f32.mrf.mxu0
        %v4181 = vadd.f32 %v4092, %v4180
        %4182 = vmatmul.bf16.gmra.mxu0 %v3781
        %v4183 = vpop.f32.mrf.mxu0
        %v4184 = vadd.f32 %v4095, %v4183
        %v4185 = vpop.f32.mrf.mxu0
        %v4186 = vadd.f32 %v4097, %v4185
        %4187 = vmatmul.bf16.gmra.mxu0 %v3785
        %v4188 = vpop.f32.mrf.mxu0
        %v4189 = vadd.f32 %v4100, %v4188
        %v4190 = vpop.f32.mrf.mxu0
        %v4191 = vadd.f32 %v4102, %v4190
        %4192 = vmatmul.bf16.gmra.mxu0 %v3789
        %v4193 = vpop.f32.mrf.mxu0
        %v4194 = vadd.f32 %v4105, %v4193
        %v4195 = vpop.f32.mrf.mxu0
        %v4196 = vadd.f32 %v4107, %v4195
        %4197 = vmatmul.bf16.gmra.mxu0 %v3793
        %v4198 = vpop.f32.mrf.mxu0
        %v4199 = vadd.f32 %v4110, %v4198
        %v4200 = vpop.f32.mrf.mxu0
        %v4201 = vadd.f32 %v4112, %v4200
        %4202 = vmatmul.bf16.gmra.mxu0 %v3797
        %v4203 = vpop.f32.mrf.mxu0
        %v4204 = vadd.f32 %v4115, %v4203
        %v4205 = vpop.f32.mrf.mxu0
        %v4206 = vadd.f32 %v4117, %v4205
        %4207 = vmatmul.bf16.gmra.mxu0 %v3801
        %v4208 = vpop.f32.mrf.mxu0
        %v4209 = vadd.f32 %v4120, %v4208
        %v4210 = vpop.f32.mrf.mxu0
        %v4211 = vadd.f32 %v4122, %v4210
        %4212 = vmatmul.bf16.gmra.mxu0 %v3805
        %v4213 = vpop.f32.mrf.mxu0
        %v4214 = vadd.f32 %v4125, %v4213
        %v4215 = vpop.f32.mrf.mxu0
        %v4216 = vadd.f32 %v4127, %v4215
        %4217 = vmatmul.bf16.gmra.mxu0 %v3809
        %v4218 = vpop.f32.mrf.mxu0
        %v4219 = vadd.f32 %v4130, %v4218
        %v4220 = vpop.f32.mrf.mxu0
        %v4221 = vadd.f32 %v4132, %v4220
        %4222 = vmatmul.bf16.gmra.mxu0 %v3813
        %v4223 = vpop.f32.mrf.mxu0
        %v4224 = vadd.f32 %v4135, %v4223
        %v4225 = vpop.f32.mrf.mxu0
        %v4226 = vadd.f32 %v4137, %v4225
        %4227 = vmatmul.bf16.gmra.mxu0 %v3817
        %v4228 = vpop.f32.mrf.mxu0
        %v4229 = vadd.f32 %v4140, %v4228
        %v4230 = vpop.f32.mrf.mxu0
        %v4231 = vadd.f32 %v4142, %v4230
        %4232 = vmatmul.bf16.gmra.mxu0 %v3821
        %v4233 = vpop.f32.mrf.mxu0
        %v4234 = vadd.f32 %v4145, %v4233
        %v4235 = vpop.f32.mrf.mxu0
        %v4236 = vadd.f32 %v4147, %v4235
        %4237 = vmatmul.bf16.gmra.mxu0 %v3825
        %v4238 = vpop.f32.mrf.mxu0
        %v4239 = vadd.f32 %v4150, %v4238
        %v4240 = vpop.f32.mrf.mxu0
        %v4241 = vadd.f32 %v4152, %v4240
        %4242 = vmatmul.bf16.gmra.mxu0 %v3829
        %v4243 = vpop.f32.mrf.mxu0
        %v4244 = vadd.f32 %v4155, %v4243
        %v4245 = vpop.f32.mrf.mxu0
        %v4246 = vadd.f32 %v4157, %v4245
        %4247 = vmatmul.bf16.gmra.mxu0 %v3833
        %v4248 = vpop.f32.mrf.mxu0
        %v4249 = vadd.f32 %v4160, %v4248
        %v4250 = vpop.f32.mrf.mxu0
        %v4251 = vadd.f32 %v4162, %v4250
        %4252 = vmatmul.bf16.gmra.mxu0 %v3837
        %v4253 = vpop.f32.mrf.mxu0
        %v4254 = vadd.f32 %v4165, %v4253
        %v4255 = vpop.f32.mrf.mxu0
        %v4256 = vadd.f32 %v4167, %v4255
        %4257 = vdwg.mxu0
        %4258 = vmatpush.bf16.msra.mxu0 %v3341
        %4259 = vmatpush.bf16.msra.mxu0 %v3339
        %4260 = vmatpush.bf16.msra.mxu0 %v3337
        %4261 = vmatpush.bf16.msra.mxu0 %v3335
        %4262 = vmatpush.bf16.msra.mxu0 %v3333
        %4263 = vmatpush.bf16.msra.mxu0 %v3331
        %4264 = vmatpush.bf16.msra.mxu0 %v3329
        %4265 = vmatpush.bf16.msra.mxu0 %v3327
        %4266 = vmatmul.bf16.gmra.mxu0 %v3774
        %v4267 = vpop.f32.mrf.mxu0
        %v4268 = vadd.f32 %v3425, %v4267
        %v4269 = vpop.f32.mrf.mxu0
        %v4270 = vadd.f32 %v3430, %v4269
        %4271 = vmatmul.bf16.gmra.mxu0 %v3778
        %v4272 = vpop.f32.mrf.mxu0
        %v4273 = vadd.f32 %v3435, %v4272
        %v4274 = vpop.f32.mrf.mxu0
        %v4275 = vadd.f32 %v3440, %v4274
        %4276 = vmatmul.bf16.gmra.mxu0 %v3782
        %v4277 = vpop.f32.mrf.mxu0
        %v4278 = vadd.f32 %v3445, %v4277
        %v4279 = vpop.f32.mrf.mxu0
        %v4280 = vadd.f32 %v3450, %v4279
        %4281 = vmatmul.bf16.gmra.mxu0 %v3786
        %v4282 = vpop.f32.mrf.mxu0
        %v4283 = vadd.f32 %v3455, %v4282
        %v4284 = vpop.f32.mrf.mxu0
        %v4285 = vadd.f32 %v3460, %v4284
        %4286 = vmatmul.bf16.gmra.mxu0 %v3790
        %v4287 = vpop.f32.mrf.mxu0
        %v4288 = vadd.f32 %v3465, %v4287
        %v4289 = vpop.f32.mrf.mxu0
        %v4290 = vadd.f32 %v3470, %v4289
        %4291 = vmatmul.bf16.gmra.mxu0 %v3794
        %v4292 = vpop.f32.mrf.mxu0
        %v4293 = vadd.f32 %v3475, %v4292
        %v4294 = vpop.f32.mrf.mxu0
        %v4295 = vadd.f32 %v3480, %v4294
        %4296 = vmatmul.bf16.gmra.mxu0 %v3798
        %v4297 = vpop.f32.mrf.mxu0
        %v4298 = vadd.f32 %v3485, %v4297
        %v4299 = vpop.f32.mrf.mxu0
        %v4300 = vadd.f32 %v3490, %v4299
        %4301 = vmatmul.bf16.gmra.mxu0 %v3802
        %v4302 = vpop.f32.mrf.mxu0
        %v4303 = vadd.f32 %v3495, %v4302
        %v4304 = vpop.f32.mrf.mxu0
        %v4305 = vadd.f32 %v3500, %v4304
        %4306 = vmatmul.bf16.gmra.mxu0 %v3806
        %v4307 = vpop.f32.mrf.mxu0
        %v4308 = vadd.f32 %v3505, %v4307
        %v4309 = vpop.f32.mrf.mxu0
        %v4310 = vadd.f32 %v3510, %v4309
        %4311 = vmatmul.bf16.gmra.mxu0 %v3810
        %v4312 = vpop.f32.mrf.mxu0
        %v4313 = vadd.f32 %v3515, %v4312
        %v4314 = vpop.f32.mrf.mxu0
        %v4315 = vadd.f32 %v3520, %v4314
        %4316 = vmatmul.bf16.gmra.mxu0 %v3814
        %v4317 = vpop.f32.mrf.mxu0
        %v4318 = vadd.f32 %v3525, %v4317
        %v4319 = vpop.f32.mrf.mxu0
        %v4320 = vadd.f32 %v3530, %v4319
        %4321 = vmatmul.bf16.gmra.mxu0 %v3818
        %v4322 = vpop.f32.mrf.mxu0
        %v4323 = vadd.f32 %v3535, %v4322
        %v4324 = vpop.f32.mrf.mxu0
        %v4325 = vadd.f32 %v3540, %v4324
        %4326 = vmatmul.bf16.gmra.mxu0 %v3822
        %v4327 = vpop.f32.mrf.mxu0
        %v4328 = vadd.f32 %v3545, %v4327
        %v4329 = vpop.f32.mrf.mxu0
        %v4330 = vadd.f32 %v3550, %v4329
        %4331 = vmatmul.bf16.gmra.mxu0 %v3826
        %v4332 = vpop.f32.mrf.mxu0
        %v4333 = vadd.f32 %v3555, %v4332
        %v4334 = vpop.f32.mrf.mxu0
        %v4335 = vadd.f32 %v3560, %v4334
        %4336 = vmatmul.bf16.gmra.mxu0 %v3830
        %v4337 = vpop.f32.mrf.mxu0
        %v4338 = vadd.f32 %v3565, %v4337
        %v4339 = vpop.f32.mrf.mxu0
        %v4340 = vadd.f32 %v3570, %v4339
        %4341 = vmatmul.bf16.gmra.mxu0 %v3834
        %v4342 = vpop.f32.mrf.mxu0
        %v4343 = vadd.f32 %v3575, %v4342
        %v4344 = vpop.f32.mrf.mxu0
        %v4345 = vadd.f32 %v3580, %v4344
        %4346 = vdwg.mxu0
        %4347 = vmatpush.bf16.msra.mxu0 %v3357
        %4348 = vmatpush.bf16.msra.mxu0 %v3355
        %4349 = vmatpush.bf16.msra.mxu0 %v3353
        %4350 = vmatpush.bf16.msra.mxu0 %v3351
        %4351 = vmatpush.bf16.msra.mxu0 %v3349
        %4352 = vmatpush.bf16.msra.mxu0 %v3347
        %4353 = vmatpush.bf16.msra.mxu0 %v3345
        %4354 = vmatpush.bf16.msra.mxu0 %v3343
        %4355 = vmatmul.bf16.gmra.mxu0 %v3775
        %v4356 = vpop.f32.mrf.mxu0
        %v4357 = vadd.f32 %v4268, %v4356
        %v4358 = vpop.f32.mrf.mxu0
        %v4359 = vadd.f32 %v4270, %v4358
        %4360 = vmatmul.bf16.gmra.mxu0 %v3779
        %v4361 = vpop.f32.mrf.mxu0
        %v4362 = vadd.f32 %v4273, %v4361
        %v4363 = vpop.f32.mrf.mxu0
        %v4364 = vadd.f32 %v4275, %v4363
        %4365 = vmatmul.bf16.gmra.mxu0 %v3783
        %v4366 = vpop.f32.mrf.mxu0
        %v4367 = vadd.f32 %v4278, %v4366
        %v4368 = vpop.f32.mrf.mxu0
        %v4369 = vadd.f32 %v4280, %v4368
        %4370 = vmatmul.bf16.gmra.mxu0 %v3787
        %v4371 = vpop.f32.mrf.mxu0
        %v4372 = vadd.f32 %v4283, %v4371
        %v4373 = vpop.f32.mrf.mxu0
        %v4374 = vadd.f32 %v4285, %v4373
        %4375 = vmatmul.bf16.gmra.mxu0 %v3791
        %v4376 = vpop.f32.mrf.mxu0
        %v4377 = vadd.f32 %v4288, %v4376
        %v4378 = vpop.f32.mrf.mxu0
        %v4379 = vadd.f32 %v4290, %v4378
        %4380 = vmatmul.bf16.gmra.mxu0 %v3795
        %v4381 = vpop.f32.mrf.mxu0
        %v4382 = vadd.f32 %v4293, %v4381
        %v4383 = vpop.f32.mrf.mxu0
        %v4384 = vadd.f32 %v4295, %v4383
        %4385 = vmatmul.bf16.gmra.mxu0 %v3799
        %v4386 = vpop.f32.mrf.mxu0
        %v4387 = vadd.f32 %v4298, %v4386
        %v4388 = vpop.f32.mrf.mxu0
        %v4389 = vadd.f32 %v4300, %v4388
        %4390 = vmatmul.bf16.gmra.mxu0 %v3803
        %v4391 = vpop.f32.mrf.mxu0
        %v4392 = vadd.f32 %v4303, %v4391
        %v4393 = vpop.f32.mrf.mxu0
        %v4394 = vadd.f32 %v4305, %v4393
        %4395 = vmatmul.bf16.gmra.mxu0 %v3807
        %v4396 = vpop.f32.mrf.mxu0
        %v4397 = vadd.f32 %v4308, %v4396
        %v4398 = vpop.f32.mrf.mxu0
        %v4399 = vadd.f32 %v4310, %v4398
        %4400 = vmatmul.bf16.gmra.mxu0 %v3811
        %v4401 = vpop.f32.mrf.mxu0
        %v4402 = vadd.f32 %v4313, %v4401
        %v4403 = vpop.f32.mrf.mxu0
        %v4404 = vadd.f32 %v4315, %v4403
        %4405 = vmatmul.bf16.gmra.mxu0 %v3815
        %v4406 = vpop.f32.mrf.mxu0
        %v4407 = vadd.f32 %v4318, %v4406
        %v4408 = vpop.f32.mrf.mxu0
        %v4409 = vadd.f32 %v4320, %v4408
        %4410 = vmatmul.bf16.gmra.mxu0 %v3819
        %v4411 = vpop.f32.mrf.mxu0
        %v4412 = vadd.f32 %v4323, %v4411
        %v4413 = vpop.f32.mrf.mxu0
        %v4414 = vadd.f32 %v4325, %v4413
        %4415 = vmatmul.bf16.gmra.mxu0 %v3823
        %v4416 = vpop.f32.mrf.mxu0
        %v4417 = vadd.f32 %v4328, %v4416
        %v4418 = vpop.f32.mrf.mxu0
        %v4419 = vadd.f32 %v4330, %v4418
        %4420 = vmatmul.bf16.gmra.mxu0 %v3827
        %v4421 = vpop.f32.mrf.mxu0
        %v4422 = vadd.f32 %v4333, %v4421
        %v4423 = vpop.f32.mrf.mxu0
        %v4424 = vadd.f32 %v4335, %v4423
        %4425 = vmatmul.bf16.gmra.mxu0 %v3831
        %v4426 = vpop.f32.mrf.mxu0
        %v4427 = vadd.f32 %v4338, %v4426
        %v4428 = vpop.f32.mrf.mxu0
        %v4429 = vadd.f32 %v4340, %v4428
        %4430 = vmatmul.bf16.gmra.mxu0 %v3835
        %v4431 = vpop.f32.mrf.mxu0
        %v4432 = vadd.f32 %v4343, %v4431
        %v4433 = vpop.f32.mrf.mxu0
        %v4434 = vadd.f32 %v4345, %v4433
        %4435 = vdwg.mxu0
        %4436 = vmatpush.bf16.msra.mxu0 %v3373
        %4437 = vmatpush.bf16.msra.mxu0 %v3371
        %4438 = vmatpush.bf16.msra.mxu0 %v3369
        %4439 = vmatpush.bf16.msra.mxu0 %v3367
        %4440 = vmatpush.bf16.msra.mxu0 %v3365
        %4441 = vmatpush.bf16.msra.mxu0 %v3363
        %4442 = vmatpush.bf16.msra.mxu0 %v3361
        %4443 = vmatpush.bf16.msra.mxu0 %v3359
        %4444 = vmatmul.bf16.gmra.mxu0 %v3776
        %v4445 = vpop.f32.mrf.mxu0
        %v4446 = vadd.f32 %v4357, %v4445
        %v4447 = vpop.f32.mrf.mxu0
        %v4448 = vadd.f32 %v4359, %v4447
        %4449 = vmatmul.bf16.gmra.mxu0 %v3780
        %v4450 = vpop.f32.mrf.mxu0
        %v4451 = vadd.f32 %v4362, %v4450
        %v4452 = vpop.f32.mrf.mxu0
        %v4453 = vadd.f32 %v4364, %v4452
        %4454 = vmatmul.bf16.gmra.mxu0 %v3784
        %v4455 = vpop.f32.mrf.mxu0
        %v4456 = vadd.f32 %v4367, %v4455
        %v4457 = vpop.f32.mrf.mxu0
        %v4458 = vadd.f32 %v4369, %v4457
        %4459 = vmatmul.bf16.gmra.mxu0 %v3788
        %v4460 = vpop.f32.mrf.mxu0
        %v4461 = vadd.f32 %v4372, %v4460
        %v4462 = vpop.f32.mrf.mxu0
        %v4463 = vadd.f32 %v4374, %v4462
        %4464 = vmatmul.bf16.gmra.mxu0 %v3792
        %v4465 = vpop.f32.mrf.mxu0
        %v4466 = vadd.f32 %v4377, %v4465
        %v4467 = vpop.f32.mrf.mxu0
        %v4468 = vadd.f32 %v4379, %v4467
        %4469 = vmatmul.bf16.gmra.mxu0 %v3796
        %v4470 = vpop.f32.mrf.mxu0
        %v4471 = vadd.f32 %v4382, %v4470
        %v4472 = vpop.f32.mrf.mxu0
        %v4473 = vadd.f32 %v4384, %v4472
        %4474 = vmatmul.bf16.gmra.mxu0 %v3800
        %v4475 = vpop.f32.mrf.mxu0
        %v4476 = vadd.f32 %v4387, %v4475
        %v4477 = vpop.f32.mrf.mxu0
        %v4478 = vadd.f32 %v4389, %v4477
        %4479 = vmatmul.bf16.gmra.mxu0 %v3804
        %v4480 = vpop.f32.mrf.mxu0
        %v4481 = vadd.f32 %v4392, %v4480
        %v4482 = vpop.f32.mrf.mxu0
        %v4483 = vadd.f32 %v4394, %v4482
        %4484 = vmatmul.bf16.gmra.mxu0 %v3808
        %v4485 = vpop.f32.mrf.mxu0
        %v4486 = vadd.f32 %v4397, %v4485
        %v4487 = vpop.f32.mrf.mxu0
        %v4488 = vadd.f32 %v4399, %v4487
        %4489 = vmatmul.bf16.gmra.mxu0 %v3812
        %v4490 = vpop.f32.mrf.mxu0
        %v4491 = vadd.f32 %v4402, %v4490
        %v4492 = vpop.f32.mrf.mxu0
        %v4493 = vadd.f32 %v4404, %v4492
        %4494 = vmatmul.bf16.gmra.mxu0 %v3816
        %v4495 = vpop.f32.mrf.mxu0
        %v4496 = vadd.f32 %v4407, %v4495
        %v4497 = vpop.f32.mrf.mxu0
        %v4498 = vadd.f32 %v4409, %v4497
        %4499 = vmatmul.bf16.gmra.mxu0 %v3820
        %v4500 = vpop.f32.mrf.mxu0
        %v4501 = vadd.f32 %v4412, %v4500
        %v4502 = vpop.f32.mrf.mxu0
        %v4503 = vadd.f32 %v4414, %v4502
        %4504 = vmatmul.bf16.gmra.mxu0 %v3824
        %v4505 = vpop.f32.mrf.mxu0
        %v4506 = vadd.f32 %v4417, %v4505
        %v4507 = vpop.f32.mrf.mxu0
        %v4508 = vadd.f32 %v4419, %v4507
        %4509 = vmatmul.bf16.gmra.mxu0 %v3828
        %v4510 = vpop.f32.mrf.mxu0
        %v4511 = vadd.f32 %v4422, %v4510
        %v4512 = vpop.f32.mrf.mxu0
        %v4513 = vadd.f32 %v4424, %v4512
        %4514 = vmatmul.bf16.gmra.mxu0 %v3832
        %v4515 = vpop.f32.mrf.mxu0
        %v4516 = vadd.f32 %v4427, %v4515
        %v4517 = vpop.f32.mrf.mxu0
        %v4518 = vadd.f32 %v4429, %v4517
        %4519 = vmatmul.bf16.gmra.mxu0 %v3836
        %v4520 = vpop.f32.mrf.mxu0
        %v4521 = vadd.f32 %v4432, %v4520
        %v4522 = vpop.f32.mrf.mxu0
        %v4523 = vadd.f32 %v4434, %v4522
        %4524 = vdwg.mxu0
        %4525 = vmatpush.bf16.msra.mxu0 %v3389
        %4526 = vmatpush.bf16.msra.mxu0 %v3387
        %4527 = vmatpush.bf16.msra.mxu0 %v3385
        %4528 = vmatpush.bf16.msra.mxu0 %v3383
        %4529 = vmatpush.bf16.msra.mxu0 %v3381
        %4530 = vmatpush.bf16.msra.mxu0 %v3379
        %4531 = vmatpush.bf16.msra.mxu0 %v3377
        %4532 = vmatpush.bf16.msra.mxu0 %v3375
        %4533 = vmatmul.bf16.gmra.mxu0 %v3777
        %v4534 = vpop.f32.mrf.mxu0
        %v4535 = vadd.f32 %v4446, %v4534
        %v4536 = vpop.f32.mrf.mxu0
        %v4537 = vadd.f32 %v4448, %v4536
        %4538 = vmatmul.bf16.gmra.mxu0 %v3781
        %v4539 = vpop.f32.mrf.mxu0
        %v4540 = vadd.f32 %v4451, %v4539
        %v4541 = vpop.f32.mrf.mxu0
        %v4542 = vadd.f32 %v4453, %v4541
        %4543 = vmatmul.bf16.gmra.mxu0 %v3785
        %v4544 = vpop.f32.mrf.mxu0
        %v4545 = vadd.f32 %v4456, %v4544
        %v4546 = vpop.f32.mrf.mxu0
        %v4547 = vadd.f32 %v4458, %v4546
        %4548 = vmatmul.bf16.gmra.mxu0 %v3789
        %v4549 = vpop.f32.mrf.mxu0
        %v4550 = vadd.f32 %v4461, %v4549
        %v4551 = vpop.f32.mrf.mxu0
        %v4552 = vadd.f32 %v4463, %v4551
        %4553 = vmatmul.bf16.gmra.mxu0 %v3793
        %v4554 = vpop.f32.mrf.mxu0
        %v4555 = vadd.f32 %v4466, %v4554
        %v4556 = vpop.f32.mrf.mxu0
        %v4557 = vadd.f32 %v4468, %v4556
        %4558 = vmatmul.bf16.gmra.mxu0 %v3797
        %v4559 = vpop.f32.mrf.mxu0
        %v4560 = vadd.f32 %v4471, %v4559
        %v4561 = vpop.f32.mrf.mxu0
        %v4562 = vadd.f32 %v4473, %v4561
        %4563 = vmatmul.bf16.gmra.mxu0 %v3801
        %v4564 = vpop.f32.mrf.mxu0
        %v4565 = vadd.f32 %v4476, %v4564
        %v4566 = vpop.f32.mrf.mxu0
        %v4567 = vadd.f32 %v4478, %v4566
        %4568 = vmatmul.bf16.gmra.mxu0 %v3805
        %v4569 = vpop.f32.mrf.mxu0
        %v4570 = vadd.f32 %v4481, %v4569
        %v4571 = vpop.f32.mrf.mxu0
        %v4572 = vadd.f32 %v4483, %v4571
        %4573 = vmatmul.bf16.gmra.mxu0 %v3809
        %v4574 = vpop.f32.mrf.mxu0
        %v4575 = vadd.f32 %v4486, %v4574
        %v4576 = vpop.f32.mrf.mxu0
        %v4577 = vadd.f32 %v4488, %v4576
        %4578 = vmatmul.bf16.gmra.mxu0 %v3813
        %v4579 = vpop.f32.mrf.mxu0
        %v4580 = vadd.f32 %v4491, %v4579
        %v4581 = vpop.f32.mrf.mxu0
        %v4582 = vadd.f32 %v4493, %v4581
        %4583 = vmatmul.bf16.gmra.mxu0 %v3817
        %v4584 = vpop.f32.mrf.mxu0
        %v4585 = vadd.f32 %v4496, %v4584
        %v4586 = vpop.f32.mrf.mxu0
        %v4587 = vadd.f32 %v4498, %v4586
        %4588 = vmatmul.bf16.gmra.mxu0 %v3821
        %v4589 = vpop.f32.mrf.mxu0
        %v4590 = vadd.f32 %v4501, %v4589
        %v4591 = vpop.f32.mrf.mxu0
        %v4592 = vadd.f32 %v4503, %v4591
        %4593 = vmatmul.bf16.gmra.mxu0 %v3825
        %v4594 = vpop.f32.mrf.mxu0
        %v4595 = vadd.f32 %v4506, %v4594
        %v4596 = vpop.f32.mrf.mxu0
        %v4597 = vadd.f32 %v4508, %v4596
        %4598 = vmatmul.bf16.gmra.mxu0 %v3829
        %v4599 = vpop.f32.mrf.mxu0
        %v4600 = vadd.f32 %v4511, %v4599
        %v4601 = vpop.f32.mrf.mxu0
        %v4602 = vadd.f32 %v4513, %v4601
        %4603 = vmatmul.bf16.gmra.mxu0 %v3833
        %v4604 = vpop.f32.mrf.mxu0
        %v4605 = vadd.f32 %v4516, %v4604
        %v4606 = vpop.f32.mrf.mxu0
        %v4607 = vadd.f32 %v4518, %v4606
        %4608 = vmatmul.bf16.gmra.mxu0 %v3837
        %v4609 = vpop.f32.mrf.mxu0
        %v4610 = vadd.f32 %v4521, %v4609
        %v4611 = vpop.f32.mrf.mxu0
        %v4612 = vadd.f32 %v4523, %v4611
        %4613 = vdwg.mxu0
        %vm4614 = vcmp.gt.f32.partialorder %v4179, 0.0
        %vm4615 = vcmp.gt.f32.partialorder %v4535, 0.0
        %vm4616 = vcmp.gt.f32.partialorder %v4181, 0.0
        %vm4617 = vcmp.gt.f32.partialorder %v4537, 0.0
        %vm4618 = vcmp.gt.f32.partialorder %v4184, 0.0
        %vm4619 = vcmp.gt.f32.partialorder %v4540, 0.0
        %vm4620 = vcmp.gt.f32.partialorder %v4186, 0.0
        %vm4621 = vcmp.gt.f32.partialorder %v4542, 0.0
        %vm4622 = vcmp.gt.f32.partialorder %v4189, 0.0
        %vm4623 = vcmp.gt.f32.partialorder %v4545, 0.0
        %vm4624 = vcmp.gt.f32.partialorder %v4191, 0.0
        %vm4625 = vcmp.gt.f32.partialorder %v4547, 0.0
        %vm4626 = vcmp.gt.f32.partialorder %v4194, 0.0
        %vm4627 = vcmp.gt.f32.partialorder %v4550, 0.0
        %vm4628 = vcmp.gt.f32.partialorder %v4196, 0.0
        %vm4629 = vcmp.gt.f32.partialorder %v4552, 0.0
        %vm4630 = vcmp.gt.f32.partialorder %v4199, 0.0
        %vm4631 = vcmp.gt.f32.partialorder %v4555, 0.0
        %vm4632 = vcmp.gt.f32.partialorder %v4201, 0.0
        %vm4633 = vcmp.gt.f32.partialorder %v4557, 0.0
        %vm4634 = vcmp.gt.f32.partialorder %v4204, 0.0
        %vm4635 = vcmp.gt.f32.partialorder %v4560, 0.0
        %vm4636 = vcmp.gt.f32.partialorder %v4206, 0.0
        %vm4637 = vcmp.gt.f32.partialorder %v4562, 0.0
        %vm4638 = vcmp.gt.f32.partialorder %v4209, 0.0
        %vm4639 = vcmp.gt.f32.partialorder %v4565, 0.0
        %vm4640 = vcmp.gt.f32.partialorder %v4211, 0.0
        %vm4641 = vcmp.gt.f32.partialorder %v4567, 0.0
        %vm4642 = vcmp.gt.f32.partialorder %v4214, 0.0
        %vm4643 = vcmp.gt.f32.partialorder %v4570, 0.0
        %vm4644 = vcmp.gt.f32.partialorder %v4216, 0.0
        %vm4645 = vcmp.gt.f32.partialorder %v4572, 0.0
        %vm4646 = vcmp.gt.f32.partialorder %v4219, 0.0
        %vm4647 = vcmp.gt.f32.partialorder %v4575, 0.0
        %vm4648 = vcmp.gt.f32.partialorder %v4221, 0.0
        %vm4649 = vcmp.gt.f32.partialorder %v4577, 0.0
        %vm4650 = vcmp.gt.f32.partialorder %v4224, 0.0
        %vm4651 = vcmp.gt.f32.partialorder %v4580, 0.0
        %vm4652 = vcmp.gt.f32.partialorder %v4226, 0.0
        %vm4653 = vcmp.gt.f32.partialorder %v4582, 0.0
        %vm4654 = vcmp.gt.f32.partialorder %v4229, 0.0
        %vm4655 = vcmp.gt.f32.partialorder %v4585, 0.0
        %vm4656 = vcmp.gt.f32.partialorder %v4231, 0.0
        %vm4657 = vcmp.gt.f32.partialorder %v4587, 0.0
        %vm4658 = vcmp.gt.f32.partialorder %v4234, 0.0
        %vm4659 = vcmp.gt.f32.partialorder %v4590, 0.0
        %vm4660 = vcmp.gt.f32.partialorder %v4236, 0.0
        %vm4661 = vcmp.gt.f32.partialorder %v4592, 0.0
        %vm4662 = vcmp.gt.f32.partialorder %v4239, 0.0
        %vm4663 = vcmp.gt.f32.partialorder %v4595, 0.0
        %vm4664 = vcmp.gt.f32.partialorder %v4241, 0.0
        %vm4665 = vcmp.gt.f32.partialorder %v4597, 0.0
        %vm4666 = vcmp.gt.f32.partialorder %v4244, 0.0
        %vm4667 = vcmp.gt.f32.partialorder %v4600, 0.0
        %vm4668 = vcmp.gt.f32.partialorder %v4246, 0.0
        %vm4669 = vcmp.gt.f32.partialorder %v4602, 0.0
        %vm4670 = vcmp.gt.f32.partialorder %v4249, 0.0
        %vm4671 = vcmp.gt.f32.partialorder %v4605, 0.0
        %vm4672 = vcmp.gt.f32.partialorder %v4251, 0.0
        %vm4673 = vcmp.gt.f32.partialorder %v4607, 0.0
        %vm4674 = vcmp.gt.f32.partialorder %v4254, 0.0
        %vm4675 = vcmp.gt.f32.partialorder %v4610, 0.0
        %vm4676 = vcmp.gt.f32.partialorder %v4256, 0.0
        %vm4677 = vcmp.gt.f32.partialorder %v4612, 0.0
        %v4678 = vmul.f32 %v4179, 0.1
        %v4679 = vmul.f32 %v4535, 0.1
        %v4680 = vmul.f32 %v4181, 0.1
        %v4681 = vmul.f32 %v4537, 0.1
        %v4682 = vmul.f32 %v4184, 0.1
        %v4683 = vmul.f32 %v4540, 0.1
        %v4684 = vmul.f32 %v4186, 0.1
        %v4685 = vmul.f32 %v4542, 0.1
        %v4686 = vmul.f32 %v4189, 0.1
        %v4687 = vmul.f32 %v4545, 0.1
        %v4688 = vmul.f32 %v4191, 0.1
        %v4689 = vmul.f32 %v4547, 0.1
        %v4690 = vmul.f32 %v4194, 0.1
        %v4691 = vmul.f32 %v4550, 0.1
        %v4692 = vmul.f32 %v4196, 0.1
        %v4693 = vmul.f32 %v4552, 0.1
        %v4694 = vmul.f32 %v4199, 0.1
        %v4695 = vmul.f32 %v4555, 0.1
        %v4696 = vmul.f32 %v4201, 0.1
        %v4697 = vmul.f32 %v4557, 0.1
        %v4698 = vmul.f32 %v4204, 0.1
        %v4699 = vmul.f32 %v4560, 0.1
        %v4700 = vmul.f32 %v4206, 0.1
        %v4701 = vmul.f32 %v4562, 0.1
        %v4702 = vmul.f32 %v4209, 0.1
        %v4703 = vmul.f32 %v4565, 0.1
        %v4704 = vmul.f32 %v4211, 0.1
        %v4705 = vmul.f32 %v4567, 0.1
        %v4706 = vmul.f32 %v4214, 0.1
        %v4707 = vmul.f32 %v4570, 0.1
        %v4708 = vmul.f32 %v4216, 0.1
        %v4709 = vmul.f32 %v4572, 0.1
        %v4710 = vmul.f32 %v4219, 0.1
        %v4711 = vmul.f32 %v4575, 0.1
        %v4712 = vmul.f32 %v4221, 0.1
        %v4713 = vmul.f32 %v4577, 0.1
        %v4714 = vmul.f32 %v4224, 0.1
        %v4715 = vmul.f32 %v4580, 0.1
        %v4716 = vmul.f32 %v4226, 0.1
        %v4717 = vmul.f32 %v4582, 0.1
        %v4718 = vmul.f32 %v4229, 0.1
        %v4719 = vmul.f32 %v4585, 0.1
        %v4720 = vmul.f32 %v4231, 0.1
        %v4721 = vmul.f32 %v4587, 0.1
        %v4722 = vmul.f32 %v4234, 0.1
        %v4723 = vmul.f32 %v4590, 0.1
        %v4724 = vmul.f32 %v4236, 0.1
        %v4725 = vmul.f32 %v4592, 0.1
        %v4726 = vmul.f32 %v4239, 0.1
        %v4727 = vmul.f32 %v4595, 0.1
        %v4728 = vmul.f32 %v4241, 0.1
        %v4729 = vmul.f32 %v4597, 0.1
        %v4730 = vmul.f32 %v4244, 0.1
        %v4731 = vmul.f32 %v4600, 0.1
        %v4732 = vmul.f32 %v4246, 0.1
        %v4733 = vmul.f32 %v4602, 0.1
        %v4734 = vmul.f32 %v4249, 0.1
        %v4735 = vmul.f32 %v4605, 0.1
        %v4736 = vmul.f32 %v4251, 0.1
        %v4737 = vmul.f32 %v4607, 0.1
        %v4738 = vmul.f32 %v4254, 0.1
        %v4739 = vmul.f32 %v4610, 0.1
        %v4740 = vmul.f32 %v4256, 0.1
        %v4741 = vmul.f32 %v4612, 0.1
        %v4742 = vsel %vm4614, %v4179, %v4678
        %v4743 = vsel %vm4615, %v4535, %v4679
        %v4744 = vsel %vm4616, %v4181, %v4680
        %v4745 = vsel %vm4617, %v4537, %v4681
        %v4746 = vsel %vm4618, %v4184, %v4682
        %v4747 = vsel %vm4619, %v4540, %v4683
        %v4748 = vsel %vm4620, %v4186, %v4684
        %v4749 = vsel %vm4621, %v4542, %v4685
        %v4750 = vsel %vm4622, %v4189, %v4686
        %v4751 = vsel %vm4623, %v4545, %v4687
        %v4752 = vsel %vm4624, %v4191, %v4688
        %v4753 = vsel %vm4625, %v4547, %v4689
        %v4754 = vsel %vm4626, %v4194, %v4690
        %v4755 = vsel %vm4627, %v4550, %v4691
        %v4756 = vsel %vm4628, %v4196, %v4692
        %v4757 = vsel %vm4629, %v4552, %v4693
        %v4758 = vsel %vm4630, %v4199, %v4694
        %v4759 = vsel %vm4631, %v4555, %v4695
        %v4760 = vsel %vm4632, %v4201, %v4696
        %v4761 = vsel %vm4633, %v4557, %v4697
        %v4762 = vsel %vm4634, %v4204, %v4698
        %v4763 = vsel %vm4635, %v4560, %v4699
        %v4764 = vsel %vm4636, %v4206, %v4700
        %v4765 = vsel %vm4637, %v4562, %v4701
        %v4766 = vsel %vm4638, %v4209, %v4702
        %v4767 = vsel %vm4639, %v4565, %v4703
        %v4768 = vsel %vm4640, %v4211, %v4704
        %v4769 = vsel %vm4641, %v4567, %v4705
        %v4770 = vsel %vm4642, %v4214, %v4706
        %v4771 = vsel %vm4643, %v4570, %v4707
        %v4772 = vsel %vm4644, %v4216, %v4708
        %v4773 = vsel %vm4645, %v4572, %v4709
        %v4774 = vsel %vm4646, %v4219, %v4710
        %v4775 = vsel %vm4647, %v4575, %v4711
        %v4776 = vsel %vm4648, %v4221, %v4712
        %v4777 = vsel %vm4649, %v4577, %v4713
        %v4778 = vsel %vm4650, %v4224, %v4714
        %v4779 = vsel %vm4651, %v4580, %v4715
        %v4780 = vsel %vm4652, %v4226, %v4716
        %v4781 = vsel %vm4653, %v4582, %v4717
        %v4782 = vsel %vm4654, %v4229, %v4718
        %v4783 = vsel %vm4655, %v4585, %v4719
        %v4784 = vsel %vm4656, %v4231, %v4720
        %v4785 = vsel %vm4657, %v4587, %v4721
        %v4786 = vsel %vm4658, %v4234, %v4722
        %v4787 = vsel %vm4659, %v4590, %v4723
        %v4788 = vsel %vm4660, %v4236, %v4724
        %v4789 = vsel %vm4661, %v4592, %v4725
        %v4790 = vsel %vm4662, %v4239, %v4726
        %v4791 = vsel %vm4663, %v4595, %v4727
        %v4792 = vsel %vm4664, %v4241, %v4728
        %v4793 = vsel %vm4665, %v4597, %v4729
        %v4794 = vsel %vm4666, %v4244, %v4730
        %v4795 = vsel %vm4667, %v4600, %v4731
        %v4796 = vsel %vm4668, %v4246, %v4732
        %v4797 = vsel %vm4669, %v4602, %v4733
        %v4798 = vsel %vm4670, %v4249, %v4734
        %v4799 = vsel %vm4671, %v4605, %v4735
        %v4800 = vsel %vm4672, %v4251, %v4736
        %v4801 = vsel %vm4673, %v4607, %v4737
        %v4802 = vsel %vm4674, %v4254, %v4738
        %v4803 = vsel %vm4675, %v4610, %v4739
        %v4804 = vsel %vm4676, %v4256, %v4740
        %v4805 = vsel %vm4677, %v4612, %v4741
        %v4806 = vld [vmem:[%s647] sm:$0xff]
        %v4807 = vld [vmem:[%s647 + $0x8] sm:$0xff]
        %v4808 = vld [vmem:[%s647 + $0x10] sm:$0xff]
        %v4809 = vld [vmem:[%s647 + $0x18] sm:$0xff]
        %v4810 = vld [vmem:[%s647 + $0x20] sm:$0xff]
        %v4811 = vld [vmem:[%s647 + $0x28] sm:$0xff]
        %v4812 = vld [vmem:[%s647 + $0x30] sm:$0xff]
        %v4813 = vld [vmem:[%s647 + $0x38] sm:$0xff]
        %v4814 = vld [vmem:[%s647 + $0x40] sm:$0xff]
        %v4815 = vld [vmem:[%s647 + $0x48] sm:$0xff]
        %v4816 = vld [vmem:[%s647 + $0x50] sm:$0xff]
        %v4817 = vld [vmem:[%s647 + $0x58] sm:$0xff]
        %v4818 = vld [vmem:[%s647 + $0x60] sm:$0xff]
        %v4819 = vld [vmem:[%s647 + $0x68] sm:$0xff]
        %v4820 = vld [vmem:[%s647 + $0x70] sm:$0xff]
        %v4821 = vld [vmem:[%s647 + $0x78] sm:$0xff]
        %v4822 = vpack.c.bf16 %v4744, %v4742
        %v4823 = vpack.c.bf16 %v4745, %v4743
        %v4824 = vpack.c.bf16 %v4748, %v4746
        %v4825 = vpack.c.bf16 %v4749, %v4747
        %v4826 = vpack.c.bf16 %v4752, %v4750
        %v4827 = vpack.c.bf16 %v4753, %v4751
        %v4828 = vpack.c.bf16 %v4756, %v4754
        %v4829 = vpack.c.bf16 %v4757, %v4755
        %v4830 = vpack.c.bf16 %v4760, %v4758
        %v4831 = vpack.c.bf16 %v4761, %v4759
        %v4832 = vpack.c.bf16 %v4764, %v4762
        %v4833 = vpack.c.bf16 %v4765, %v4763
        %v4834 = vpack.c.bf16 %v4768, %v4766
        %v4835 = vpack.c.bf16 %v4769, %v4767
        %v4836 = vpack.c.bf16 %v4772, %v4770
        %v4837 = vpack.c.bf16 %v4773, %v4771
        %v4838 = vpack.c.bf16 %v4776, %v4774
        %v4839 = vpack.c.bf16 %v4777, %v4775
        %v4840 = vpack.c.bf16 %v4780, %v4778
        %v4841 = vpack.c.bf16 %v4781, %v4779
        %v4842 = vpack.c.bf16 %v4784, %v4782
        %v4843 = vpack.c.bf16 %v4785, %v4783
        %v4844 = vpack.c.bf16 %v4788, %v4786
        %v4845 = vpack.c.bf16 %v4789, %v4787
        %v4846 = vpack.c.bf16 %v4792, %v4790
        %v4847 = vpack.c.bf16 %v4793, %v4791
        %v4848 = vpack.c.bf16 %v4796, %v4794
        %v4849 = vpack.c.bf16 %v4797, %v4795
        %v4850 = vpack.c.bf16 %v4800, %v4798
        %v4851 = vpack.c.bf16 %v4801, %v4799
        %v4852 = vpack.c.bf16 %v4804, %v4802
        %v4853 = vpack.c.bf16 %v4805, %v4803
        %v4854 = vld [vmem:[%s652] sm:$0xff]
        %v4855 = vld [vmem:[%s652 + $0x8] sm:$0xff]
        %v4856 = vld [vmem:[%s652 + $0x10] sm:$0xff]
        %v4857 = vld [vmem:[%s652 + $0x18] sm:$0xff]
        %v4858 = vld [vmem:[%s652 + $0x20] sm:$0xff]
        %v4859 = vld [vmem:[%s652 + $0x28] sm:$0xff]
        %v4860 = vld [vmem:[%s652 + $0x30] sm:$0xff]
        %v4861 = vld [vmem:[%s652 + $0x38] sm:$0xff]
        %v4862 = vld [vmem:[%s652 + $0x40] sm:$0xff]
        %v4863 = vld [vmem:[%s652 + $0x48] sm:$0xff]
        %v4864 = vld [vmem:[%s652 + $0x50] sm:$0xff]
        %v4865 = vld [vmem:[%s652 + $0x58] sm:$0xff]
        %v4866 = vld [vmem:[%s652 + $0x60] sm:$0xff]
        %v4867 = vld [vmem:[%s652 + $0x68] sm:$0xff]
        %v4868 = vld [vmem:[%s652 + $0x70] sm:$0xff]
        %v4869 = vld [vmem:[%s652 + $0x78] sm:$0xff]
        %4871 = vset.pattern.permute.xlu0 0
        %4872 = vperm.xlu0 %4871, %v4854
        %v4873 = vpop.permute.xlu0 %4872
        %4876 = vset.pattern.permute.xlu0 0
        %4877 = vperm.xlu0 %4876, %v4855
        %v4878 = vpop.permute.xlu0 %4877
        %4881 = vset.pattern.permute.xlu0 0
        %4882 = vperm.xlu0 %4881, %v4856
        %v4883 = vpop.permute.xlu0 %4882
        %4886 = vset.pattern.permute.xlu0 0
        %4887 = vperm.xlu0 %4886, %v4857
        %v4888 = vpop.permute.xlu0 %4887
        %4891 = vset.pattern.permute.xlu0 0
        %4892 = vperm.xlu0 %4891, %v4858
        %v4893 = vpop.permute.xlu0 %4892
        %4896 = vset.pattern.permute.xlu0 0
        %4897 = vperm.xlu0 %4896, %v4859
        %v4898 = vpop.permute.xlu0 %4897
        %4901 = vset.pattern.permute.xlu0 0
        %4902 = vperm.xlu0 %4901, %v4860
        %v4903 = vpop.permute.xlu0 %4902
        %4906 = vset.pattern.permute.xlu0 0
        %4907 = vperm.xlu0 %4906, %v4861
        %v4908 = vpop.permute.xlu0 %4907
        %4911 = vset.pattern.permute.xlu0 0
        %4912 = vperm.xlu0 %4911, %v4862
        %v4913 = vpop.permute.xlu0 %4912
        %4916 = vset.pattern.permute.xlu0 0
        %4917 = vperm.xlu0 %4916, %v4863
        %v4918 = vpop.permute.xlu0 %4917
        %4921 = vset.pattern.permute.xlu0 0
        %4922 = vperm.xlu0 %4921, %v4864
        %v4923 = vpop.permute.xlu0 %4922
        %4926 = vset.pattern.permute.xlu0 0
        %4927 = vperm.xlu0 %4926, %v4865
        %v4928 = vpop.permute.xlu0 %4927
        %4931 = vset.pattern.permute.xlu0 0
        %4932 = vperm.xlu0 %4931, %v4866
        %v4933 = vpop.permute.xlu0 %4932
        %4936 = vset.pattern.permute.xlu0 0
        %4937 = vperm.xlu0 %4936, %v4867
        %v4938 = vpop.permute.xlu0 %4937
        %4941 = vset.pattern.permute.xlu0 0
        %4942 = vperm.xlu0 %4941, %v4868
        %v4943 = vpop.permute.xlu0 %4942
        %4946 = vset.pattern.permute.xlu0 0
        %4947 = vperm.xlu0 %4946, %v4869
        %v4948 = vpop.permute.xlu0 %4947
        %v4966 = vunpack.c.l.b16 %v4806
        %v4967 = vunpack.c.h.b16 %v4806
        %v4968 = vunpack.c.l.b16 %v4807
        %v4969 = vunpack.c.h.b16 %v4807
        %v4970 = vunpack.c.l.b16 %v4808
        %v4971 = vunpack.c.h.b16 %v4808
        %v4972 = vunpack.c.l.b16 %v4809
        %v4973 = vunpack.c.h.b16 %v4809
        %v4974 = vunpack.c.l.b16 %v4810
        %v4975 = vunpack.c.h.b16 %v4810
        %v4976 = vunpack.c.l.b16 %v4811
        %v4977 = vunpack.c.h.b16 %v4811
        %v4978 = vunpack.c.l.b16 %v4812
        %v4979 = vunpack.c.h.b16 %v4812
        %v4980 = vunpack.c.l.b16 %v4813
        %v4981 = vunpack.c.h.b16 %v4813
        %v4982 = vunpack.c.l.b16 %v4814
        %v4983 = vunpack.c.h.b16 %v4814
        %v4984 = vunpack.c.l.b16 %v4815
        %v4985 = vunpack.c.h.b16 %v4815
        %v4986 = vunpack.c.l.b16 %v4816
        %v4987 = vunpack.c.h.b16 %v4816
        %v4988 = vunpack.c.l.b16 %v4817
        %v4989 = vunpack.c.h.b16 %v4817
        %v4990 = vunpack.c.l.b16 %v4818
        %v4991 = vunpack.c.h.b16 %v4818
        %v4992 = vunpack.c.l.b16 %v4819
        %v4993 = vunpack.c.h.b16 %v4819
        %v4994 = vunpack.c.l.b16 %v4820
        %v4995 = vunpack.c.h.b16 %v4820
        %v4996 = vunpack.c.l.b16 %v4821
        %v4997 = vunpack.c.h.b16 %v4821
        %v4998 = vpack.c.b16 %v4968, %v4966
        %v4999 = vpack.c.b16 %v4969, %v4967
        %v5000 = vpack.c.b16 %v4972, %v4970
        %v5001 = vpack.c.b16 %v4973, %v4971
        %v5002 = vpack.c.b16 %v4976, %v4974
        %v5003 = vpack.c.b16 %v4977, %v4975
        %v5004 = vpack.c.b16 %v4980, %v4978
        %v5005 = vpack.c.b16 %v4981, %v4979
        %v5006 = vpack.c.b16 %v4984, %v4982
        %v5007 = vpack.c.b16 %v4985, %v4983
        %v5008 = vpack.c.b16 %v4988, %v4986
        %v5009 = vpack.c.b16 %v4989, %v4987
        %v5010 = vpack.c.b16 %v4992, %v4990
        %v5011 = vpack.c.b16 %v4993, %v4991
        %v5012 = vpack.c.b16 %v4996, %v4994
        %v5013 = vpack.c.b16 %v4997, %v4995
        %5030 = vmatpush.bf16.msra.mxu0 %v4836
        %5031 = vmatpush.bf16.msra.mxu0 %v4834
        %5032 = vmatpush.bf16.msra.mxu0 %v4832
        %5033 = vmatpush.bf16.msra.mxu0 %v4830
        %5034 = vmatpush.bf16.msra.mxu0 %v4828
        %5035 = vmatpush.bf16.msra.mxu0 %v4826
        %5036 = vmatpush.bf16.msra.mxu0 %v4824
        %5037 = vmatpush.bf16.msra.mxu0 %v4822
        %5038 = vmatmul.bf16.gmra.mxu0 %v4998
        %v5039 = vpop.f32.mrf.mxu0
        %v5040 = vadd.f32 %v4873, %v5039
        %v5041 = vpop.f32.mrf.mxu0
        %v5042 = vadd.f32 %v4878, %v5041
        %5043 = vmatmul.bf16.gmra.mxu0 %v5000
        %v5044 = vpop.f32.mrf.mxu0
        %v5045 = vadd.f32 %v4883, %v5044
        %v5046 = vpop.f32.mrf.mxu0
        %v5047 = vadd.f32 %v4888, %v5046
        %5048 = vmatmul.bf16.gmra.mxu0 %v5002
        %v5049 = vpop.f32.mrf.mxu0
        %v5050 = vadd.f32 %v4893, %v5049
        %v5051 = vpop.f32.mrf.mxu0
        %v5052 = vadd.f32 %v4898, %v5051
        %5053 = vmatmul.bf16.gmra.mxu0 %v5004
        %v5054 = vpop.f32.mrf.mxu0
        %v5055 = vadd.f32 %v4903, %v5054
        %v5056 = vpop.f32.mrf.mxu0
        %v5057 = vadd.f32 %v4908, %v5056
        %5058 = vmatmul.bf16.gmra.mxu0 %v5006
        %v5059 = vpop.f32.mrf.mxu0
        %v5060 = vadd.f32 %v4913, %v5059
        %v5061 = vpop.f32.mrf.mxu0
        %v5062 = vadd.f32 %v4918, %v5061
        %5063 = vmatmul.bf16.gmra.mxu0 %v5008
        %v5064 = vpop.f32.mrf.mxu0
        %v5065 = vadd.f32 %v4923, %v5064
        %v5066 = vpop.f32.mrf.mxu0
        %v5067 = vadd.f32 %v4928, %v5066
        %5068 = vmatmul.bf16.gmra.mxu0 %v5010
        %v5069 = vpop.f32.mrf.mxu0
        %v5070 = vadd.f32 %v4933, %v5069
        %v5071 = vpop.f32.mrf.mxu0
        %v5072 = vadd.f32 %v4938, %v5071
        %5073 = vmatmul.bf16.gmra.mxu0 %v5012
        %v5074 = vpop.f32.mrf.mxu0
        %v5075 = vadd.f32 %v4943, %v5074
        %v5076 = vpop.f32.mrf.mxu0
        %v5077 = vadd.f32 %v4948, %v5076
        %5078 = vdwg.mxu0
        %5079 = vmatpush.bf16.msra.mxu0 %v4852
        %5080 = vmatpush.bf16.msra.mxu0 %v4850
        %5081 = vmatpush.bf16.msra.mxu0 %v4848
        %5082 = vmatpush.bf16.msra.mxu0 %v4846
        %5083 = vmatpush.bf16.msra.mxu0 %v4844
        %5084 = vmatpush.bf16.msra.mxu0 %v4842
        %5085 = vmatpush.bf16.msra.mxu0 %v4840
        %5086 = vmatpush.bf16.msra.mxu0 %v4838
        %5087 = vmatmul.bf16.gmra.mxu0 %v4999
        %v5088 = vpop.f32.mrf.mxu0
        %v5089 = vadd.f32 %v5040, %v5088
        %v5090 = vpop.f32.mrf.mxu0
        %v5091 = vadd.f32 %v5042, %v5090
        %5092 = vmatmul.bf16.gmra.mxu0 %v5001
        %v5093 = vpop.f32.mrf.mxu0
        %v5094 = vadd.f32 %v5045, %v5093
        %v5095 = vpop.f32.mrf.mxu0
        %v5096 = vadd.f32 %v5047, %v5095
        %5097 = vmatmul.bf16.gmra.mxu0 %v5003
        %v5098 = vpop.f32.mrf.mxu0
        %v5099 = vadd.f32 %v5050, %v5098
        %v5100 = vpop.f32.mrf.mxu0
        %v5101 = vadd.f32 %v5052, %v5100
        %5102 = vmatmul.bf16.gmra.mxu0 %v5005
        %v5103 = vpop.f32.mrf.mxu0
        %v5104 = vadd.f32 %v5055, %v5103
        %v5105 = vpop.f32.mrf.mxu0
        %v5106 = vadd.f32 %v5057, %v5105
        %5107 = vmatmul.bf16.gmra.mxu0 %v5007
        %v5108 = vpop.f32.mrf.mxu0
        %v5109 = vadd.f32 %v5060, %v5108
        %v5110 = vpop.f32.mrf.mxu0
        %v5111 = vadd.f32 %v5062, %v5110
        %5112 = vmatmul.bf16.gmra.mxu0 %v5009
        %v5113 = vpop.f32.mrf.mxu0
        %v5114 = vadd.f32 %v5065, %v5113
        %v5115 = vpop.f32.mrf.mxu0
        %v5116 = vadd.f32 %v5067, %v5115
        %5117 = vmatmul.bf16.gmra.mxu0 %v5011
        %v5118 = vpop.f32.mrf.mxu0
        %v5119 = vadd.f32 %v5070, %v5118
        %v5120 = vpop.f32.mrf.mxu0
        %v5121 = vadd.f32 %v5072, %v5120
        %5122 = vmatmul.bf16.gmra.mxu0 %v5013
        %v5123 = vpop.f32.mrf.mxu0
        %v5124 = vadd.f32 %v5075, %v5123
        %v5125 = vpop.f32.mrf.mxu0
        %v5126 = vadd.f32 %v5077, %v5125
        %5127 = vdwg.mxu0
        %5128 = vmatpush.bf16.msra.mxu0 %v4837
        %5129 = vmatpush.bf16.msra.mxu0 %v4835
        %5130 = vmatpush.bf16.msra.mxu0 %v4833
        %5131 = vmatpush.bf16.msra.mxu0 %v4831
        %5132 = vmatpush.bf16.msra.mxu0 %v4829
        %5133 = vmatpush.bf16.msra.mxu0 %v4827
        %5134 = vmatpush.bf16.msra.mxu0 %v4825
        %5135 = vmatpush.bf16.msra.mxu0 %v4823
        %5136 = vmatmul.bf16.gmra.mxu0 %v4998
        %v5137 = vpop.f32.mrf.mxu0
        %v5138 = vadd.f32 %v4873, %v5137
        %v5139 = vpop.f32.mrf.mxu0
        %v5140 = vadd.f32 %v4878, %v5139
        %5141 = vmatmul.bf16.gmra.mxu0 %v5000
        %v5142 = vpop.f32.mrf.mxu0
        %v5143 = vadd.f32 %v4883, %v5142
        %v5144 = vpop.f32.mrf.mxu0
        %v5145 = vadd.f32 %v4888, %v5144
        %5146 = vmatmul.bf16.gmra.mxu0 %v5002
        %v5147 = vpop.f32.mrf.mxu0
        %v5148 = vadd.f32 %v4893, %v5147
        %v5149 = vpop.f32.mrf.mxu0
        %v5150 = vadd.f32 %v4898, %v5149
        %5151 = vmatmul.bf16.gmra.mxu0 %v5004
        %v5152 = vpop.f32.mrf.mxu0
        %v5153 = vadd.f32 %v4903, %v5152
        %v5154 = vpop.f32.mrf.mxu0
        %v5155 = vadd.f32 %v4908, %v5154
        %5156 = vmatmul.bf16.gmra.mxu0 %v5006
        %v5157 = vpop.f32.mrf.mxu0
        %v5158 = vadd.f32 %v4913, %v5157
        %v5159 = vpop.f32.mrf.mxu0
        %v5160 = vadd.f32 %v4918, %v5159
        %5161 = vmatmul.bf16.gmra.mxu0 %v5008
        %v5162 = vpop.f32.mrf.mxu0
        %v5163 = vadd.f32 %v4923, %v5162
        %v5164 = vpop.f32.mrf.mxu0
        %v5165 = vadd.f32 %v4928, %v5164
        %5166 = vmatmul.bf16.gmra.mxu0 %v5010
        %v5167 = vpop.f32.mrf.mxu0
        %v5168 = vadd.f32 %v4933, %v5167
        %v5169 = vpop.f32.mrf.mxu0
        %v5170 = vadd.f32 %v4938, %v5169
        %5171 = vmatmul.bf16.gmra.mxu0 %v5012
        %v5172 = vpop.f32.mrf.mxu0
        %v5173 = vadd.f32 %v4943, %v5172
        %v5174 = vpop.f32.mrf.mxu0
        %v5175 = vadd.f32 %v4948, %v5174
        %5176 = vdwg.mxu0
        %5177 = vmatpush.bf16.msra.mxu0 %v4853
        %5178 = vmatpush.bf16.msra.mxu0 %v4851
        %5179 = vmatpush.bf16.msra.mxu0 %v4849
        %5180 = vmatpush.bf16.msra.mxu0 %v4847
        %5181 = vmatpush.bf16.msra.mxu0 %v4845
        %5182 = vmatpush.bf16.msra.mxu0 %v4843
        %5183 = vmatpush.bf16.msra.mxu0 %v4841
        %5184 = vmatpush.bf16.msra.mxu0 %v4839
        %5185 = vmatmul.bf16.gmra.mxu0 %v4999
        %v5186 = vpop.f32.mrf.mxu0
        %v5187 = vadd.f32 %v5138, %v5186
        %v5188 = vpop.f32.mrf.mxu0
        %v5189 = vadd.f32 %v5140, %v5188
        %5190 = vmatmul.bf16.gmra.mxu0 %v5001
        %v5191 = vpop.f32.mrf.mxu0
        %v5192 = vadd.f32 %v5143, %v5191
        %v5193 = vpop.f32.mrf.mxu0
        %v5194 = vadd.f32 %v5145, %v5193
        %5195 = vmatmul.bf16.gmra.mxu0 %v5003
        %v5196 = vpop.f32.mrf.mxu0
        %v5197 = vadd.f32 %v5148, %v5196
        %v5198 = vpop.f32.mrf.mxu0
        %v5199 = vadd.f32 %v5150, %v5198
        %5200 = vmatmul.bf16.gmra.mxu0 %v5005
        %v5201 = vpop.f32.mrf.mxu0
        %v5202 = vadd.f32 %v5153, %v5201
        %v5203 = vpop.f32.mrf.mxu0
        %v5204 = vadd.f32 %v5155, %v5203
        %5205 = vmatmul.bf16.gmra.mxu0 %v5007
        %v5206 = vpop.f32.mrf.mxu0
        %v5207 = vadd.f32 %v5158, %v5206
        %v5208 = vpop.f32.mrf.mxu0
        %v5209 = vadd.f32 %v5160, %v5208
        %5210 = vmatmul.bf16.gmra.mxu0 %v5009
        %v5211 = vpop.f32.mrf.mxu0
        %v5212 = vadd.f32 %v5163, %v5211
        %v5213 = vpop.f32.mrf.mxu0
        %v5214 = vadd.f32 %v5165, %v5213
        %5215 = vmatmul.bf16.gmra.mxu0 %v5011
        %v5216 = vpop.f32.mrf.mxu0
        %v5217 = vadd.f32 %v5168, %v5216
        %v5218 = vpop.f32.mrf.mxu0
        %v5219 = vadd.f32 %v5170, %v5218
        %5220 = vmatmul.bf16.gmra.mxu0 %v5013
        %v5221 = vpop.f32.mrf.mxu0
        %v5222 = vadd.f32 %v5173, %v5221
        %v5223 = vpop.f32.mrf.mxu0
        %v5224 = vadd.f32 %v5175, %v5223
        %5225 = vdwg.mxu0
        %vm5226 = vcmp.gt.f32.partialorder %v5089, 0.0
        %vm5227 = vcmp.gt.f32.partialorder %v5187, 0.0
        %vm5228 = vcmp.gt.f32.partialorder %v5091, 0.0
        %vm5229 = vcmp.gt.f32.partialorder %v5189, 0.0
        %vm5230 = vcmp.gt.f32.partialorder %v5094, 0.0
        %vm5231 = vcmp.gt.f32.partialorder %v5192, 0.0
        %vm5232 = vcmp.gt.f32.partialorder %v5096, 0.0
        %vm5233 = vcmp.gt.f32.partialorder %v5194, 0.0
        %vm5234 = vcmp.gt.f32.partialorder %v5099, 0.0
        %vm5235 = vcmp.gt.f32.partialorder %v5197, 0.0
        %vm5236 = vcmp.gt.f32.partialorder %v5101, 0.0
        %vm5237 = vcmp.gt.f32.partialorder %v5199, 0.0
        %vm5238 = vcmp.gt.f32.partialorder %v5104, 0.0
        %vm5239 = vcmp.gt.f32.partialorder %v5202, 0.0
        %vm5240 = vcmp.gt.f32.partialorder %v5106, 0.0
        %vm5241 = vcmp.gt.f32.partialorder %v5204, 0.0
        %vm5242 = vcmp.gt.f32.partialorder %v5109, 0.0
        %vm5243 = vcmp.gt.f32.partialorder %v5207, 0.0
        %vm5244 = vcmp.gt.f32.partialorder %v5111, 0.0
        %vm5245 = vcmp.gt.f32.partialorder %v5209, 0.0
        %vm5246 = vcmp.gt.f32.partialorder %v5114, 0.0
        %vm5247 = vcmp.gt.f32.partialorder %v5212, 0.0
        %vm5248 = vcmp.gt.f32.partialorder %v5116, 0.0
        %vm5249 = vcmp.gt.f32.partialorder %v5214, 0.0
        %vm5250 = vcmp.gt.f32.partialorder %v5119, 0.0
        %vm5251 = vcmp.gt.f32.partialorder %v5217, 0.0
        %vm5252 = vcmp.gt.f32.partialorder %v5121, 0.0
        %vm5253 = vcmp.gt.f32.partialorder %v5219, 0.0
        %vm5254 = vcmp.gt.f32.partialorder %v5124, 0.0
        %vm5255 = vcmp.gt.f32.partialorder %v5222, 0.0
        %vm5256 = vcmp.gt.f32.partialorder %v5126, 0.0
        %vm5257 = vcmp.gt.f32.partialorder %v5224, 0.0
        %v5258 = vmul.f32 %v5089, 0.1
        %v5259 = vmul.f32 %v5187, 0.1
        %v5260 = vmul.f32 %v5091, 0.1
        %v5261 = vmul.f32 %v5189, 0.1
        %v5262 = vmul.f32 %v5094, 0.1
        %v5263 = vmul.f32 %v5192, 0.1
        %v5264 = vmul.f32 %v5096, 0.1
        %v5265 = vmul.f32 %v5194, 0.1
        %v5266 = vmul.f32 %v5099, 0.1
        %v5267 = vmul.f32 %v5197, 0.1
        %v5268 = vmul.f32 %v5101, 0.1
        %v5269 = vmul.f32 %v5199, 0.1
        %v5270 = vmul.f32 %v5104, 0.1
        %v5271 = vmul.f32 %v5202, 0.1
        %v5272 = vmul.f32 %v5106, 0.1
        %v5273 = vmul.f32 %v5204, 0.1
        %v5274 = vmul.f32 %v5109, 0.1
        %v5275 = vmul.f32 %v5207, 0.1
        %v5276 = vmul.f32 %v5111, 0.1
        %v5277 = vmul.f32 %v5209, 0.1
        %v5278 = vmul.f32 %v5114, 0.1
        %v5279 = vmul.f32 %v5212, 0.1
        %v5280 = vmul.f32 %v5116, 0.1
        %v5281 = vmul.f32 %v5214, 0.1
        %v5282 = vmul.f32 %v5119, 0.1
        %v5283 = vmul.f32 %v5217, 0.1
        %v5284 = vmul.f32 %v5121, 0.1
        %v5285 = vmul.f32 %v5219, 0.1
        %v5286 = vmul.f32 %v5124, 0.1
        %v5287 = vmul.f32 %v5222, 0.1
        %v5288 = vmul.f32 %v5126, 0.1
        %v5289 = vmul.f32 %v5224, 0.1
        %v5290 = vsel %vm5226, %v5089, %v5258
        %v5291 = vsel %vm5227, %v5187, %v5259
        %v5292 = vsel %vm5228, %v5091, %v5260
        %v5293 = vsel %vm5229, %v5189, %v5261
        %v5294 = vsel %vm5230, %v5094, %v5262
        %v5295 = vsel %vm5231, %v5192, %v5263
        %v5296 = vsel %vm5232, %v5096, %v5264
        %v5297 = vsel %vm5233, %v5194, %v5265
        %v5298 = vsel %vm5234, %v5099, %v5266
        %v5299 = vsel %vm5235, %v5197, %v5267
        %v5300 = vsel %vm5236, %v5101, %v5268
        %v5301 = vsel %vm5237, %v5199, %v5269
        %v5302 = vsel %vm5238, %v5104, %v5270
        %v5303 = vsel %vm5239, %v5202, %v5271
        %v5304 = vsel %vm5240, %v5106, %v5272
        %v5305 = vsel %vm5241, %v5204, %v5273
        %v5306 = vsel %vm5242, %v5109, %v5274
        %v5307 = vsel %vm5243, %v5207, %v5275
        %v5308 = vsel %vm5244, %v5111, %v5276
        %v5309 = vsel %vm5245, %v5209, %v5277
        %v5310 = vsel %vm5246, %v5114, %v5278
        %v5311 = vsel %vm5247, %v5212, %v5279
        %v5312 = vsel %vm5248, %v5116, %v5280
        %v5313 = vsel %vm5249, %v5214, %v5281
        %v5314 = vsel %vm5250, %v5119, %v5282
        %v5315 = vsel %vm5251, %v5217, %v5283
        %v5316 = vsel %vm5252, %v5121, %v5284
        %v5317 = vsel %vm5253, %v5219, %v5285
        %v5318 = vsel %vm5254, %v5124, %v5286
        %v5319 = vsel %vm5255, %v5222, %v5287
        %v5320 = vsel %vm5256, %v5126, %v5288
        %v5321 = vsel %vm5257, %v5224, %v5289
        %v5322 = vld [vmem:[%s657] sm:$0xf]
        %v5323 = vld [vmem:[%s657 + $0x4] sm:$0xf]
        %v5324 = vld [vmem:[%s657 + $0x8] sm:$0xf]
        %v5325 = vld [vmem:[%s657 + $0xc] sm:$0xf]
        %v5326 = vld [vmem:[%s657 + $0x10] sm:$0xf]
        %v5327 = vld [vmem:[%s657 + $0x14] sm:$0xf]
        %v5328 = vld [vmem:[%s657 + $0x18] sm:$0xf]
        %v5329 = vld [vmem:[%s657 + $0x1c] sm:$0xf]
        %v5330 = vpack.c.bf16 %v5292, %v5290
        %v5331 = vpack.c.bf16 %v5293, %v5291
        %v5332 = vpack.c.bf16 %v5296, %v5294
        %v5333 = vpack.c.bf16 %v5297, %v5295
        %v5334 = vpack.c.bf16 %v5300, %v5298
        %v5335 = vpack.c.bf16 %v5301, %v5299
        %v5336 = vpack.c.bf16 %v5304, %v5302
        %v5337 = vpack.c.bf16 %v5305, %v5303
        %v5338 = vpack.c.bf16 %v5308, %v5306
        %v5339 = vpack.c.bf16 %v5309, %v5307
        %v5340 = vpack.c.bf16 %v5312, %v5310
        %v5341 = vpack.c.bf16 %v5313, %v5311
        %v5342 = vpack.c.bf16 %v5316, %v5314
        %v5343 = vpack.c.bf16 %v5317, %v5315
        %v5344 = vpack.c.bf16 %v5320, %v5318
        %v5345 = vpack.c.bf16 %v5321, %v5319
        %v5346 = vld [vmem:[%s662] sm:$0xff]
        %v5347 = vld [vmem:[%s662 + $0x8] sm:$0xff]
        %v5348 = vld [vmem:[%s662 + $0x10] sm:$0xff]
        %v5349 = vld [vmem:[%s662 + $0x18] sm:$0xff]
        %v5350 = vld [vmem:[%s662 + $0x20] sm:$0xff]
        %v5351 = vld [vmem:[%s662 + $0x28] sm:$0xff]
        %v5352 = vld [vmem:[%s662 + $0x30] sm:$0xff]
        %v5353 = vld [vmem:[%s662 + $0x38] sm:$0xff]
        %5355 = vset.pattern.permute.xlu0 0
        %5356 = vperm.xlu0 %5355, %v5346
        %v5357 = vpop.permute.xlu0 %5356
        %5360 = vset.pattern.permute.xlu0 0
        %5361 = vperm.xlu0 %5360, %v5347
        %v5362 = vpop.permute.xlu0 %5361
        %5365 = vset.pattern.permute.xlu0 0
        %5366 = vperm.xlu0 %5365, %v5348
        %v5367 = vpop.permute.xlu0 %5366
        %5370 = vset.pattern.permute.xlu0 0
        %5371 = vperm.xlu0 %5370, %v5349
        %v5372 = vpop.permute.xlu0 %5371
        %5375 = vset.pattern.permute.xlu0 0
        %5376 = vperm.xlu0 %5375, %v5350
        %v5377 = vpop.permute.xlu0 %5376
        %5380 = vset.pattern.permute.xlu0 0
        %5381 = vperm.xlu0 %5380, %v5351
        %v5382 = vpop.permute.xlu0 %5381
        %5385 = vset.pattern.permute.xlu0 0
        %5386 = vperm.xlu0 %5385, %v5352
        %v5387 = vpop.permute.xlu0 %5386
        %5390 = vset.pattern.permute.xlu0 0
        %5391 = vperm.xlu0 %5390, %v5353
        %v5392 = vpop.permute.xlu0 %5391
        %v5402 = vunpack.c.l.b16 %v5322
        %v5403 = vunpack.c.l.b16 %v5323
        %v5404 = vunpack.c.l.b16 %v5324
        %v5405 = vunpack.c.l.b16 %v5325
        %v5406 = vunpack.c.l.b16 %v5326
        %v5407 = vunpack.c.l.b16 %v5327
        %v5408 = vunpack.c.l.b16 %v5328
        %v5409 = vunpack.c.l.b16 %v5329
        %v5410 = vpack.c.b16 %v5403, %v5402
        %v5411 = vpack.c.b16 %v5405, %v5404
        %v5412 = vpack.c.b16 %v5407, %v5406
        %v5413 = vpack.c.b16 %v5409, %v5408
        %5418 = vmatpush.bf16.msra.mxu0 %v5344
        %5419 = vmatpush.bf16.msra.mxu0 %v5342
        %5420 = vmatpush.bf16.msra.mxu0 %v5340
        %5421 = vmatpush.bf16.msra.mxu0 %v5338
        %5422 = vmatpush.bf16.msra.mxu0 %v5336
        %5423 = vmatpush.bf16.msra.mxu0 %v5334
        %5424 = vmatpush.bf16.msra.mxu0 %v5332
        %5425 = vmatpush.bf16.msra.mxu0 %v5330
        %5426 = vmatmul.bf16.gmra.mxu0 %v5410
        %v5427 = vpop.f32.mrf.mxu0
        %v5428 = vadd.f32 %v5357, %v5427
        %v5429 = vpop.f32.mrf.mxu0
        %v5430 = vadd.f32 %v5362, %v5429
        %5431 = vmatmul.bf16.gmra.mxu0 %v5411
        %v5432 = vpop.f32.mrf.mxu0
        %v5433 = vadd.f32 %v5367, %v5432
        %v5434 = vpop.f32.mrf.mxu0
        %v5435 = vadd.f32 %v5372, %v5434
        %5436 = vmatmul.bf16.gmra.mxu0 %v5412
        %v5437 = vpop.f32.mrf.mxu0
        %v5438 = vadd.f32 %v5377, %v5437
        %v5439 = vpop.f32.mrf.mxu0
        %v5440 = vadd.f32 %v5382, %v5439
        %5441 = vmatmul.bf16.gmra.mxu0 %v5413
        %v5442 = vpop.f32.mrf.mxu0
        %v5443 = vadd.f32 %v5387, %v5442
        %v5444 = vpop.f32.mrf.mxu0
        %v5445 = vadd.f32 %v5392, %v5444
        %5446 = vdwg.mxu0
        %5447 = vmatpush.bf16.msra.mxu0 %v5345
        %5448 = vmatpush.bf16.msra.mxu0 %v5343
        %5449 = vmatpush.bf16.msra.mxu0 %v5341
        %5450 = vmatpush.bf16.msra.mxu0 %v5339
        %5451 = vmatpush.bf16.msra.mxu0 %v5337
        %5452 = vmatpush.bf16.msra.mxu0 %v5335
        %5453 = vmatpush.bf16.msra.mxu0 %v5333
        %5454 = vmatpush.bf16.msra.mxu0 %v5331
        %5455 = vmatmul.bf16.gmra.mxu0 %v5410
        %v5456 = vpop.f32.mrf.mxu0
        %v5457 = vadd.f32 %v5357, %v5456
        %v5458 = vpop.f32.mrf.mxu0
        %v5459 = vadd.f32 %v5362, %v5458
        %5460 = vmatmul.bf16.gmra.mxu0 %v5411
        %v5461 = vpop.f32.mrf.mxu0
        %v5462 = vadd.f32 %v5367, %v5461
        %v5463 = vpop.f32.mrf.mxu0
        %v5464 = vadd.f32 %v5372, %v5463
        %5465 = vmatmul.bf16.gmra.mxu0 %v5412
        %v5466 = vpop.f32.mrf.mxu0
        %v5467 = vadd.f32 %v5377, %v5466
        %v5468 = vpop.f32.mrf.mxu0
        %v5469 = vadd.f32 %v5382, %v5468
        %5470 = vmatmul.bf16.gmra.mxu0 %v5413
        %v5471 = vpop.f32.mrf.mxu0
        %v5472 = vadd.f32 %v5387, %v5471
        %v5473 = vpop.f32.mrf.mxu0
        %v5474 = vadd.f32 %v5392, %v5473
        %5475 = vdwg.mxu0
        %vm5476 = vcmp.gt.f32.partialorder %v5428, 0.0
        %vm5477 = vcmp.gt.f32.partialorder %v5457, 0.0
        %vm5478 = vcmp.gt.f32.partialorder %v5430, 0.0
        %vm5479 = vcmp.gt.f32.partialorder %v5459, 0.0
        %vm5480 = vcmp.gt.f32.partialorder %v5433, 0.0
        %vm5481 = vcmp.gt.f32.partialorder %v5462, 0.0
        %vm5482 = vcmp.gt.f32.partialorder %v5435, 0.0
        %vm5483 = vcmp.gt.f32.partialorder %v5464, 0.0
        %vm5484 = vcmp.gt.f32.partialorder %v5438, 0.0
        %vm5485 = vcmp.gt.f32.partialorder %v5467, 0.0
        %vm5486 = vcmp.gt.f32.partialorder %v5440, 0.0
        %vm5487 = vcmp.gt.f32.partialorder %v5469, 0.0
        %vm5488 = vcmp.gt.f32.partialorder %v5443, 0.0
        %vm5489 = vcmp.gt.f32.partialorder %v5472, 0.0
        %vm5490 = vcmp.gt.f32.partialorder %v5445, 0.0
        %vm5491 = vcmp.gt.f32.partialorder %v5474, 0.0
        %v5492 = vmul.f32 %v5428, 0.1
        %v5493 = vmul.f32 %v5457, 0.1
        %v5494 = vmul.f32 %v5430, 0.1
        %v5495 = vmul.f32 %v5459, 0.1
        %v5496 = vmul.f32 %v5433, 0.1
        %v5497 = vmul.f32 %v5462, 0.1
        %v5498 = vmul.f32 %v5435, 0.1
        %v5499 = vmul.f32 %v5464, 0.1
        %v5500 = vmul.f32 %v5438, 0.1
        %v5501 = vmul.f32 %v5467, 0.1
        %v5502 = vmul.f32 %v5440, 0.1
        %v5503 = vmul.f32 %v5469, 0.1
        %v5504 = vmul.f32 %v5443, 0.1
        %v5505 = vmul.f32 %v5472, 0.1
        %v5506 = vmul.f32 %v5445, 0.1
        %v5507 = vmul.f32 %v5474, 0.1
        %v5508 = vsel %vm5476, %v5428, %v5492
        %v5509 = vsel %vm5477, %v5457, %v5493
        %v5510 = vsel %vm5478, %v5430, %v5494
        %v5511 = vsel %vm5479, %v5459, %v5495
        %v5512 = vsel %vm5480, %v5433, %v5496
        %v5513 = vsel %vm5481, %v5462, %v5497
        %v5514 = vsel %vm5482, %v5435, %v5498
        %v5515 = vsel %vm5483, %v5464, %v5499
        %v5516 = vsel %vm5484, %v5438, %v5500
        %v5517 = vsel %vm5485, %v5467, %v5501
        %v5518 = vsel %vm5486, %v5440, %v5502
        %v5519 = vsel %vm5487, %v5469, %v5503
        %v5520 = vsel %vm5488, %v5443, %v5504
        %v5521 = vsel %vm5489, %v5472, %v5505
        %v5522 = vsel %vm5490, %v5445, %v5506
        %v5523 = vsel %vm5491, %v5474, %v5507
        %v5524 = vld [vmem:[%s11] sm:$0xff]
        %v5525 = vld [vmem:[%s11 + $0x8] sm:$0xff]
        %v5526 = vld [vmem:[%s11 + $0x10] sm:$0xff]
        %v5527 = vld [vmem:[%s11 + $0x18] sm:$0xff]
        %v5528 = vld [vmem:[%s11 + $0x20] sm:$0xff]
        %v5529 = vld [vmem:[%s11 + $0x28] sm:$0xff]
        %v5530 = vld [vmem:[%s11 + $0x30] sm:$0xff]
        %v5531 = vld [vmem:[%s11 + $0x38] sm:$0xff]
        %v5532 = vld [vmem:[%s11 + $0x40] sm:$0xff]
        %v5533 = vld [vmem:[%s11 + $0x48] sm:$0xff]
        %v5534 = vld [vmem:[%s11 + $0x50] sm:$0xff]
        %v5535 = vld [vmem:[%s11 + $0x58] sm:$0xff]
        %v5536 = vld [vmem:[%s11 + $0x60] sm:$0xff]
        %v5537 = vld [vmem:[%s11 + $0x68] sm:$0xff]
        %v5538 = vld [vmem:[%s11 + $0x70] sm:$0xff]
        %v5539 = vld [vmem:[%s11 + $0x78] sm:$0xff]
        %v5540 = vld [vmem:[%s11 + $0x80] sm:$0xff]
        %v5541 = vld [vmem:[%s11 + $0x88] sm:$0xff]
        %v5542 = vld [vmem:[%s11 + $0x90] sm:$0xff]
        %v5543 = vld [vmem:[%s11 + $0x98] sm:$0xff]
        %v5544 = vld [vmem:[%s11 + $0xa0] sm:$0xff]
        %v5545 = vld [vmem:[%s11 + $0xa8] sm:$0xff]
        %v5546 = vld [vmem:[%s11 + $0xb0] sm:$0xff]
        %v5547 = vld [vmem:[%s11 + $0xb8] sm:$0xff]
        %v5548 = vld [vmem:[%s11 + $0xc0] sm:$0xf]
        %vm5549 = vcmask 556032
        %v5551 = vsel %vm5549, %v5509, 0
        %v5554 = vsel %vm5549, %v5511, 0
        %v5557 = vsel %vm5549, %v5513, 0
        %v5560 = vsel %vm5549, %v5515, 0
        %v5563 = vsel %vm5549, %v5517, 0
        %v5566 = vsel %vm5549, %v5519, 0
        %v5569 = vsel %vm5549, %v5521, 0
        %v5572 = vsel %vm5549, %v5523, 0
        %vm5574 = vcmask 1043456
        %v5576 = vsel %vm5574, %v5548, 0
        %5578 = vmatpush.msra.mxu0 %v5539
        %5579 = vmatpush.msra.mxu0 %v5538
        %5580 = vmatpush.msra.mxu0 %v5537
        %5581 = vmatpush.msra.mxu0 %v5536
        %5582 = vmatpush.msra.mxu0 %v5535
        %5583 = vmatpush.msra.mxu0 %v5534
        %5584 = vmatpush.msra.mxu0 %v5533
        %5585 = vmatpush.msra.mxu0 %v5532
        %5586 = vmatpush.msra.mxu0 %v5531
        %5587 = vmatpush.msra.mxu0 %v5530
        %5588 = vmatpush.msra.mxu0 %v5529
        %5589 = vmatpush.msra.mxu0 %v5528
        %5590 = vmatpush.msra.mxu0 %v5527
        %5591 = vmatpush.msra.mxu0 %v5526
        %5592 = vmatpush.msra.mxu0 %v5525
        %5593 = vmatpush.msra.mxu0 %v5524
        %5594 = vmatmul.f32.gmra.mxu0 %v5508
        %v5595 = vpop.f32.mrf.mxu0
        %v5596 = vadd.f32 0.0, %v5595
        %5597 = vmatmul.f32.gmra.mxu0 %v5510
        %v5598 = vpop.f32.mrf.mxu0
        %v5599 = vadd.f32 0.0, %v5598
        %5600 = vmatmul.f32.gmra.mxu0 %v5512
        %v5601 = vpop.f32.mrf.mxu0
        %v5602 = vadd.f32 0.0, %v5601
        %5603 = vmatmul.f32.gmra.mxu0 %v5514
        %v5604 = vpop.f32.mrf.mxu0
        %v5605 = vadd.f32 0.0, %v5604
        %5606 = vmatmul.f32.gmra.mxu0 %v5516
        %v5607 = vpop.f32.mrf.mxu0
        %v5608 = vadd.f32 0.0, %v5607
        %5609 = vmatmul.f32.gmra.mxu0 %v5518
        %v5610 = vpop.f32.mrf.mxu0
        %v5611 = vadd.f32 0.0, %v5610
        %5612 = vmatmul.f32.gmra.mxu0 %v5520
        %v5613 = vpop.f32.mrf.mxu0
        %v5614 = vadd.f32 0.0, %v5613
        %5615 = vmatmul.f32.gmra.mxu0 %v5522
        %v5616 = vpop.f32.mrf.mxu0
        %v5617 = vadd.f32 0.0, %v5616
        %5618 = vdwg.mxu0
        %5619 = vmatpush.msra.mxu0 0.0
        %5620 = vmatpush.msra.mxu0 0.0
        %5621 = vmatpush.msra.mxu0 0.0
        %5622 = vmatpush.msra.mxu0 0.0
        %5623 = vmatpush.msra.mxu0 0.0
        %5624 = vmatpush.msra.mxu0 0.0
        %5625 = vmatpush.msra.mxu0 0.0
        %5626 = vmatpush.msra.mxu0 %v5576
        %5627 = vmatpush.msra.mxu0 %v5547
        %5628 = vmatpush.msra.mxu0 %v5546
        %5629 = vmatpush.msra.mxu0 %v5545
        %5630 = vmatpush.msra.mxu0 %v5544
        %5631 = vmatpush.msra.mxu0 %v5543
        %5632 = vmatpush.msra.mxu0 %v5542
        %5633 = vmatpush.msra.mxu0 %v5541
        %5634 = vmatpush.msra.mxu0 %v5540
        %5635 = vmatmul.f32.gmra.mxu0 %v5551
        %v5636 = vpop.f32.mrf.mxu0
        %v5637 = vadd.f32 %v5596, %v5636
        %5638 = vmatmul.f32.gmra.mxu0 %v5554
        %v5639 = vpop.f32.mrf.mxu0
        %v5640 = vadd.f32 %v5599, %v5639
        %5641 = vmatmul.f32.gmra.mxu0 %v5557
        %v5642 = vpop.f32.mrf.mxu0
        %v5643 = vadd.f32 %v5602, %v5642
        %5644 = vmatmul.f32.gmra.mxu0 %v5560
        %v5645 = vpop.f32.mrf.mxu0
        %v5646 = vadd.f32 %v5605, %v5645
        %5647 = vmatmul.f32.gmra.mxu0 %v5563
        %v5648 = vpop.f32.mrf.mxu0
        %v5649 = vadd.f32 %v5608, %v5648
        %5650 = vmatmul.f32.gmra.mxu0 %v5566
        %v5651 = vpop.f32.mrf.mxu0
        %v5652 = vadd.f32 %v5611, %v5651
        %5653 = vmatmul.f32.gmra.mxu0 %v5569
        %v5654 = vpop.f32.mrf.mxu0
        %v5655 = vadd.f32 %v5614, %v5654
        %5656 = vmatmul.f32.gmra.mxu0 %v5572
        %v5657 = vpop.f32.mrf.mxu0
        %v5658 = vadd.f32 %v5617, %v5657
        %5659 = vdwg.mxu0
        %vm5660 = vcmask 400384
        %5661 = vst.msk [vmem:[%s671] sm:$0xff] %vm5660, %v5637
        %5662 = vst.msk [vmem:[%s671 + $0x8] sm:$0xff] %vm5660, %v5640
        %5663 = vst.msk [vmem:[%s671 + $0x10] sm:$0xff] %vm5660, %v5643
        %5664 = vst.msk [vmem:[%s671 + $0x18] sm:$0xff] %vm5660, %v5646
        %5665 = vst.msk [vmem:[%s671 + $0x20] sm:$0xff] %vm5660, %v5649
        %5666 = vst.msk [vmem:[%s671 + $0x28] sm:$0xff] %vm5660, %v5652
        %5667 = vst.msk [vmem:[%s671 + $0x30] sm:$0xff] %vm5660, %v5655
        %5668 = vst.msk [vmem:[%s671 + $0x38] sm:$0xff] %vm5660, %v5658
        %p5669 = scmp.lt.s32.totalorder %s30, 1
        %s5670 = scalar_select %p5669, %s30, 1
        %p5671 = scmp.lt.s32.totalorder %s31, 1
        %s5672 = scalar_select %p5671, %s31, 1
        %s5673 = smul.addr %s5672, 8
        %s5674 = smul.addr %s5670, 16
        %s5675 = sadd.s32 %s5673, %s5674
        %s5676 = smul.addr %s5675, 8
        %s5677 = scalar_lea.vmem %s12, %s5676
        // Predicated region
        $region73: #{tpu_custom_call.1} parent=67 // pred_check
          %p5678 = pneg %p367
        $region74: #{tpu_custom_call.1} parent=67 // pred_check_branch
          %5680 = sbr.rel (%p5678) target = $region76
        $region75: #{tpu_custom_call.1} parent=67 // pred_region
          _
        $region76: #{tpu_custom_call.1} parent=67 // pred_fallthru
          _
      $region68: #{tpu_custom_call.1} parent=5 // pred_fallthru
        _
      %p5681 = scmp.le.s32.totalorder 2, %s21
      // Predicated region
      $region77: #{tpu_custom_call.1} parent=5 // pred_check
        %p5682 = pneg %p5681
      $region78: #{tpu_custom_call.1} parent=5 // pred_check_branch
        %5684 = sbr.rel (%p5682) target = $region80
      $region79: #{tpu_custom_call.1} parent=5 // pred_region
        %s5685 = ssub.s32 %s21, 2
        // Predicated region
        $region81: #{tpu_custom_call.1} parent=79 // pred_check
          %p5686 = pneg %p373
        $region82: #{tpu_custom_call.1} parent=79 // pred_check_branch
          %5688 = sbr.rel (%p5686) target = $region84
        $region83: #{tpu_custom_call.1} parent=79 // pred_region
          %p5689 = scmp.lt.s32.totalorder %s32, 1
          %s5690 = scalar_select %p5689, %s32, 1
          %p5691 = scmp.lt.s32.totalorder %s33, 1
          %s5692 = scalar_select %p5691, %s33, 1
          %s5693 = smul.addr %s5692, 8
          %s5694 = smul.addr %s5690, 16
          %s5695 = sadd.s32 %s5693, %s5694
          %s5696 = smul.addr %s5695, 8
          %s5697 = scalar_lea.vmem %s12, %s5696
        $region84: #{tpu_custom_call.1} parent=79 // pred_fallthru
          _
      $region80: #{tpu_custom_call.1} parent=5 // pred_fallthru
        _
    $region6: #{tpu_custom_call.1} parent=1 // loop_footer
      %s25 = sadd.s32 1, %s21
    $region7: #{tpu_custom_call.1} parent=1 // loop_footer_branch
      %20 = sbr.rel target = $region3
    $region8: #{tpu_custom_call.1} parent=1 // loop_exit
      _
    %5698 = vsyncpa [#allocation3], 1
    %s5699 = scalar_lea.sflag [#allocation3], 1
    %5700 = vsyncpa %s5699, 1

</llo_original>
